<compile_context>
chip_gen: v7x
topology: tpu7x:2x2x1
jax: 0.10.0
libtpu: 0.0.40
codegen_flags: <defaults>
</compile_context>

<pallas_src>
import functools

import jax
import jax.numpy as jnp
import numpy as np
from jax.experimental import pallas as pl
from jax.experimental.pallas import tpu as pltpu


# -----------------------------------------------------------------------------
# Fused BottleneckX kernel.  All refs are (rows, channels); rows = flattened H*W.
# -----------------------------------------------------------------------------
def _bottleneckx_kernel(x_ref, w1_ref, s1_ref, b1_ref, w2_ref, s2_ref, b2_ref,
                        w3_ref, s3_ref, b3_ref, o_ref, t1_ref, slab_ref,
                        *, H, W, B, TH, PAD):
    h = pl.program_id(1)
    rows = TH * W
    r0 = h * TH                                  # first spatial row of this tile
    m0 = pl.multiple_of(h * rows, rows)          # first flat row of this tile

    def conv1(xr):                               # 1x1 conv + folded BN + ReLU
        y = jnp.dot(xr, w1_ref[...], preferred_element_type=jnp.float32)
        return jnp.maximum(y * s1_ref[...] + b1_ref[...], 0.0)

    # t1_ref layout: [PAD guard rows][halo row][TH*W tile rows][halo row][PAD guard rows]
    # Guard rows are zero so the +-1 statically shifted slices below never read junk.
    t1_ref[0:PAD, :] = jnp.zeros((PAD, B), jnp.float32)
    back = PAD + (TH + 2) * W
    t1_ref[back:back + PAD, :] = jnp.zeros((PAD, B), jnp.float32)

    # conv1 over the tile body.
    t1_ref[PAD + W:PAD + W + rows, :] = conv1(x_ref[pl.ds(m0, rows), :])

    # One-row halo above / below (needed by the 3x3 conv).
    if TH == H:
        # Single row-tile covers the whole image: halos are the zero image border.
        t1_ref[PAD:PAD + W, :] = jnp.zeros((W, B), jnp.float32)
        t1_ref[PAD + (TH + 1) * W:PAD + (TH + 2) * W, :] = jnp.zeros((W, B), jnp.float32)
    else:
        top_start = pl.multiple_of(jnp.maximum(r0 - 1, 0) * W, W)
        top = conv1(x_ref[pl.ds(top_start, W), :])
        t1_ref[PAD:PAD + W, :] = jnp.where(r0 > 0, top, 0.0)
        bot_start = pl.multiple_of(jnp.minimum(r0 + TH, H - 1) * W, W)
        bot = conv1(x_ref[pl.ds(bot_start, W), :])
        t1_ref[PAD + (TH + 1) * W:PAD + (TH + 2) * W, :] = jnp.where(r0 + TH < H, bot, 0.0)

    # Hoisted column masks (JAX does not CSE broadcast_in_dim; build once, reuse 3x each).
    col = jax.lax.broadcasted_iota(jnp.int32, (rows, 1), 0) % W
    not_left = col > 0
    not_right = col < W - 1

    # im2col slab: 9 statically shifted contiguous slices of the conv1 output.
    for k in range(9):
        ky, kx = divmod(k, 3)
        start = PAD + ky * W + kx - 1            # static offset
        src = t1_ref[start:start + rows, :]
        if kx == 0:
            src = jnp.where(not_left, src, 0.0)   # left zero padding
        elif kx == 2:
            src = jnp.where(not_right, src, 0.0)  # right zero padding
        slab_ref[:, k * B:(k + 1) * B] = src

    # conv2 (grouped 3x3 == block-diagonal dense) + BN + ReLU: ONE MXU matmul.
    t2 = jnp.dot(slab_ref[...], w2_ref[...], preferred_element_type=jnp.float32)
    t2 = jnp.maximum(t2 * s2_ref[...] + b2_ref[...], 0.0)

    # conv3 (1x1) + BN + residual + ReLU, lane-dense store.
    t3 = jnp.dot(t2, w3_ref[...], preferred_element_type=jnp.float32)
    t3 = t3 * s3_ref[...] + b3_ref[...]
    o_ref[...] = jnp.maximum(t3 + x_ref[pl.ds(m0, rows), :], 0.0)


def _pick_tile_h(H, W, B, target_rows=512, scratch_budget=6 << 20):
    """Largest row-tile TH dividing H (lane/sublane-legal) within the VMEM budget."""
    def scratch(th):
        return 4 * (th * W * 9 * B + ((th + 2) * W + 16) * B)
    cands = [th for th in range(1, H + 1)
             if H % th == 0 and (th == H or (th * W) % 8 == 0)]
    good = [th for th in cands
            if th * W <= max(target_rows, W) and scratch(th) <= scratch_budget]
    if good:
        return max(good)
    return min(cands, key=scratch)


def bottleneckx_forward(params, x_nhwc):
    """BottleneckX.forward(x, residual=None) in NHWC (stride=1, dilation=1, eval BN)."""
    N, H, W, Cin = map(int, x_nhwc.shape)
    B = int(params['w1'].shape[1])
    Cout = int(params['w3'].shape[1])
    assert Cin == Cout, "residual=None path requires inplanes == planes"
    TH = _pick_tile_h(H, W, B)
    PAD = 8

    x_flat = x_nhwc.reshape(N, H * W, Cin)       # free reshape: spatial rows, C lanes
    kern = functools.partial(_bottleneckx_kernel, H=H, W=W, B=B, TH=TH, PAD=PAD)

    def _w(shape):                               # whole-array (weight/scale) 2-D blocks
        return pl.BlockSpec(shape, lambda n, h: (0, 0))

    out_flat = pl.pallas_call(
        kern,
        out_shape=jax.ShapeDtypeStruct((N, H * W, Cout), jnp.float32),
        grid=(N, H // TH),
        in_specs=[
            pl.BlockSpec((None, H * W, Cin), lambda n, h: (n, 0, 0)),   # x: resident per-image
            _w((Cin, B)), _w((1, B)), _w((1, B)),                       # conv1 / bn1
            _w((9 * B, B)), _w((1, B)), _w((1, B)),                     # conv2 / bn2
            _w((B, Cout)), _w((1, Cout)), _w((1, Cout)),                # conv3 / bn3
        ],
        out_specs=pl.BlockSpec((None, TH * W, Cout), lambda n, h: (n, h, 0)),
        scratch_shapes=[
            pltpu.VMEM(((TH + 2) * W + 2 * PAD, B), jnp.float32),       # conv1 out + halo
            pltpu.VMEM((TH * W, 9 * B), jnp.float32),                   # im2col slab
        ],
        compiler_params=pltpu.CompilerParams(
            dimension_semantics=("parallel", "parallel")),
    )(x_flat,
      params['w1'], params['s1'].reshape(1, B), params['b1'].reshape(1, B),
      params['w2'], params['s2'].reshape(1, B), params['b2'].reshape(1, B),
      params['w3'], params['s3'].reshape(1, Cout), params['b3'].reshape(1, Cout))
    return out_flat.reshape(N, H, W, Cout)


# -----------------------------------------------------------------------------
# Deterministic synthetic parameters (BN folded to inference-mode scale/bias)
# -----------------------------------------------------------------------------
def init_bottleneckx_params(key, inplanes, planes, cardinality=32):
    bottle = planes * cardinality // 32
    assert bottle % cardinality == 0, "channels must be a multiple of cardinality"
    cg = bottle // cardinality
    ks = jax.random.split(key, 15)

    w1 = 0.1 * jax.random.normal(ks[0], (inplanes, bottle), jnp.float32)
    w2g = 0.1 * jax.random.normal(ks[1], (3, 3, cg, bottle), jnp.float32)  # HWIO per-group
    w3 = 0.1 * jax.random.normal(ks[2], (bottle, planes), jnp.float32)

    def folded_bn(kg, kb, km, kv, C):
        gamma = 1.0 + 0.1 * jax.random.normal(kg, (C,), jnp.float32)
        beta = 0.1 * jax.random.normal(kb, (C,), jnp.float32)
        mean = 0.05 * jax.random.normal(km, (C,), jnp.float32)
        var = jnp.abs(1.0 + 0.1 * jax.random.normal(kv, (C,), jnp.float32))
        scale = gamma / jnp.sqrt(var + 1e-5)
        return scale, beta - mean * scale

    s1, b1 = folded_bn(ks[3], ks[4], ks[5], ks[6], bottle)
    s2, b2 = folded_bn(ks[7], ks[8], ks[9], ks[10], bottle)
    s3, b3 = folded_bn(ks[11], ks[12], ks[13], ks[14], planes)

    # Exactly-equivalent block-diagonal dense form of the grouped 3x3 weight, laid out
    # for the im2col slab:  w2[(ky*3+kx)*bottle + ci, co].
    ci = jnp.arange(bottle)
    same_group = (ci[:, None] // cg) == (ci[None, :] // cg)
    dense = w2g[:, :, ci % cg, :] * same_group[None, None, :, :].astype(jnp.float32)
    w2 = dense.reshape(9 * bottle, bottle)

    return dict(w1=w1, s1=s1, b1=b1, w2g=w2g, w2=w2, s2=s2, b2=b2,
                w3=w3, s3=s3, b3=b3, groups=cardinality)


# -----------------------------------------------------------------------------
# Pure-JAX reference (true grouped conv via lax) for correctness checking
# -----------------------------------------------------------------------------
def ref_forward(params, x):
    hp = jax.lax.Precision.HIGHEST
    t = jnp.tensordot(x, params['w1'], axes=[[3], [0]], precision=hp)
    t = jnp.maximum(t * params['s1'] + params['b1'], 0.0)
    t = jax.lax.conv_general_dilated(
        t, params['w2g'], window_strides=(1, 1), padding='SAME',
        dimension_numbers=('NHWC', 'HWIO', 'NHWC'),
        feature_group_count=params['groups'], precision=hp)
    t = jnp.maximum(t * params['s2'] + params['b2'], 0.0)
    t = jnp.tensordot(t, params['w3'], axes=[[3], [0]], precision=hp)
    t = t * params['s3'] + params['b3']
    return jnp.maximum(t + x, 0.0)


if __name__ == "__main__":
    N, H, W = 2, 16, 16
    inplanes = planes = 128   # cardinality=32 => channels % 32 == 0; 128 keeps the
                              # channel (lane) axis fully dense for loads/stores/DMA.
    key = jax.random.PRNGKey(0)
    kp, kx = jax.random.split(key)
    params = init_bottleneckx_params(kp, inplanes, planes)
    x = jax.random.normal(kx, (N, H, W, inplanes), jnp.float32)

    out = jax.block_until_ready(bottleneckx_forward(params, x))
    ref = jax.block_until_ready(ref_forward(params, x))
    np.testing.assert_allclose(np.asarray(out), np.asarray(ref), rtol=5e-4, atol=5e-4)
    assert out.shape == (N, H, W, planes)
    print("KERNEL_OK")
</pallas_src>

<mosaic_0001>
module attributes {stable_mosaic.version = 11 : i64} {
  func.func @_bottleneckx_kernel(%arg0: i32, %arg1: i32, %arg2: memref<1x256x128xf32, #tpu.memory_space<vmem>>, %arg3: memref<128x128xf32, #tpu.memory_space<vmem>>, %arg4: memref<1x128xf32, #tpu.memory_space<vmem>>, %arg5: memref<1x128xf32, #tpu.memory_space<vmem>>, %arg6: memref<1152x128xf32, #tpu.memory_space<vmem>>, %arg7: memref<1x128xf32, #tpu.memory_space<vmem>>, %arg8: memref<1x128xf32, #tpu.memory_space<vmem>>, %arg9: memref<128x128xf32, #tpu.memory_space<vmem>>, %arg10: memref<1x128xf32, #tpu.memory_space<vmem>>, %arg11: memref<1x128xf32, #tpu.memory_space<vmem>>, %arg12: memref<1x256x128xf32, #tpu.memory_space<vmem>>, %arg13: memref<304x128xf32, #tpu.memory_space<vmem>>, %arg14: memref<256x1152xf32, #tpu.memory_space<vmem>>) attributes {dimension_semantics = [#tpu.dimension_semantics<parallel>, #tpu.dimension_semantics<parallel>], iteration_bounds = array<i64: 2, 1>, scalar_prefetch = 0 : i64, scratch_operands = 2 : i64, tpu.core_type = #tpu.core_type<tc>, window_params = [{transform_indices = @transform_0, window_bounds = array<i64: 1, 256, 128>}, {pipeline_mode = #tpu.pipeline_mode<synchronous>, transform_indices = @transform_1, window_bounds = array<i64: 128, 128>}, {pipeline_mode = #tpu.pipeline_mode<synchronous>, transform_indices = @transform_2, window_bounds = array<i64: 1, 128>}, {pipeline_mode = #tpu.pipeline_mode<synchronous>, transform_indices = @transform_3, window_bounds = array<i64: 1, 128>}, {pipeline_mode = #tpu.pipeline_mode<synchronous>, transform_indices = @transform_4, window_bounds = array<i64: 1152, 128>}, {pipeline_mode = #tpu.pipeline_mode<synchronous>, transform_indices = @transform_5, window_bounds = array<i64: 1, 128>}, {pipeline_mode = #tpu.pipeline_mode<synchronous>, transform_indices = @transform_6, window_bounds = array<i64: 1, 128>}, {pipeline_mode = #tpu.pipeline_mode<synchronous>, transform_indices = @transform_7, window_bounds = array<i64: 128, 128>}, {pipeline_mode = #tpu.pipeline_mode<synchronous>, transform_indices = @transform_8, window_bounds = array<i64: 1, 128>}, {pipeline_mode = #tpu.pipeline_mode<synchronous>, transform_indices = @transform_9, window_bounds = array<i64: 1, 128>}, {transform_indices = @transform_10, window_bounds = array<i64: 1, 256, 128>}]} {
    %c256_i32 = arith.constant 256 : i32
    %0 = arith.muli %arg1, %c256_i32 : i32
    %1 = tpu.assume_multiple %0, 256 : i32
    %cst = arith.constant 0.000000e+00 : f32
    %2 = vector.broadcast %cst : f32 to vector<8x128xf32>
    %c0 = arith.constant 0 : index
    %c0_0 = arith.constant 0 : index
    %3 = vector.load %arg13[%c0, %c0_0] : memref<304x128xf32, #tpu.memory_space<vmem>>, vector<8x128xf32>
    tpu.vector_store %arg13[%c0, %c0_0], %2 {strides = array<i32>} : memref<304x128xf32, #tpu.memory_space<vmem>>, vector<8x128xf32>,
    %cst_1 = arith.constant 0.000000e+00 : f32
    %4 = vector.broadcast %cst_1 : f32 to vector<8x128xf32>
    %c296 = arith.constant 296 : index
    %c0_2 = arith.constant 0 : index
    %5 = vector.load %arg13[%c296, %c0_2] : memref<304x128xf32, #tpu.memory_space<vmem>>, vector<8x128xf32>
    tpu.vector_store %arg13[%c296, %c0_2], %4 {strides = array<i32>} : memref<304x128xf32, #tpu.memory_space<vmem>>, vector<8x128xf32>,
    %c0_3 = arith.constant 0 : index
    %6 = arith.index_cast %1 : i32 to index
    %c0_4 = arith.constant 0 : index
    %7 = vector.load %arg2[%c0_3, %6, %c0_4] : memref<1x256x128xf32, #tpu.memory_space<vmem>>, vector<1x256x128xf32>
    %8 = vector.shape_cast %7 : vector<1x256x128xf32> to vector<256x128xf32>
    %c0_5 = arith.constant 0 : index
    %c0_6 = arith.constant 0 : index
    %9 = vector.load %arg3[%c0_5, %c0_6] : memref<128x128xf32, #tpu.memory_space<vmem>>, vector<128x128xf32>
    %cst_7 = arith.constant dense<0.000000e+00> : vector<256x128xf32>
    %10 = tpu.matmul %8, %9, %cst_7 {dimension_numbers = #tpu.dot_dimension_numbers<[1], [0], [0], [1], [0, 0, 1, 1], [], []>} : vector<256x128xf32>, vector<128x128xf32>, vector<256x128xf32> -> vector<256x128xf32>
    %c0_8 = arith.constant 0 : index
    %c0_9 = arith.constant 0 : index
    %11 = vector.load %arg4[%c0_8, %c0_9] : memref<1x128xf32, #tpu.memory_space<vmem>>, vector<1x128xf32>
    %12 = vector.broadcast %11 : vector<1x128xf32> to vector<256x128xf32>
    %13 = arith.mulf %10, %12 : vector<256x128xf32>
    %c0_10 = arith.constant 0 : index
    %c0_11 = arith.constant 0 : index
    %14 = vector.load %arg5[%c0_10, %c0_11] : memref<1x128xf32, #tpu.memory_space<vmem>>, vector<1x128xf32>
    %15 = vector.broadcast %14 : vector<1x128xf32> to vector<256x128xf32>
    %16 = arith.addf %13, %15 : vector<256x128xf32>
    %cst_12 = arith.constant 0.000000e+00 : f32
    %17 = vector.broadcast %cst_12 : f32 to vector<256x128xf32>
    %18 = arith.maximumf %16, %17 : vector<256x128xf32>
    %c24 = arith.constant 24 : index
    %c0_13 = arith.constant 0 : index
    %19 = vector.load %arg13[%c24, %c0_13] : memref<304x128xf32, #tpu.memory_space<vmem>>, vector<256x128xf32>
    tpu.vector_store %arg13[%c24, %c0_13], %18 {strides = array<i32>} : memref<304x128xf32, #tpu.memory_space<vmem>>, vector<256x128xf32>,
    %cst_14 = arith.constant 0.000000e+00 : f32
    %20 = vector.broadcast %cst_14 : f32 to vector<16x128xf32>
    %c8 = arith.constant 8 : index
    %c0_15 = arith.constant 0 : index
    %21 = vector.load %arg13[%c8, %c0_15] : memref<304x128xf32, #tpu.memory_space<vmem>>, vector<16x128xf32>
    tpu.vector_store %arg13[%c8, %c0_15], %20 {strides = array<i32>} : memref<304x128xf32, #tpu.memory_space<vmem>>, vector<16x128xf32>,
    %cst_16 = arith.constant 0.000000e+00 : f32
    %22 = vector.broadcast %cst_16 : f32 to vector<16x128xf32>
    %c280 = arith.constant 280 : index
    %c0_17 = arith.constant 0 : index
    %23 = vector.load %arg13[%c280, %c0_17] : memref<304x128xf32, #tpu.memory_space<vmem>>, vector<16x128xf32>
    tpu.vector_store %arg13[%c280, %c0_17], %22 {strides = array<i32>} : memref<304x128xf32, #tpu.memory_space<vmem>>, vector<16x128xf32>,
    %24 = tpu.iota {dimensions = array<i32: 0>} : vector<256x1xi32>
    %c16_i32 = arith.constant 16 : i32
    %c0_i32 = arith.constant 0 : i32
    %25 = arith.cmpi eq, %c16_i32, %c0_i32 : i32
    %c1_i32 = arith.constant 1 : i32
    %26 = arith.select %25, %c1_i32, %c16_i32 : i32
    %27 = vector.broadcast %26 : i32 to vector<256x1xi32>
    %28 = arith.remsi %24, %27 : vector<256x1xi32>
    %c0_i32_18 = arith.constant 0 : i32
    %29 = vector.broadcast %c0_i32_18 : i32 to vector<256x1xi32>
    %30 = arith.cmpi ne, %28, %29 : vector<256x1xi32>
    %c0_i32_19 = arith.constant 0 : i32
    %31 = vector.broadcast %c0_i32_19 : i32 to vector<256x1xi32>
    %32 = arith.cmpi slt, %28, %31 : vector<256x1xi32>
    %c0_i32_20 = arith.constant 0 : i32
    %33 = arith.cmpi slt, %26, %c0_i32_20 : i32
    %34 = vector.broadcast %33 : i1 to vector<256x1xi1>
    %35 = vector.broadcast %34 : vector<256x1xi1> to vector<256x1xi1>
    %36 = arith.xori %32, %35 : vector<256x1xi1>
    %37 = arith.andi %36, %30 : vector<256x1xi1>
    %38 = vector.broadcast %26 : i32 to vector<256x1xi32>
    %39 = arith.addi %28, %38 : vector<256x1xi32>
    %40 = arith.select %37, %39, %28 : vector<256x1xi1>, vector<256x1xi32>
    %c0_i32_21 = arith.constant 0 : i32
    %41 = vector.broadcast %c0_i32_21 : i32 to vector<256x1xi32>
    %42 = arith.cmpi sgt, %40, %41 : vector<256x1xi32>
    %c15_i32 = arith.constant 15 : i32
    %43 = vector.broadcast %c15_i32 : i32 to vector<256x1xi32>
    %44 = arith.cmpi slt, %40, %43 : vector<256x1xi32>
    %c7 = arith.constant 7 : index
    %c0_22 = arith.constant 0 : index
    %45 = vector.load %arg13[%c7, %c0_22] : memref<304x128xf32, #tpu.memory_space<vmem>>, vector<256x128xf32>
    %cst_23 = arith.constant 0.000000e+00 : f32
    %46 = vector.shape_cast %42 : vector<256x1xi1> to vector<256x1xi1>
    %47 = vector.broadcast %46 : vector<256x1xi1> to vector<256x128xi1>
    %48 = vector.broadcast %cst_23 : f32 to vector<256x128xf32>
    %49 = arith.select %47, %45, %48 : vector<256x128xi1>, vector<256x128xf32>
    %c0_24 = arith.constant 0 : index
    %c0_25 = arith.constant 0 : index
    %50 = vector.load %arg14[%c0_24, %c0_25] : memref<256x1152xf32, #tpu.memory_space<vmem>>, vector<256x128xf32>
    tpu.vector_store %arg14[%c0_24, %c0_25], %49 {strides = array<i32>} : memref<256x1152xf32, #tpu.memory_space<vmem>>, vector<256x128xf32>,
    %c8_26 = arith.constant 8 : index
    %c0_27 = arith.constant 0 : index
    %51 = vector.load %arg13[%c8_26, %c0_27] : memref<304x128xf32, #tpu.memory_space<vmem>>, vector<256x128xf32>
    %c0_28 = arith.constant 0 : index
    %c128 = arith.constant 128 : index
    %52 = vector.load %arg14[%c0_28, %c128] : memref<256x1152xf32, #tpu.memory_space<vmem>>, vector<256x128xf32>
    tpu.vector_store %arg14[%c0_28, %c128], %51 {strides = array<i32>} : memref<256x1152xf32, #tpu.memory_space<vmem>>, vector<256x128xf32>,
    %c9 = arith.constant 9 : index
    %c0_29 = arith.constant 0 : index
    %53 = vector.load %arg13[%c9, %c0_29] : memref<304x128xf32, #tpu.memory_space<vmem>>, vector<256x128xf32>
    %cst_30 = arith.constant 0.000000e+00 : f32
    %54 = vector.shape_cast %44 : vector<256x1xi1> to vector<256x1xi1>
    %55 = vector.broadcast %54 : vector<256x1xi1> to vector<256x128xi1>
    %56 = vector.broadcast %cst_30 : f32 to vector<256x128xf32>
    %57 = arith.select %55, %53, %56 : vector<256x128xi1>, vector<256x128xf32>
    %c0_31 = arith.constant 0 : index
    %c256 = arith.constant 256 : index
    %58 = vector.load %arg14[%c0_31, %c256] : memref<256x1152xf32, #tpu.memory_space<vmem>>, vector<256x128xf32>
    tpu.vector_store %arg14[%c0_31, %c256], %57 {strides = array<i32>} : memref<256x1152xf32, #tpu.memory_space<vmem>>, vector<256x128xf32>,
    %c23 = arith.constant 23 : index
    %c0_32 = arith.constant 0 : index
    %59 = vector.load %arg13[%c23, %c0_32] : memref<304x128xf32, #tpu.memory_space<vmem>>, vector<256x128xf32>
    %cst_33 = arith.constant 0.000000e+00 : f32
    %60 = vector.shape_cast %42 : vector<256x1xi1> to vector<256x1xi1>
    %61 = vector.broadcast %60 : vector<256x1xi1> to vector<256x128xi1>
    %62 = vector.broadcast %cst_33 : f32 to vector<256x128xf32>
    %63 = arith.select %61, %59, %62 : vector<256x128xi1>, vector<256x128xf32>
    %c0_34 = arith.constant 0 : index
    %c384 = arith.constant 384 : index
    %64 = vector.load %arg14[%c0_34, %c384] : memref<256x1152xf32, #tpu.memory_space<vmem>>, vector<256x128xf32>
    tpu.vector_store %arg14[%c0_34, %c384], %63 {strides = array<i32>} : memref<256x1152xf32, #tpu.memory_space<vmem>>, vector<256x128xf32>,
    %c24_35 = arith.constant 24 : index
    %c0_36 = arith.constant 0 : index
    %65 = vector.load %arg13[%c24_35, %c0_36] : memref<304x128xf32, #tpu.memory_space<vmem>>, vector<256x128xf32>
    %c0_37 = arith.constant 0 : index
    %c512 = arith.constant 512 : index
    %66 = vector.load %arg14[%c0_37, %c512] : memref<256x1152xf32, #tpu.memory_space<vmem>>, vector<256x128xf32>
    tpu.vector_store %arg14[%c0_37, %c512], %65 {strides = array<i32>} : memref<256x1152xf32, #tpu.memory_space<vmem>>, vector<256x128xf32>,
    %c25 = arith.constant 25 : index
    %c0_38 = arith.constant 0 : index
    %67 = vector.load %arg13[%c25, %c0_38] : memref<304x128xf32, #tpu.memory_space<vmem>>, vector<256x128xf32>
    %cst_39 = arith.constant 0.000000e+00 : f32
    %68 = vector.shape_cast %44 : vector<256x1xi1> to vector<256x1xi1>
    %69 = vector.broadcast %68 : vector<256x1xi1> to vector<256x128xi1>
    %70 = vector.broadcast %cst_39 : f32 to vector<256x128xf32>
    %71 = arith.select %69, %67, %70 : vector<256x128xi1>, vector<256x128xf32>
    %c0_40 = arith.constant 0 : index
    %c640 = arith.constant 640 : index
    %72 = vector.load %arg14[%c0_40, %c640] : memref<256x1152xf32, #tpu.memory_space<vmem>>, vector<256x128xf32>
    tpu.vector_store %arg14[%c0_40, %c640], %71 {strides = array<i32>} : memref<256x1152xf32, #tpu.memory_space<vmem>>, vector<256x128xf32>,
    %c39 = arith.constant 39 : index
    %c0_41 = arith.constant 0 : index
    %73 = vector.load %arg13[%c39, %c0_41] : memref<304x128xf32, #tpu.memory_space<vmem>>, vector<256x128xf32>
    %cst_42 = arith.constant 0.000000e+00 : f32
    %74 = vector.shape_cast %42 : vector<256x1xi1> to vector<256x1xi1>
    %75 = vector.broadcast %74 : vector<256x1xi1> to vector<256x128xi1>
    %76 = vector.broadcast %cst_42 : f32 to vector<256x128xf32>
    %77 = arith.select %75, %73, %76 : vector<256x128xi1>, vector<256x128xf32>
    %c0_43 = arith.constant 0 : index
    %c768 = arith.constant 768 : index
    %78 = vector.load %arg14[%c0_43, %c768] : memref<256x1152xf32, #tpu.memory_space<vmem>>, vector<256x128xf32>
    tpu.vector_store %arg14[%c0_43, %c768], %77 {strides = array<i32>} : memref<256x1152xf32, #tpu.memory_space<vmem>>, vector<256x128xf32>,
    %c40 = arith.constant 40 : index
    %c0_44 = arith.constant 0 : index
    %79 = vector.load %arg13[%c40, %c0_44] : memref<304x128xf32, #tpu.memory_space<vmem>>, vector<256x128xf32>
    %c0_45 = arith.constant 0 : index
    %c896 = arith.constant 896 : index
    %80 = vector.load %arg14[%c0_45, %c896] : memref<256x1152xf32, #tpu.memory_space<vmem>>, vector<256x128xf32>
    tpu.vector_store %arg14[%c0_45, %c896], %79 {strides = array<i32>} : memref<256x1152xf32, #tpu.memory_space<vmem>>, vector<256x128xf32>,
    %c41 = arith.constant 41 : index
    %c0_46 = arith.constant 0 : index
    %81 = vector.load %arg13[%c41, %c0_46] : memref<304x128xf32, #tpu.memory_space<vmem>>, vector<256x128xf32>
    %cst_47 = arith.constant 0.000000e+00 : f32
    %82 = vector.shape_cast %44 : vector<256x1xi1> to vector<256x1xi1>
    %83 = vector.broadcast %82 : vector<256x1xi1> to vector<256x128xi1>
    %84 = vector.broadcast %cst_47 : f32 to vector<256x128xf32>
    %85 = arith.select %83, %81, %84 : vector<256x128xi1>, vector<256x128xf32>
    %c0_48 = arith.constant 0 : index
    %c1024 = arith.constant 1024 : index
    %86 = vector.load %arg14[%c0_48, %c1024] : memref<256x1152xf32, #tpu.memory_space<vmem>>, vector<256x128xf32>
    tpu.vector_store %arg14[%c0_48, %c1024], %85 {strides = array<i32>} : memref<256x1152xf32, #tpu.memory_space<vmem>>, vector<256x128xf32>,
    %c0_49 = arith.constant 0 : index
    %c0_50 = arith.constant 0 : index
    %87 = vector.load %arg14[%c0_49, %c0_50] : memref<256x1152xf32, #tpu.memory_space<vmem>>, vector<256x1152xf32>
    %c0_51 = arith.constant 0 : index
    %c0_52 = arith.constant 0 : index
    %88 = vector.load %arg6[%c0_51, %c0_52] : memref<1152x128xf32, #tpu.memory_space<vmem>>, vector<1152x128xf32>
    %cst_53 = arith.constant dense<0.000000e+00> : vector<256x128xf32>
    %89 = tpu.matmul %87, %88, %cst_53 {dimension_numbers = #tpu.dot_dimension_numbers<[1], [0], [0], [1], [0, 0, 1, 1], [], []>} : vector<256x1152xf32>, vector<1152x128xf32>, vector<256x128xf32> -> vector<256x128xf32>
    %c0_54 = arith.constant 0 : index
    %c0_55 = arith.constant 0 : index
    %90 = vector.load %arg7[%c0_54, %c0_55] : memref<1x128xf32, #tpu.memory_space<vmem>>, vector<1x128xf32>
    %91 = vector.broadcast %90 : vector<1x128xf32> to vector<256x128xf32>
    %92 = arith.mulf %89, %91 : vector<256x128xf32>
    %c0_56 = arith.constant 0 : index
    %c0_57 = arith.constant 0 : index
    %93 = vector.load %arg8[%c0_56, %c0_57] : memref<1x128xf32, #tpu.memory_space<vmem>>, vector<1x128xf32>
    %94 = vector.broadcast %93 : vector<1x128xf32> to vector<256x128xf32>
    %95 = arith.addf %92, %94 : vector<256x128xf32>
    %cst_58 = arith.constant 0.000000e+00 : f32
    %96 = vector.broadcast %cst_58 : f32 to vector<256x128xf32>
    %97 = arith.maximumf %95, %96 : vector<256x128xf32>
    %c0_59 = arith.constant 0 : index
    %c0_60 = arith.constant 0 : index
    %98 = vector.load %arg9[%c0_59, %c0_60] : memref<128x128xf32, #tpu.memory_space<vmem>>, vector<128x128xf32>
    %cst_61 = arith.constant dense<0.000000e+00> : vector<256x128xf32>
    %99 = tpu.matmul %97, %98, %cst_61 {dimension_numbers = #tpu.dot_dimension_numbers<[1], [0], [0], [1], [0, 0, 1, 1], [], []>} : vector<256x128xf32>, vector<128x128xf32>, vector<256x128xf32> -> vector<256x128xf32>
    %c0_62 = arith.constant 0 : index
    %c0_63 = arith.constant 0 : index
    %100 = vector.load %arg10[%c0_62, %c0_63] : memref<1x128xf32, #tpu.memory_space<vmem>>, vector<1x128xf32>
    %101 = vector.broadcast %100 : vector<1x128xf32> to vector<256x128xf32>
    %102 = arith.mulf %99, %101 : vector<256x128xf32>
    %c0_64 = arith.constant 0 : index
    %c0_65 = arith.constant 0 : index
    %103 = vector.load %arg11[%c0_64, %c0_65] : memref<1x128xf32, #tpu.memory_space<vmem>>, vector<1x128xf32>
    %104 = vector.broadcast %103 : vector<1x128xf32> to vector<256x128xf32>
    %105 = arith.addf %102, %104 : vector<256x128xf32>
    %c0_66 = arith.constant 0 : index
    %106 = arith.index_cast %1 : i32 to index
    %c0_67 = arith.constant 0 : index
    %107 = vector.load %arg2[%c0_66, %106, %c0_67] : memref<1x256x128xf32, #tpu.memory_space<vmem>>, vector<1x256x128xf32>
    %108 = vector.shape_cast %107 : vector<1x256x128xf32> to vector<256x128xf32>
    %109 = arith.addf %105, %108 : vector<256x128xf32>
    %cst_68 = arith.constant 0.000000e+00 : f32
    %110 = vector.broadcast %cst_68 : f32 to vector<256x128xf32>
    %111 = arith.maximumf %109, %110 : vector<256x128xf32>
    %c0_69 = arith.constant 0 : index
    %c0_70 = arith.constant 0 : index
    %c0_71 = arith.constant 0 : index
    %112 = vector.load %arg12[%c0_69, %c0_70, %c0_71] : memref<1x256x128xf32, #tpu.memory_space<vmem>>, vector<1x256x128xf32>
    %113 = vector.shape_cast %112 : vector<1x256x128xf32> to vector<256x128xf32>
    %114 = vector.shape_cast %111 : vector<256x128xf32> to vector<1x256x128xf32>
    tpu.vector_store %arg12[%c0_69, %c0_70, %c0_71], %114 {strides = array<i32>} : memref<1x256x128xf32, #tpu.memory_space<vmem>>, vector<1x256x128xf32>,
    return
  }
  func.func @transform_0(%arg0: i32, %arg1: i32) -> (i32, i32, i32) {
    %c0_i32 = arith.constant 0 : i32
    %c0_i32_0 = arith.constant 0 : i32
    %c0_i32_1 = arith.constant 0 : i32
    return %arg0, %c0_i32, %c0_i32_0 : i32, i32, i32
  }
  func.func @transform_1(%arg0: i32, %arg1: i32) -> (i32, i32) {
    %c0_i32 = arith.constant 0 : i32
    %c0_i32_0 = arith.constant 0 : i32
    %c0_i32_1 = arith.constant 0 : i32
    return %c0_i32, %c0_i32_0 : i32, i32
  }
  func.func @transform_2(%arg0: i32, %arg1: i32) -> (i32, i32) {
    %c0_i32 = arith.constant 0 : i32
    %c0_i32_0 = arith.constant 0 : i32
    %c0_i32_1 = arith.constant 0 : i32
    return %c0_i32, %c0_i32_0 : i32, i32
  }
  func.func @transform_3(%arg0: i32, %arg1: i32) -> (i32, i32) {
    %c0_i32 = arith.constant 0 : i32
    %c0_i32_0 = arith.constant 0 : i32
    %c0_i32_1 = arith.constant 0 : i32
    return %c0_i32, %c0_i32_0 : i32, i32
  }
  func.func @transform_4(%arg0: i32, %arg1: i32) -> (i32, i32) {
    %c0_i32 = arith.constant 0 : i32
    %c0_i32_0 = arith.constant 0 : i32
    %c0_i32_1 = arith.constant 0 : i32
    return %c0_i32, %c0_i32_0 : i32, i32
  }
  func.func @transform_5(%arg0: i32, %arg1: i32) -> (i32, i32) {
    %c0_i32 = arith.constant 0 : i32
    %c0_i32_0 = arith.constant 0 : i32
    %c0_i32_1 = arith.constant 0 : i32
    return %c0_i32, %c0_i32_0 : i32, i32
  }
  func.func @transform_6(%arg0: i32, %arg1: i32) -> (i32, i32) {
    %c0_i32 = arith.constant 0 : i32
    %c0_i32_0 = arith.constant 0 : i32
    %c0_i32_1 = arith.constant 0 : i32
    return %c0_i32, %c0_i32_0 : i32, i32
  }
  func.func @transform_7(%arg0: i32, %arg1: i32) -> (i32, i32) {
    %c0_i32 = arith.constant 0 : i32
    %c0_i32_0 = arith.constant 0 : i32
    %c0_i32_1 = arith.constant 0 : i32
    return %c0_i32, %c0_i32_0 : i32, i32
  }
  func.func @transform_8(%arg0: i32, %arg1: i32) -> (i32, i32) {
    %c0_i32 = arith.constant 0 : i32
    %c0_i32_0 = arith.constant 0 : i32
    %c0_i32_1 = arith.constant 0 : i32
    return %c0_i32, %c0_i32_0 : i32, i32
  }
  func.func @transform_9(%arg0: i32, %arg1: i32) -> (i32, i32) {
    %c0_i32 = arith.constant 0 : i32
    %c0_i32_0 = arith.constant 0 : i32
    %c0_i32_1 = arith.constant 0 : i32
    return %c0_i32, %c0_i32_0 : i32, i32
  }
  func.func @transform_10(%arg0: i32, %arg1: i32) -> (i32, i32, i32) {
    %c0_i32 = arith.constant 0 : i32
    %c0_i32_0 = arith.constant 0 : i32
    return %arg0, %arg1, %c0_i32 : i32, i32, i32
  }
}

</mosaic_0001>

<llo_original>
// kernel: tpu_custom_call.1
$region0: #{tpu_custom_call.1}
  #allocation0 [shape = 'u32[]', space=smem, size = 0x4, offset = 0x4, fixed_abs, tag = 'smem constant byte address 0x4 - core index']
  #allocation1 [shape = 'u32[144,128]{1,0:T(1,128)}', space=vmem, size = 0x12000, scoped, tag = 'internal scratch']
  #allocation2 [shape = 'f32[304,128]{1,0:T(8,128)}', space=vmem, size = 0x26000, scoped, tag = 'scratch operand']
  #allocation3 [shape = 'f32[256,1152]{1,0:T(8,128)}', space=vmem, size = 0x120000, scoped, tag = 'scratch operand']
  %s0 = inlined_call_operand.hbm [shape: f32[2,256,128], index: 0, kind: input, shape index: {}]
  %s1 = inlined_call_operand.hbm [shape: f32[128,128], index: 1, kind: input, shape index: {}]
  %s2 = inlined_call_operand.vmem [shape: f32[1,128], index: 2, kind: input, shape index: {}]
  %s3 = inlined_call_operand.vmem [shape: f32[1,128], index: 3, kind: input, shape index: {}]
  %s4 = inlined_call_operand.hbm [shape: f32[1152,128], index: 4, kind: input, shape index: {}]
  %s5 = inlined_call_operand.vmem [shape: f32[1,128], index: 5, kind: input, shape index: {}]
  %s6 = inlined_call_operand.vmem [shape: f32[1,128], index: 6, kind: input, shape index: {}]
  %s7 = inlined_call_operand.hbm [shape: f32[128,128], index: 7, kind: input, shape index: {}]
  %s8 = inlined_call_operand.vmem [shape: f32[1,128], index: 8, kind: input, shape index: {}]
  %s9 = inlined_call_operand.vmem [shape: f32[1,128], index: 9, kind: input, shape index: {}]
  %s10 = inlined_call_operand.hbm [shape: f32[2,256,128], index: 10, kind: output, shape index: {}]
  %s11 = sld [smem:[#allocation0]]
  $region89: #{tpu_custom_call.1} parent=0
    _
  %s13 = ssub.s32 1, %s11
  %s14 = scalar_select 0, %s13, %s11
  $region1: #{tpu_custom_call.1} parent=0
    #allocation4 [shape = 'u8[262144]{0}', space=vmem, size = 0x40000, scoped, tag = 'input window, operand 0']
    #allocation5 [shape = 's32[2]{0}', space=sflag, size = 0x8, scoped, tag = 'scoped memory for tpu_custom_call.1']
    #allocation6 [shape = 's32[2]{0}', space=sflag, size = 0x8, scoped, tag = 'scoped memory for tpu_custom_call.1']
    #allocation7 [shape = 'u8[65536]{0}', space=vmem, size = 0x10000, scoped, tag = 'input window, operand 1, single buffered']
    #allocation8 [shape = 's32[1]{0}', space=sflag, size = 0x4, scoped, tag = 'scoped memory for tpu_custom_call.1']
    #allocation9 [shape = 'u8[589824]{0}', space=vmem, size = 0x90000, scoped, tag = 'input window, operand 4, single buffered']
    #allocation10 [shape = 'u8[65536]{0}', space=vmem, size = 0x10000, scoped, tag = 'input window, operand 7, single buffered']
    #allocation11 [shape = 's32[1]{0}', space=sflag, size = 0x4, scoped, tag = 'scoped memory for tpu_custom_call.1']
    #allocation12 [shape = 'u8[262144]{0}', space=vmem, size = 0x40000, scoped, tag = 'output window, operand 0']
    %15 = vsyncpa [#allocation5], 0
    %s16 = scalar_lea.sflag [#allocation5], 1
    %17 = vsyncpa %s16, 0
    %18 = vsyncpa [#allocation8], 0
    %19 = vsyncpa [#allocation11], 0
    %20 = vsyncpa [#allocation6], 0
    %s21 = scalar_lea.sflag [#allocation6], 1
    %22 = vsyncpa %s21, 0
    loop: start=0, step=1, limit=4
    $region2: #{tpu_custom_call.1} parent=1 // loop_pre_header
      _
    $region3: #{tpu_custom_call.1} parent=1 // loop_header
      %s24 = sphi 0, %s28
      %p25 = scmp.ge.s32.totalorder %s24, 4
      %s31 = sphi 0, %s43
      %s32 = sphi 0, %s39
      %s33 = sphi 0, %s31
      %s34 = sphi 0, %s32
      %s35 = sphi 0, %s33
      %s36 = sphi 0, %s34
      %s46 = sphi 0, %s48
      %s49 = sphi 0, %s46
      %s50 = sphi 0, %s49
      %s66 = sphi 0, %s50
      %s70 = sphi 0, %s70
      %s72 = sphi 0, %s70
      %s73 = sphi 0, %s72
      %s87 = sphi 0, %s73
      %s91 = sphi 0, %s91
      %s93 = sphi 0, %s91
      %s94 = sphi 0, %s93
      %s108 = sphi 0, %s94
      %s112 = sphi 0, %s112
      %s114 = sphi 0, %s112
      %s115 = sphi 0, %s114
      %s129 = sphi 0, %s115
      %s133 = sphi 0, %s133
      %s135 = sphi 0, %s133
      %s136 = sphi 0, %s135
      %s150 = sphi 0, %s136
      %s154 = sphi 0, %s154
      %s156 = sphi 0, %s154
      %s157 = sphi 0, %s156
      %s171 = sphi 0, %s157
      %s175 = sphi 0, %s175
      %s177 = sphi 0, %s175
      %s178 = sphi 0, %s177
      %s192 = sphi 0, %s178
      %s196 = sphi 0, %s196
      %s198 = sphi 0, %s196
      %s199 = sphi 0, %s198
      %s213 = sphi 0, %s199
      %s217 = sphi 0, %s217
      %s219 = sphi 0, %s217
      %s220 = sphi 0, %s219
      %s234 = sphi 0, %s220
      %s238 = sphi 0, %s238
      %s240 = sphi 0, %s238
      %s241 = sphi 0, %s240
      %s255 = sphi 0, %s241
      %s263 = sphi 0, %s265
      %s266 = sphi 0, %s263
      %s267 = sphi 0, %s266
      %s283 = sphi 0, %s267
    $region4: #{tpu_custom_call.1} parent=1 // loop_header_branch
      %27 = sbr.rel (%p25) target = $region8
    $region5: #{tpu_custom_call.1} parent=1 // loop_body
      %s29 = ssub.s32 %s24, 1
      %s30 = ssub.s32 %s24, 2
      %s37 = sadd.s32 1, %s32
      %p38 = scmp.ge.s32.totalorder %s37, 1
      %s39 = scalar_select %p38, 0, %s37
      %s40 = sadd.s32 1, %s31
      %s41 = scalar_select %p38, %s40, %s31
      %p42 = scmp.ge.s32.totalorder %s41, 2
      %s43 = scalar_select %p42, 0, %s41
      %s44 = ssub.s32 %s31, %s43
      %p45 = scmp.eq.s32.totalorder %s44, 0
      %s47 = sadd.s32 %s46, 1
      %s48 = scalar_select %p45, %s46, %s47
      %p51 = pneg %p45
      %p52 = scmp.eq.s32.totalorder %s24, 1
      %p53 = por %p51, %p52
      %p54 = scmp.ne.s32.totalorder %s46, %s49
      %p55 = scmp.eq.s32.totalorder %s24, 0
      %p56 = por %p54, %p55
      %p57 = scmp.ne.s32.totalorder %s46, %s49
      %p58 = scmp.eq.s32.totalorder %s29, 1
      %p59 = por %p57, %p58
      %p60 = scmp.ne.s32.totalorder %s49, %s50
      %p61 = scmp.eq.s32.totalorder %s29, 0
      %p62 = por %p60, %p61
      %p63 = scmp.ne.s32.totalorder %s49, %s50
      %p64 = scmp.eq.s32.totalorder %s30, 1
      %p65 = por %p63, %p64
      %p67 = scmp.ne.s32.totalorder %s50, %s66
      %p68 = scmp.eq.s32.totalorder %s30, 0
      %p69 = por %p67, %p68
      %s71 = sadd.s32 %s70, 1
      %p74 = scmp.eq.s32.totalorder %s24, 1
      %p75 = scmp.ne.s32.totalorder %s70, %s72
      %p76 = scmp.eq.s32.totalorder %s24, 0
      %p77 = por %p75, %p76
      %p78 = scmp.ne.s32.totalorder %s70, %s72
      %p79 = scmp.eq.s32.totalorder %s29, 1
      %p80 = por %p78, %p79
      %p81 = scmp.ne.s32.totalorder %s72, %s73
      %p82 = scmp.eq.s32.totalorder %s29, 0
      %p83 = por %p81, %p82
      %p84 = scmp.ne.s32.totalorder %s72, %s73
      %p85 = scmp.eq.s32.totalorder %s30, 1
      %p86 = por %p84, %p85
      %p88 = scmp.ne.s32.totalorder %s73, %s87
      %p89 = scmp.eq.s32.totalorder %s30, 0
      %p90 = por %p88, %p89
      %s92 = sadd.s32 %s91, 1
      %p95 = scmp.eq.s32.totalorder %s24, 1
      %p96 = scmp.ne.s32.totalorder %s91, %s93
      %p97 = scmp.eq.s32.totalorder %s24, 0
      %p98 = por %p96, %p97
      %p99 = scmp.ne.s32.totalorder %s91, %s93
      %p100 = scmp.eq.s32.totalorder %s29, 1
      %p101 = por %p99, %p100
      %p102 = scmp.ne.s32.totalorder %s93, %s94
      %p103 = scmp.eq.s32.totalorder %s29, 0
      %p104 = por %p102, %p103
      %p105 = scmp.ne.s32.totalorder %s93, %s94
      %p106 = scmp.eq.s32.totalorder %s30, 1
      %p107 = por %p105, %p106
      %p109 = scmp.ne.s32.totalorder %s94, %s108
      %p110 = scmp.eq.s32.totalorder %s30, 0
      %p111 = por %p109, %p110
      %s113 = sadd.s32 %s112, 1
      %p116 = scmp.eq.s32.totalorder %s24, 1
      %p117 = scmp.ne.s32.totalorder %s112, %s114
      %p118 = scmp.eq.s32.totalorder %s24, 0
      %p119 = por %p117, %p118
      %p120 = scmp.ne.s32.totalorder %s112, %s114
      %p121 = scmp.eq.s32.totalorder %s29, 1
      %p122 = por %p120, %p121
      %p123 = scmp.ne.s32.totalorder %s114, %s115
      %p124 = scmp.eq.s32.totalorder %s29, 0
      %p125 = por %p123, %p124
      %p126 = scmp.ne.s32.totalorder %s114, %s115
      %p127 = scmp.eq.s32.totalorder %s30, 1
      %p128 = por %p126, %p127
      %p130 = scmp.ne.s32.totalorder %s115, %s129
      %p131 = scmp.eq.s32.totalorder %s30, 0
      %p132 = por %p130, %p131
      %s134 = sadd.s32 %s133, 1
      %p137 = scmp.eq.s32.totalorder %s24, 1
      %p138 = scmp.ne.s32.totalorder %s133, %s135
      %p139 = scmp.eq.s32.totalorder %s24, 0
      %p140 = por %p138, %p139
      %p141 = scmp.ne.s32.totalorder %s133, %s135
      %p142 = scmp.eq.s32.totalorder %s29, 1
      %p143 = por %p141, %p142
      %p144 = scmp.ne.s32.totalorder %s135, %s136
      %p145 = scmp.eq.s32.totalorder %s29, 0
      %p146 = por %p144, %p145
      %p147 = scmp.ne.s32.totalorder %s135, %s136
      %p148 = scmp.eq.s32.totalorder %s30, 1
      %p149 = por %p147, %p148
      %p151 = scmp.ne.s32.totalorder %s136, %s150
      %p152 = scmp.eq.s32.totalorder %s30, 0
      %p153 = por %p151, %p152
      %s155 = sadd.s32 %s154, 1
      %p158 = scmp.eq.s32.totalorder %s24, 1
      %p159 = scmp.ne.s32.totalorder %s154, %s156
      %p160 = scmp.eq.s32.totalorder %s24, 0
      %p161 = por %p159, %p160
      %p162 = scmp.ne.s32.totalorder %s154, %s156
      %p163 = scmp.eq.s32.totalorder %s29, 1
      %p164 = por %p162, %p163
      %p165 = scmp.ne.s32.totalorder %s156, %s157
      %p166 = scmp.eq.s32.totalorder %s29, 0
      %p167 = por %p165, %p166
      %p168 = scmp.ne.s32.totalorder %s156, %s157
      %p169 = scmp.eq.s32.totalorder %s30, 1
      %p170 = por %p168, %p169
      %p172 = scmp.ne.s32.totalorder %s157, %s171
      %p173 = scmp.eq.s32.totalorder %s30, 0
      %p174 = por %p172, %p173
      %s176 = sadd.s32 %s175, 1
      %p179 = scmp.eq.s32.totalorder %s24, 1
      %p180 = scmp.ne.s32.totalorder %s175, %s177
      %p181 = scmp.eq.s32.totalorder %s24, 0
      %p182 = por %p180, %p181
      %p183 = scmp.ne.s32.totalorder %s175, %s177
      %p184 = scmp.eq.s32.totalorder %s29, 1
      %p185 = por %p183, %p184
      %p186 = scmp.ne.s32.totalorder %s177, %s178
      %p187 = scmp.eq.s32.totalorder %s29, 0
      %p188 = por %p186, %p187
      %p189 = scmp.ne.s32.totalorder %s177, %s178
      %p190 = scmp.eq.s32.totalorder %s30, 1
      %p191 = por %p189, %p190
      %p193 = scmp.ne.s32.totalorder %s178, %s192
      %p194 = scmp.eq.s32.totalorder %s30, 0
      %p195 = por %p193, %p194
      %s197 = sadd.s32 %s196, 1
      %p200 = scmp.eq.s32.totalorder %s24, 1
      %p201 = scmp.ne.s32.totalorder %s196, %s198
      %p202 = scmp.eq.s32.totalorder %s24, 0
      %p203 = por %p201, %p202
      %p204 = scmp.ne.s32.totalorder %s196, %s198
      %p205 = scmp.eq.s32.totalorder %s29, 1
      %p206 = por %p204, %p205
      %p207 = scmp.ne.s32.totalorder %s198, %s199
      %p208 = scmp.eq.s32.totalorder %s29, 0
      %p209 = por %p207, %p208
      %p210 = scmp.ne.s32.totalorder %s198, %s199
      %p211 = scmp.eq.s32.totalorder %s30, 1
      %p212 = por %p210, %p211
      %p214 = scmp.ne.s32.totalorder %s199, %s213
      %p215 = scmp.eq.s32.totalorder %s30, 0
      %p216 = por %p214, %p215
      %s218 = sadd.s32 %s217, 1
      %p221 = scmp.eq.s32.totalorder %s24, 1
      %p222 = scmp.ne.s32.totalorder %s217, %s219
      %p223 = scmp.eq.s32.totalorder %s24, 0
      %p224 = por %p222, %p223
      %p225 = scmp.ne.s32.totalorder %s217, %s219
      %p226 = scmp.eq.s32.totalorder %s29, 1
      %p227 = por %p225, %p226
      %p228 = scmp.ne.s32.totalorder %s219, %s220
      %p229 = scmp.eq.s32.totalorder %s29, 0
      %p230 = por %p228, %p229
      %p231 = scmp.ne.s32.totalorder %s219, %s220
      %p232 = scmp.eq.s32.totalorder %s30, 1
      %p233 = por %p231, %p232
      %p235 = scmp.ne.s32.totalorder %s220, %s234
      %p236 = scmp.eq.s32.totalorder %s30, 0
      %p237 = por %p235, %p236
      %s239 = sadd.s32 %s238, 1
      %p242 = scmp.eq.s32.totalorder %s24, 1
      %p243 = scmp.ne.s32.totalorder %s238, %s240
      %p244 = scmp.eq.s32.totalorder %s24, 0
      %p245 = por %p243, %p244
      %p246 = scmp.ne.s32.totalorder %s238, %s240
      %p247 = scmp.eq.s32.totalorder %s29, 1
      %p248 = por %p246, %p247
      %p249 = scmp.ne.s32.totalorder %s240, %s241
      %p250 = scmp.eq.s32.totalorder %s29, 0
      %p251 = por %p249, %p250
      %p252 = scmp.ne.s32.totalorder %s240, %s241
      %p253 = scmp.eq.s32.totalorder %s30, 1
      %p254 = por %p252, %p253
      %p256 = scmp.ne.s32.totalorder %s241, %s255
      %p257 = scmp.eq.s32.totalorder %s30, 0
      %p258 = por %p256, %p257
      %s259 = ssub.s32 %s31, %s43
      %s260 = ssub.s32 %s32, %s39
      %s261 = sor.u32 %s259, %s260
      %p262 = scmp.eq.s32.totalorder %s261, 0
      %s264 = sadd.s32 %s263, 1
      %s265 = scalar_select %p262, %s263, %s264
      %p268 = pneg %p262
      %p269 = scmp.eq.s32.totalorder %s24, 1
      %p270 = por %p268, %p269
      %p271 = scmp.ne.s32.totalorder %s263, %s266
      %p272 = scmp.eq.s32.totalorder %s24, 0
      %p273 = por %p271, %p272
      %p274 = scmp.ne.s32.totalorder %s263, %s266
      %p275 = scmp.eq.s32.totalorder %s29, 1
      %p276 = por %p274, %p275
      %p277 = scmp.ne.s32.totalorder %s266, %s267
      %p278 = scmp.eq.s32.totalorder %s29, 0
      %p279 = por %p277, %p278
      %p280 = scmp.ne.s32.totalorder %s266, %s267
      %p281 = scmp.eq.s32.totalorder %s30, 1
      %p282 = por %p280, %p281
      %p284 = scmp.ne.s32.totalorder %s267, %s283
      %p285 = scmp.eq.s32.totalorder %s30, 0
      %p286 = por %p284, %p285
      %p287 = scmp.le.s32.totalorder 1, %s24
      %p288 = scmp.lt.s32.totalorder %s24, 3
      %p289 = pnand %p287, %p288
      %p290 = pneg %p289
      // Predicated region
      $region9: #{tpu_custom_call.1} parent=5 // pred_check
        _
      $region10: #{tpu_custom_call.1} parent=5 // pred_check_branch
        %292 = sbr.rel (%p289) target = $region12
      $region11: #{tpu_custom_call.1} parent=5 // pred_region
        %s293 = ssub.s32 %s24, 1
        // Predicated region
        $region13: #{tpu_custom_call.1} parent=11 // pred_check
          %p294 = pneg %p83
        $region14: #{tpu_custom_call.1} parent=11 // pred_check_branch
          %296 = sbr.rel (%p294) target = $region16
        $region15: #{tpu_custom_call.1} parent=11 // pred_region
          %s298 = ssub.s32 2048, 2048
          %299 = vsyncadd [#allocation8], %s298
          %s300 = sshll.u32 [#allocation7], 4
          %s301 = int_to_ptr.vmem [resolvable:$true] %s300
          %306 = dma.hbm_to_vmem [thread:$0]  %s1, 2048, %s301, [#allocation8], 128, 128, 8
        $region16: #{tpu_custom_call.1} parent=11 // pred_fallthru
          _
        // Predicated region
        $region17: #{tpu_custom_call.1} parent=11 // pred_check
          %p307 = pneg %p104
        $region18: #{tpu_custom_call.1} parent=11 // pred_check_branch
          %309 = sbr.rel (%p307) target = $region20
        $region19: #{tpu_custom_call.1} parent=11 // pred_region
          _
        $region20: #{tpu_custom_call.1} parent=11 // pred_fallthru
          _
        // Predicated region
        $region21: #{tpu_custom_call.1} parent=11 // pred_check
          %p310 = pneg %p125
        $region22: #{tpu_custom_call.1} parent=11 // pred_check_branch
          %312 = sbr.rel (%p310) target = $region24
        $region23: #{tpu_custom_call.1} parent=11 // pred_region
          _
        $region24: #{tpu_custom_call.1} parent=11 // pred_fallthru
          _
        // Predicated region
        $region25: #{tpu_custom_call.1} parent=11 // pred_check
          %p313 = pneg %p146
        $region26: #{tpu_custom_call.1} parent=11 // pred_check_branch
          %315 = sbr.rel (%p313) target = $region28
        $region27: #{tpu_custom_call.1} parent=11 // pred_region
          %s317 = ssub.s32 18432, 18432
          %318 = vsyncadd [#allocation8], %s317
          %s319 = sshll.u32 [#allocation9], 4
          %s320 = int_to_ptr.vmem [resolvable:$true] %s319
          %325 = dma.hbm_to_vmem [thread:$0]  %s4, 18432, %s320, [#allocation8], 128, 128, 8
        $region28: #{tpu_custom_call.1} parent=11 // pred_fallthru
          _
        // Predicated region
        $region29: #{tpu_custom_call.1} parent=11 // pred_check
          %p326 = pneg %p167
        $region30: #{tpu_custom_call.1} parent=11 // pred_check_branch
          %328 = sbr.rel (%p326) target = $region32
        $region31: #{tpu_custom_call.1} parent=11 // pred_region
          _
        $region32: #{tpu_custom_call.1} parent=11 // pred_fallthru
          _
        // Predicated region
        $region33: #{tpu_custom_call.1} parent=11 // pred_check
          %p329 = pneg %p188
        $region34: #{tpu_custom_call.1} parent=11 // pred_check_branch
          %331 = sbr.rel (%p329) target = $region36
        $region35: #{tpu_custom_call.1} parent=11 // pred_region
          _
        $region36: #{tpu_custom_call.1} parent=11 // pred_fallthru
          _
        // Predicated region
        $region37: #{tpu_custom_call.1} parent=11 // pred_check
          %p332 = pneg %p209
        $region38: #{tpu_custom_call.1} parent=11 // pred_check_branch
          %334 = sbr.rel (%p332) target = $region40
        $region39: #{tpu_custom_call.1} parent=11 // pred_region
          %s336 = ssub.s32 2048, 2048
          %337 = vsyncadd [#allocation11], %s336
          %s338 = sshll.u32 [#allocation10], 4
          %s339 = int_to_ptr.vmem [resolvable:$true] %s338
          %344 = dma.hbm_to_vmem [thread:$0]  %s7, 2048, %s339, [#allocation11], 128, 128, 8
        $region40: #{tpu_custom_call.1} parent=11 // pred_fallthru
          _
        // Predicated region
        $region41: #{tpu_custom_call.1} parent=11 // pred_check
          %p345 = pneg %p230
        $region42: #{tpu_custom_call.1} parent=11 // pred_check_branch
          %347 = sbr.rel (%p345) target = $region44
        $region43: #{tpu_custom_call.1} parent=11 // pred_region
          _
        $region44: #{tpu_custom_call.1} parent=11 // pred_fallthru
          _
        // Predicated region
        $region45: #{tpu_custom_call.1} parent=11 // pred_check
          %p348 = pneg %p251
        $region46: #{tpu_custom_call.1} parent=11 // pred_check_branch
          %350 = sbr.rel (%p348) target = $region48
        $region47: #{tpu_custom_call.1} parent=11 // pred_region
          _
        $region48: #{tpu_custom_call.1} parent=11 // pred_fallthru
          _
      $region12: #{tpu_custom_call.1} parent=5 // pred_fallthru
        _
      %p351 = scmp.lt.s32.totalorder %s24, 2
      // Predicated region
      $region49: #{tpu_custom_call.1} parent=5 // pred_check
        %p352 = pneg %p351
      $region50: #{tpu_custom_call.1} parent=5 // pred_check_branch
        %354 = sbr.rel (%p352) target = $region52
      $region51: #{tpu_custom_call.1} parent=5 // pred_region
        // Predicated region
        $region53: #{tpu_custom_call.1} parent=51 // pred_check
          %p355 = pneg %p56
        $region54: #{tpu_custom_call.1} parent=51 // pred_check_branch
          %357 = sbr.rel (%p355) target = $region56
        $region55: #{tpu_custom_call.1} parent=51 // pred_region
          %s358 = sand.u32 %s46, 1
          %s359 = scalar_lea.sflag [#allocation5], %s358
          %s360 = sand.u32 %s46, 1
          %s361 = smul.addr %s360, 256
          %s362 = scalar_lea.vmem [#allocation4], %s361
          %s364 = ssub.s32 4096, 4096
          %365 = vsyncadd %s359, %s364
          %s366 = smul.addr %s31, 32
          %s367 = smul.addr %s366, 128
          %s368 = scalar_lea.hbm %s0, %s367
          %s369 = sshll.u32 %s362, 4
          %s370 = int_to_ptr.vmem [resolvable:$true] %s369
          %375 = dma.hbm_to_vmem [thread:$0]  %s368, 4096, %s370, %s359, 128, 128, 8
        $region56: #{tpu_custom_call.1} parent=51 // pred_fallthru
          _
      $region52: #{tpu_custom_call.1} parent=5 // pred_fallthru
        _
      %p376 = scmp.le.s32.totalorder 1, %s24
      %p377 = scmp.lt.s32.totalorder %s24, 3
      %p378 = pnand %p376, %p377
      %p379 = pneg %p378
      // Predicated region
      $region57: #{tpu_custom_call.1} parent=5 // pred_check
        _
      $region58: #{tpu_custom_call.1} parent=5 // pred_check_branch
        %381 = sbr.rel (%p378) target = $region60
      $region59: #{tpu_custom_call.1} parent=5 // pred_region
        %s382 = ssub.s32 %s24, 1
        %s383 = sand.u32 %s49, 1
        %s384 = scalar_lea.sflag [#allocation5], %s383
        %s385 = sand.u32 %s49, 1
        %s386 = smul.addr %s385, 256
        %s387 = scalar_lea.vmem [#allocation4], %s386
        // Predicated region
        $region61: #{tpu_custom_call.1} parent=59 // pred_check
          %p388 = pneg %p62
        $region62: #{tpu_custom_call.1} parent=59 // pred_check_branch
          %390 = sbr.rel (%p388) target = $region64
        $region63: #{tpu_custom_call.1} parent=59 // pred_region
          %391 = dma.done %s384, 4096
        $region64: #{tpu_custom_call.1} parent=59 // pred_fallthru
          _
        // Predicated region
        $region65: #{tpu_custom_call.1} parent=59 // pred_check
          %p392 = pneg %p83
        $region66: #{tpu_custom_call.1} parent=59 // pred_check_branch
          %394 = sbr.rel (%p392) target = $region68
        $region67: #{tpu_custom_call.1} parent=59 // pred_region
          %395 = dma.done [#allocation8], 2048
        $region68: #{tpu_custom_call.1} parent=59 // pred_fallthru
          _
        // Predicated region
        $region69: #{tpu_custom_call.1} parent=59 // pred_check
          %p396 = pneg %p146
        $region70: #{tpu_custom_call.1} parent=59 // pred_check_branch
          %398 = sbr.rel (%p396) target = $region72
        $region71: #{tpu_custom_call.1} parent=59 // pred_region
          %399 = dma.done [#allocation8], 18432
        $region72: #{tpu_custom_call.1} parent=59 // pred_fallthru
          _
        // Predicated region
        $region73: #{tpu_custom_call.1} parent=59 // pred_check
          %p400 = pneg %p209
        $region74: #{tpu_custom_call.1} parent=59 // pred_check_branch
          %402 = sbr.rel (%p400) target = $region76
        $region75: #{tpu_custom_call.1} parent=59 // pred_region
          %403 = dma.done [#allocation11], 2048
        $region76: #{tpu_custom_call.1} parent=59 // pred_fallthru
          _
        %s404 = sand.u32 %s49, 1
        %s405 = scalar_lea.sflag [#allocation5], %s404
        %s406 = sand.u32 %s49, 1
        %s407 = smul.addr %s406, 256
        %s408 = scalar_lea.vmem [#allocation4], %s407
        %p409 = pneg %p62
        %p410 = pneg %p59
        %p411 = pneg %p83
        %p412 = pneg %p80
        %p413 = pneg %p104
        %p414 = pneg %p101
        %p415 = pneg %p125
        %p416 = pneg %p122
        %p417 = pneg %p146
        %p418 = pneg %p143
        %p419 = pneg %p167
        %p420 = pneg %p164
        %p421 = pneg %p188
        %p422 = pneg %p185
        %p423 = pneg %p209
        %p424 = pneg %p206
        %p425 = pneg %p230
        %p426 = pneg %p227
        %p427 = pneg %p251
        %p428 = pneg %p248
        %p429 = pneg %p279
        %p430 = pneg %p276
        %s431 = sand.u32 %s266, 1
        %s432 = scalar_lea.sflag [#allocation6], %s431
        %s433 = sand.u32 %s266, 1
        %s434 = smul.addr %s433, 256
        %s435 = scalar_lea.vmem [#allocation12], %s434
        %s436 = smul.u32 32, %s34
        %s437 = smul.u32 %s34, 256
        %438 = vst [vmem:[#allocation2] sm:$0xff] 0.0
        %439 = vst [vmem:[#allocation2 + $0x128] sm:$0xff] 0.0
        %s440 = scalar_lea.vmem %s387, %s437 [#allocation4]
        %v441 = vld [vmem:[%s440] sm:$0xff]
        %v442 = vld [vmem:[%s440 + $0x8] sm:$0xff]
        %v443 = vld [vmem:[%s440 + $0x10] sm:$0xff]
        %v444 = vld [vmem:[%s440 + $0x18] sm:$0xff]
        %v445 = vld [vmem:[%s440 + $0x20] sm:$0xff]
        %v446 = vld [vmem:[%s440 + $0x28] sm:$0xff]
        %v447 = vld [vmem:[%s440 + $0x30] sm:$0xff]
        %v448 = vld [vmem:[%s440 + $0x38] sm:$0xff]
        %v449 = vld [vmem:[%s440 + $0x40] sm:$0xff]
        %v450 = vld [vmem:[%s440 + $0x48] sm:$0xff]
        %v451 = vld [vmem:[%s440 + $0x50] sm:$0xff]
        %v452 = vld [vmem:[%s440 + $0x58] sm:$0xff]
        %v453 = vld [vmem:[%s440 + $0x60] sm:$0xff]
        %v454 = vld [vmem:[%s440 + $0x68] sm:$0xff]
        %v455 = vld [vmem:[%s440 + $0x70] sm:$0xff]
        %v456 = vld [vmem:[%s440 + $0x78] sm:$0xff]
        %v457 = vld [vmem:[%s440 + $0x80] sm:$0xff]
        %v458 = vld [vmem:[%s440 + $0x88] sm:$0xff]
        %v459 = vld [vmem:[%s440 + $0x90] sm:$0xff]
        %v460 = vld [vmem:[%s440 + $0x98] sm:$0xff]
        %v461 = vld [vmem:[%s440 + $0xa0] sm:$0xff]
        %v462 = vld [vmem:[%s440 + $0xa8] sm:$0xff]
        %v463 = vld [vmem:[%s440 + $0xb0] sm:$0xff]
        %v464 = vld [vmem:[%s440 + $0xb8] sm:$0xff]
        %v465 = vld [vmem:[%s440 + $0xc0] sm:$0xff]
        %v466 = vld [vmem:[%s440 + $0xc8] sm:$0xff]
        %v467 = vld [vmem:[%s440 + $0xd0] sm:$0xff]
        %v468 = vld [vmem:[%s440 + $0xd8] sm:$0xff]
        %v469 = vld [vmem:[%s440 + $0xe0] sm:$0xff]
        %v470 = vld [vmem:[%s440 + $0xe8] sm:$0xff]
        %v471 = vld [vmem:[%s440 + $0xf0] sm:$0xff]
        %v472 = vld [vmem:[%s440 + $0xf8] sm:$0xff]
        %v473 = vld [vmem:[#allocation7] sm:$0xff]
        %v474 = vld [vmem:[#allocation7 + $0x8] sm:$0xff]
        %v475 = vld [vmem:[#allocation7 + $0x10] sm:$0xff]
        %v476 = vld [vmem:[#allocation7 + $0x18] sm:$0xff]
        %v477 = vld [vmem:[#allocation7 + $0x20] sm:$0xff]
        %v478 = vld [vmem:[#allocation7 + $0x28] sm:$0xff]
        %v479 = vld [vmem:[#allocation7 + $0x30] sm:$0xff]
        %v480 = vld [vmem:[#allocation7 + $0x38] sm:$0xff]
        %v481 = vld [vmem:[#allocation7 + $0x40] sm:$0xff]
        %v482 = vld [vmem:[#allocation7 + $0x48] sm:$0xff]
        %v483 = vld [vmem:[#allocation7 + $0x50] sm:$0xff]
        %v484 = vld [vmem:[#allocation7 + $0x58] sm:$0xff]
        %v485 = vld [vmem:[#allocation7 + $0x60] sm:$0xff]
        %v486 = vld [vmem:[#allocation7 + $0x68] sm:$0xff]
        %v487 = vld [vmem:[#allocation7 + $0x70] sm:$0xff]
        %v488 = vld [vmem:[#allocation7 + $0x78] sm:$0xff]
        %489 = vmatprep.subr.mxu0 0.0
        %490 = vmatpush1.msra.mxu0 %v473
        %491 = vmatprep.subr.mxu0 0.0
        %492 = vmatpush1.msra.mxu0 %v474
        %493 = vmatprep.subr.mxu0 0.0
        %494 = vmatpush1.msra.mxu0 %v475
        %495 = vmatprep.subr.mxu0 0.0
        %496 = vmatpush1.msra.mxu0 %v476
        %497 = vmatprep.subr.mxu0 0.0
        %498 = vmatpush1.msra.mxu0 %v477
        %499 = vmatprep.subr.mxu0 0.0
        %500 = vmatpush1.msra.mxu0 %v478
        %501 = vmatprep.subr.mxu0 0.0
        %502 = vmatpush1.msra.mxu0 %v479
        %503 = vmatprep.subr.mxu0 0.0
        %504 = vmatpush1.msra.mxu0 %v480
        %505 = vmatprep.subr.mxu0 0.0
        %506 = vmatpush1.msra.mxu0 %v481
        %507 = vmatprep.subr.mxu0 0.0
        %508 = vmatpush1.msra.mxu0 %v482
        %509 = vmatprep.subr.mxu0 0.0
        %510 = vmatpush1.msra.mxu0 %v483
        %511 = vmatprep.subr.mxu0 0.0
        %512 = vmatpush1.msra.mxu0 %v484
        %513 = vmatprep.subr.mxu0 0.0
        %514 = vmatpush1.msra.mxu0 %v485
        %515 = vmatprep.subr.mxu0 0.0
        %516 = vmatpush1.msra.mxu0 %v486
        %517 = vmatprep.subr.mxu0 0.0
        %518 = vmatpush1.msra.mxu0 %v487
        %519 = vmatprep.subr.mxu0 0.0
        %520 = vmatpush1.msra.mxu0 %v488
        %521 = vmatprep.subr.mxu0 0.0
        %522 = vmatpush1.msra.mxu0 0.0
        %523 = vmatprep.subr.mxu0 0.0
        %524 = vmatpush1.msra.mxu0 0.0
        %525 = vmatprep.subr.mxu0 0.0
        %526 = vmatpush1.msra.mxu0 0.0
        %527 = vmatprep.subr.mxu0 0.0
        %528 = vmatpush1.msra.mxu0 0.0
        %529 = vmatprep.subr.mxu0 0.0
        %530 = vmatpush1.msra.mxu0 0.0
        %531 = vmatprep.subr.mxu0 0.0
        %532 = vmatpush1.msra.mxu0 0.0
        %533 = vmatprep.subr.mxu0 0.0
        %534 = vmatpush1.msra.mxu0 0.0
        %535 = vmatprep.subr.mxu0 0.0
        %536 = vmatpush1.msra.mxu0 0.0
        %537 = vmatprep.subr.mxu0 0.0
        %538 = vmatpush1.msra.mxu0 0.0
        %539 = vmatprep.subr.mxu0 0.0
        %540 = vmatpush1.msra.mxu0 0.0
        %541 = vmatprep.subr.mxu0 0.0
        %542 = vmatpush1.msra.mxu0 0.0
        %543 = vmatprep.subr.mxu0 0.0
        %544 = vmatpush1.msra.mxu0 0.0
        %545 = vmatprep.subr.mxu0 0.0
        %546 = vmatpush1.msra.mxu0 0.0
        %547 = vmatprep.subr.mxu0 0.0
        %548 = vmatpush1.msra.mxu0 0.0
        %549 = vmatprep.subr.mxu0 0.0
        %550 = vmatpush1.msra.mxu0 0.0
        %551 = vmatprep.subr.mxu0 0.0
        %552 = vmatpush1.msra.mxu0 0.0
        %553 = vmatprep.mubr.f32.mxu0 0.0
        %554 = vmatmul.mubr.f32.gmra.mrb[0].mxu0 %v441
        %v555 = vpop.f32.mrb[0].mxu0
        %v556 = vadd.f32 0.0, %v555
        %v557 = vpop.f32.mrb[0].mxu0
        %558 = vmatprep.mubr.f32.mxu0 0.0
        %559 = vmatmul.mubr.f32.gmra.mrb[0].mxu0 %v442
        %v560 = vpop.f32.mrb[0].mxu0
        %v561 = vadd.f32 0.0, %v560
        %v562 = vpop.f32.mrb[0].mxu0
        %563 = vmatprep.mubr.f32.mxu0 0.0
        %564 = vmatmul.mubr.f32.gmra.mrb[0].mxu0 %v443
        %v565 = vpop.f32.mrb[0].mxu0
        %v566 = vadd.f32 0.0, %v565
        %v567 = vpop.f32.mrb[0].mxu0
        %568 = vmatprep.mubr.f32.mxu0 0.0
        %569 = vmatmul.mubr.f32.gmra.mrb[0].mxu0 %v444
        %v570 = vpop.f32.mrb[0].mxu0
        %v571 = vadd.f32 0.0, %v570
        %v572 = vpop.f32.mrb[0].mxu0
        %573 = vmatprep.mubr.f32.mxu0 0.0
        %574 = vmatmul.mubr.f32.gmra.mrb[0].mxu0 %v445
        %v575 = vpop.f32.mrb[0].mxu0
        %v576 = vadd.f32 0.0, %v575
        %v577 = vpop.f32.mrb[0].mxu0
        %578 = vmatprep.mubr.f32.mxu0 0.0
        %579 = vmatmul.mubr.f32.gmra.mrb[0].mxu0 %v446
        %v580 = vpop.f32.mrb[0].mxu0
        %v581 = vadd.f32 0.0, %v580
        %v582 = vpop.f32.mrb[0].mxu0
        %583 = vmatprep.mubr.f32.mxu0 0.0
        %584 = vmatmul.mubr.f32.gmra.mrb[0].mxu0 %v447
        %v585 = vpop.f32.mrb[0].mxu0
        %v586 = vadd.f32 0.0, %v585
        %v587 = vpop.f32.mrb[0].mxu0
        %588 = vmatprep.mubr.f32.mxu0 0.0
        %589 = vmatmul.mubr.f32.gmra.mrb[0].mxu0 %v448
        %v590 = vpop.f32.mrb[0].mxu0
        %v591 = vadd.f32 0.0, %v590
        %v592 = vpop.f32.mrb[0].mxu0
        %593 = vmatprep.mubr.f32.mxu0 0.0
        %594 = vmatmul.mubr.f32.gmra.mrb[0].mxu0 %v449
        %v595 = vpop.f32.mrb[0].mxu0
        %v596 = vadd.f32 0.0, %v595
        %v597 = vpop.f32.mrb[0].mxu0
        %598 = vmatprep.mubr.f32.mxu0 0.0
        %599 = vmatmul.mubr.f32.gmra.mrb[0].mxu0 %v450
        %v600 = vpop.f32.mrb[0].mxu0
        %v601 = vadd.f32 0.0, %v600
        %v602 = vpop.f32.mrb[0].mxu0
        %603 = vmatprep.mubr.f32.mxu0 0.0
        %604 = vmatmul.mubr.f32.gmra.mrb[0].mxu0 %v451
        %v605 = vpop.f32.mrb[0].mxu0
        %v606 = vadd.f32 0.0, %v605
        %v607 = vpop.f32.mrb[0].mxu0
        %608 = vmatprep.mubr.f32.mxu0 0.0
        %609 = vmatmul.mubr.f32.gmra.mrb[0].mxu0 %v452
        %v610 = vpop.f32.mrb[0].mxu0
        %v611 = vadd.f32 0.0, %v610
        %v612 = vpop.f32.mrb[0].mxu0
        %613 = vmatprep.mubr.f32.mxu0 0.0
        %614 = vmatmul.mubr.f32.gmra.mrb[0].mxu0 %v453
        %v615 = vpop.f32.mrb[0].mxu0
        %v616 = vadd.f32 0.0, %v615
        %v617 = vpop.f32.mrb[0].mxu0
        %618 = vmatprep.mubr.f32.mxu0 0.0
        %619 = vmatmul.mubr.f32.gmra.mrb[0].mxu0 %v454
        %v620 = vpop.f32.mrb[0].mxu0
        %v621 = vadd.f32 0.0, %v620
        %v622 = vpop.f32.mrb[0].mxu0
        %623 = vmatprep.mubr.f32.mxu0 0.0
        %624 = vmatmul.mubr.f32.gmra.mrb[0].mxu0 %v455
        %v625 = vpop.f32.mrb[0].mxu0
        %v626 = vadd.f32 0.0, %v625
        %v627 = vpop.f32.mrb[0].mxu0
        %628 = vmatprep.mubr.f32.mxu0 0.0
        %629 = vmatmul.mubr.f32.gmra.mrb[0].mxu0 %v456
        %v630 = vpop.f32.mrb[0].mxu0
        %v631 = vadd.f32 0.0, %v630
        %v632 = vpop.f32.mrb[0].mxu0
        %633 = vmatprep.mubr.f32.mxu0 0.0
        %634 = vmatmul.mubr.f32.gmra.mrb[0].mxu0 %v457
        %v635 = vpop.f32.mrb[0].mxu0
        %v636 = vadd.f32 0.0, %v635
        %v637 = vpop.f32.mrb[0].mxu0
        %638 = vmatprep.mubr.f32.mxu0 0.0
        %639 = vmatmul.mubr.f32.gmra.mrb[0].mxu0 %v458
        %v640 = vpop.f32.mrb[0].mxu0
        %v641 = vadd.f32 0.0, %v640
        %v642 = vpop.f32.mrb[0].mxu0
        %643 = vmatprep.mubr.f32.mxu0 0.0
        %644 = vmatmul.mubr.f32.gmra.mrb[0].mxu0 %v459
        %v645 = vpop.f32.mrb[0].mxu0
        %v646 = vadd.f32 0.0, %v645
        %v647 = vpop.f32.mrb[0].mxu0
        %648 = vmatprep.mubr.f32.mxu0 0.0
        %649 = vmatmul.mubr.f32.gmra.mrb[0].mxu0 %v460
        %v650 = vpop.f32.mrb[0].mxu0
        %v651 = vadd.f32 0.0, %v650
        %v652 = vpop.f32.mrb[0].mxu0
        %653 = vmatprep.mubr.f32.mxu0 0.0
        %654 = vmatmul.mubr.f32.gmra.mrb[0].mxu0 %v461
        %v655 = vpop.f32.mrb[0].mxu0
        %v656 = vadd.f32 0.0, %v655
        %v657 = vpop.f32.mrb[0].mxu0
        %658 = vmatprep.mubr.f32.mxu0 0.0
        %659 = vmatmul.mubr.f32.gmra.mrb[0].mxu0 %v462
        %v660 = vpop.f32.mrb[0].mxu0
        %v661 = vadd.f32 0.0, %v660
        %v662 = vpop.f32.mrb[0].mxu0
        %663 = vmatprep.mubr.f32.mxu0 0.0
        %664 = vmatmul.mubr.f32.gmra.mrb[0].mxu0 %v463
        %v665 = vpop.f32.mrb[0].mxu0
        %v666 = vadd.f32 0.0, %v665
        %v667 = vpop.f32.mrb[0].mxu0
        %668 = vmatprep.mubr.f32.mxu0 0.0
        %669 = vmatmul.mubr.f32.gmra.mrb[0].mxu0 %v464
        %v670 = vpop.f32.mrb[0].mxu0
        %v671 = vadd.f32 0.0, %v670
        %v672 = vpop.f32.mrb[0].mxu0
        %673 = vmatprep.mubr.f32.mxu0 0.0
        %674 = vmatmul.mubr.f32.gmra.mrb[0].mxu0 %v465
        %v675 = vpop.f32.mrb[0].mxu0
        %v676 = vadd.f32 0.0, %v675
        %v677 = vpop.f32.mrb[0].mxu0
        %678 = vmatprep.mubr.f32.mxu0 0.0
        %679 = vmatmul.mubr.f32.gmra.mrb[0].mxu0 %v466
        %v680 = vpop.f32.mrb[0].mxu0
        %v681 = vadd.f32 0.0, %v680
        %v682 = vpop.f32.mrb[0].mxu0
        %683 = vmatprep.mubr.f32.mxu0 0.0
        %684 = vmatmul.mubr.f32.gmra.mrb[0].mxu0 %v467
        %v685 = vpop.f32.mrb[0].mxu0
        %v686 = vadd.f32 0.0, %v685
        %v687 = vpop.f32.mrb[0].mxu0
        %688 = vmatprep.mubr.f32.mxu0 0.0
        %689 = vmatmul.mubr.f32.gmra.mrb[0].mxu0 %v468
        %v690 = vpop.f32.mrb[0].mxu0
        %v691 = vadd.f32 0.0, %v690
        %v692 = vpop.f32.mrb[0].mxu0
        %693 = vmatprep.mubr.f32.mxu0 0.0
        %694 = vmatmul.mubr.f32.gmra.mrb[0].mxu0 %v469
        %v695 = vpop.f32.mrb[0].mxu0
        %v696 = vadd.f32 0.0, %v695
        %v697 = vpop.f32.mrb[0].mxu0
        %698 = vmatprep.mubr.f32.mxu0 0.0
        %699 = vmatmul.mubr.f32.gmra.mrb[0].mxu0 %v470
        %v700 = vpop.f32.mrb[0].mxu0
        %v701 = vadd.f32 0.0, %v700
        %v702 = vpop.f32.mrb[0].mxu0
        %703 = vmatprep.mubr.f32.mxu0 0.0
        %704 = vmatmul.mubr.f32.gmra.mrb[0].mxu0 %v471
        %v705 = vpop.f32.mrb[0].mxu0
        %v706 = vadd.f32 0.0, %v705
        %v707 = vpop.f32.mrb[0].mxu0
        %708 = vmatprep.mubr.f32.mxu0 0.0
        %709 = vmatmul.mubr.f32.gmra.mrb[0].mxu0 %v472
        %v710 = vpop.f32.mrb[0].mxu0
        %v711 = vadd.f32 0.0, %v710
        %v712 = vpop.f32.mrb[0].mxu0
        %713 = vdwg.mxu0
        %v714 = vld [vmem:[%s2] sm:$0x1]
        %v716 = vlaneseq
        %v717 = vshrl.u32 %v716, 7
        %v718 = vsub.s32 0, %v717
        %v719 = vrot.slane %v714, %v718
        %v721 = vmul.f32 %v556, %v719
        %v722 = vmul.f32 %v561, %v719
        %v723 = vmul.f32 %v566, %v719
        %v724 = vmul.f32 %v571, %v719
        %v725 = vmul.f32 %v576, %v719
        %v726 = vmul.f32 %v581, %v719
        %v727 = vmul.f32 %v586, %v719
        %v728 = vmul.f32 %v591, %v719
        %v729 = vmul.f32 %v596, %v719
        %v730 = vmul.f32 %v601, %v719
        %v731 = vmul.f32 %v606, %v719
        %v732 = vmul.f32 %v611, %v719
        %v733 = vmul.f32 %v616, %v719
        %v734 = vmul.f32 %v621, %v719
        %v735 = vmul.f32 %v626, %v719
        %v736 = vmul.f32 %v631, %v719
        %v737 = vmul.f32 %v636, %v719
        %v738 = vmul.f32 %v641, %v719
        %v739 = vmul.f32 %v646, %v719
        %v740 = vmul.f32 %v651, %v719
        %v741 = vmul.f32 %v656, %v719
        %v742 = vmul.f32 %v661, %v719
        %v743 = vmul.f32 %v666, %v719
        %v744 = vmul.f32 %v671, %v719
        %v745 = vmul.f32 %v676, %v719
        %v746 = vmul.f32 %v681, %v719
        %v747 = vmul.f32 %v686, %v719
        %v748 = vmul.f32 %v691, %v719
        %v749 = vmul.f32 %v696, %v719
        %v750 = vmul.f32 %v701, %v719
        %v751 = vmul.f32 %v706, %v719
        %v752 = vmul.f32 %v711, %v719
        %v753 = vld [vmem:[%s3] sm:$0x1]
        %v755 = vlaneseq
        %v756 = vshrl.u32 %v755, 7
        %v757 = vsub.s32 0, %v756
        %v758 = vrot.slane %v753, %v757
        %v760 = vadd.f32 %v721, %v758
        %v761 = vadd.f32 %v722, %v758
        %v762 = vadd.f32 %v723, %v758
        %v763 = vadd.f32 %v724, %v758
        %v764 = vadd.f32 %v725, %v758
        %v765 = vadd.f32 %v726, %v758
        %v766 = vadd.f32 %v727, %v758
        %v767 = vadd.f32 %v728, %v758
        %v768 = vadd.f32 %v729, %v758
        %v769 = vadd.f32 %v730, %v758
        %v770 = vadd.f32 %v731, %v758
        %v771 = vadd.f32 %v732, %v758
        %v772 = vadd.f32 %v733, %v758
        %v773 = vadd.f32 %v734, %v758
        %v774 = vadd.f32 %v735, %v758
        %v775 = vadd.f32 %v736, %v758
        %v776 = vadd.f32 %v737, %v758
        %v777 = vadd.f32 %v738, %v758
        %v778 = vadd.f32 %v739, %v758
        %v779 = vadd.f32 %v740, %v758
        %v780 = vadd.f32 %v741, %v758
        %v781 = vadd.f32 %v742, %v758
        %v782 = vadd.f32 %v743, %v758
        %v783 = vadd.f32 %v744, %v758
        %v784 = vadd.f32 %v745, %v758
        %v785 = vadd.f32 %v746, %v758
        %v786 = vadd.f32 %v747, %v758
        %v787 = vadd.f32 %v748, %v758
        %v788 = vadd.f32 %v749, %v758
        %v789 = vadd.f32 %v750, %v758
        %v790 = vadd.f32 %v751, %v758
        %v791 = vadd.f32 %v752, %v758
        %v792 = vmax.f32 %v760, 0.0
        %v793 = vmax.f32 %v761, 0.0
        %v794 = vmax.f32 %v762, 0.0
        %v795 = vmax.f32 %v763, 0.0
        %v796 = vmax.f32 %v764, 0.0
        %v797 = vmax.f32 %v765, 0.0
        %v798 = vmax.f32 %v766, 0.0
        %v799 = vmax.f32 %v767, 0.0
        %v800 = vmax.f32 %v768, 0.0
        %v801 = vmax.f32 %v769, 0.0
        %v802 = vmax.f32 %v770, 0.0
        %v803 = vmax.f32 %v771, 0.0
        %v804 = vmax.f32 %v772, 0.0
        %v805 = vmax.f32 %v773, 0.0
        %v806 = vmax.f32 %v774, 0.0
        %v807 = vmax.f32 %v775, 0.0
        %v808 = vmax.f32 %v776, 0.0
        %v809 = vmax.f32 %v777, 0.0
        %v810 = vmax.f32 %v778, 0.0
        %v811 = vmax.f32 %v779, 0.0
        %v812 = vmax.f32 %v780, 0.0
        %v813 = vmax.f32 %v781, 0.0
        %v814 = vmax.f32 %v782, 0.0
        %v815 = vmax.f32 %v783, 0.0
        %v816 = vmax.f32 %v784, 0.0
        %v817 = vmax.f32 %v785, 0.0
        %v818 = vmax.f32 %v786, 0.0
        %v819 = vmax.f32 %v787, 0.0
        %v820 = vmax.f32 %v788, 0.0
        %v821 = vmax.f32 %v789, 0.0
        %v822 = vmax.f32 %v790, 0.0
        %v823 = vmax.f32 %v791, 0.0
        %824 = vst [vmem:[#allocation2 + $0x18] sm:$0xff] %v792
        %825 = vst [vmem:[#allocation2 + $0x20] sm:$0xff] %v793
        %826 = vst [vmem:[#allocation2 + $0x28] sm:$0xff] %v794
        %827 = vst [vmem:[#allocation2 + $0x30] sm:$0xff] %v795
        %828 = vst [vmem:[#allocation2 + $0x38] sm:$0xff] %v796
        %829 = vst [vmem:[#allocation2 + $0x40] sm:$0xff] %v797
        %830 = vst [vmem:[#allocation2 + $0x48] sm:$0xff] %v798
        %831 = vst [vmem:[#allocation2 + $0x50] sm:$0xff] %v799
        %832 = vst [vmem:[#allocation2 + $0x58] sm:$0xff] %v800
        %833 = vst [vmem:[#allocation2 + $0x60] sm:$0xff] %v801
        %834 = vst [vmem:[#allocation2 + $0x68] sm:$0xff] %v802
        %835 = vst [vmem:[#allocation2 + $0x70] sm:$0xff] %v803
        %836 = vst [vmem:[#allocation2 + $0x78] sm:$0xff] %v804
        %837 = vst [vmem:[#allocation2 + $0x80] sm:$0xff] %v805
        %838 = vst [vmem:[#allocation2 + $0x88] sm:$0xff] %v806
        %839 = vst [vmem:[#allocation2 + $0x90] sm:$0xff] %v807
        %840 = vst [vmem:[#allocation2 + $0x98] sm:$0xff] %v808
        %841 = vst [vmem:[#allocation2 + $0xa0] sm:$0xff] %v809
        %842 = vst [vmem:[#allocation2 + $0xa8] sm:$0xff] %v810
        %843 = vst [vmem:[#allocation2 + $0xb0] sm:$0xff] %v811
        %844 = vst [vmem:[#allocation2 + $0xb8] sm:$0xff] %v812
        %845 = vst [vmem:[#allocation2 + $0xc0] sm:$0xff] %v813
        %846 = vst [vmem:[#allocation2 + $0xc8] sm:$0xff] %v814
        %847 = vst [vmem:[#allocation2 + $0xd0] sm:$0xff] %v815
        %848 = vst [vmem:[#allocation2 + $0xd8] sm:$0xff] %v816
        %849 = vst [vmem:[#allocation2 + $0xe0] sm:$0xff] %v817
        %850 = vst [vmem:[#allocation2 + $0xe8] sm:$0xff] %v818
        %851 = vst [vmem:[#allocation2 + $0xf0] sm:$0xff] %v819
        %852 = vst [vmem:[#allocation2 + $0xf8] sm:$0xff] %v820
        %853 = vst [vmem:[#allocation2 + $0x100] sm:$0xff] %v821
        %854 = vst [vmem:[#allocation2 + $0x108] sm:$0xff] %v822
        %855 = vst [vmem:[#allocation2 + $0x110] sm:$0xff] %v823
        %856 = vst [vmem:[#allocation2 + $0x8] sm:$0xff] 0.0
        %857 = vst [vmem:[#allocation2 + $0x10] sm:$0xff] 0.0
        %858 = vst [vmem:[#allocation2 + $0x118] sm:$0xff] 0.0
        %859 = vst [vmem:[#allocation2 + $0x120] sm:$0xff] 0.0
        %v860 = vlaneseq
        %v861 = vshrl.u32 %v860, 7
        %v862 = vadd.s32 %v861, 8
        %v863 = vadd.s32 %v861, 16
        %v864 = vadd.s32 %v861, 24
        %v865 = vadd.s32 %v861, 32
        %v866 = vadd.s32 %v861, 40
        %v867 = vadd.s32 %v861, 48
        %v868 = vadd.s32 %v861, 56
        %v869 = vadd.s32 %v861, 64
        %v870 = vadd.s32 %v861, 72
        %v871 = vadd.s32 %v861, 80
        %v872 = vadd.s32 %v861, 88
        %v873 = vadd.s32 %v861, 96
        %v874 = vadd.s32 %v861, 104
        %v875 = vadd.s32 %v861, 112
        %v876 = vadd.s32 %v861, 120
        %v877 = vadd.s32 %v861, 128
        %v878 = vadd.s32 %v861, 136
        %v879 = vadd.s32 %v861, 144
        %v880 = vadd.s32 %v861, 152
        %v881 = vadd.s32 %v861, 160
        %v882 = vadd.s32 %v861, 168
        %v883 = vadd.s32 %v861, 176
        %v884 = vadd.s32 %v861, 184
        %v885 = vadd.s32 %v861, 192
        %v886 = vadd.s32 %v861, 200
        %v887 = vadd.s32 %v861, 208
        %v888 = vadd.s32 %v861, 216
        %v889 = vadd.s32 %v861, 224
        %v890 = vadd.s32 %v861, 232
        %v891 = vadd.s32 %v861, 240
        %v892 = vadd.s32 %v861, 248
        %vm893 = vcmp.lt.s32.totalorder %v861, 0
        %v894 = vsub.s32 0, %v861
        %v895 = vsel %vm893, %v894, %v861
        %v896 = vshrl.u32 %v895, 4
        %v897 = vand.u32 %v895, 15
        %v898 = vsub.s32 0, %v897
        %v899 = vsel %vm893, %v898, %v897
        %vm900 = vcmp.lt.s32.totalorder %v862, 0
        %v901 = vsub.s32 0, %v862
        %v902 = vsel %vm900, %v901, %v862
        %v903 = vshrl.u32 %v902, 4
        %v904 = vand.u32 %v902, 15
        %v905 = vsub.s32 0, %v904
        %v906 = vsel %vm900, %v905, %v904
        %vm907 = vcmp.lt.s32.totalorder %v863, 0
        %v908 = vsub.s32 0, %v863
        %v909 = vsel %vm907, %v908, %v863
        %v910 = vshrl.u32 %v909, 4
        %v911 = vand.u32 %v909, 15
        %v912 = vsub.s32 0, %v911
        %v913 = vsel %vm907, %v912, %v911
        %vm914 = vcmp.lt.s32.totalorder %v864, 0
        %v915 = vsub.s32 0, %v864
        %v916 = vsel %vm914, %v915, %v864
        %v917 = vshrl.u32 %v916, 4
        %v918 = vand.u32 %v916, 15
        %v919 = vsub.s32 0, %v918
        %v920 = vsel %vm914, %v919, %v918
        %vm921 = vcmp.lt.s32.totalorder %v865, 0
        %v922 = vsub.s32 0, %v865
        %v923 = vsel %vm921, %v922, %v865
        %v924 = vshrl.u32 %v923, 4
        %v925 = vand.u32 %v923, 15
        %v926 = vsub.s32 0, %v925
        %v927 = vsel %vm921, %v926, %v925
        %vm928 = vcmp.lt.s32.totalorder %v866, 0
        %v929 = vsub.s32 0, %v866
        %v930 = vsel %vm928, %v929, %v866
        %v931 = vshrl.u32 %v930, 4
        %v932 = vand.u32 %v930, 15
        %v933 = vsub.s32 0, %v932
        %v934 = vsel %vm928, %v933, %v932
        %vm935 = vcmp.lt.s32.totalorder %v867, 0
        %v936 = vsub.s32 0, %v867
        %v937 = vsel %vm935, %v936, %v867
        %v938 = vshrl.u32 %v937, 4
        %v939 = vand.u32 %v937, 15
        %v940 = vsub.s32 0, %v939
        %v941 = vsel %vm935, %v940, %v939
        %vm942 = vcmp.lt.s32.totalorder %v868, 0
        %v943 = vsub.s32 0, %v868
        %v944 = vsel %vm942, %v943, %v868
        %v945 = vshrl.u32 %v944, 4
        %v946 = vand.u32 %v944, 15
        %v947 = vsub.s32 0, %v946
        %v948 = vsel %vm942, %v947, %v946
        %vm949 = vcmp.lt.s32.totalorder %v869, 0
        %v950 = vsub.s32 0, %v869
        %v951 = vsel %vm949, %v950, %v869
        %v952 = vshrl.u32 %v951, 4
        %v953 = vand.u32 %v951, 15
        %v954 = vsub.s32 0, %v953
        %v955 = vsel %vm949, %v954, %v953
        %vm956 = vcmp.lt.s32.totalorder %v870, 0
        %v957 = vsub.s32 0, %v870
        %v958 = vsel %vm956, %v957, %v870
        %v959 = vshrl.u32 %v958, 4
        %v960 = vand.u32 %v958, 15
        %v961 = vsub.s32 0, %v960
        %v962 = vsel %vm956, %v961, %v960
        %vm963 = vcmp.lt.s32.totalorder %v871, 0
        %v964 = vsub.s32 0, %v871
        %v965 = vsel %vm963, %v964, %v871
        %v966 = vshrl.u32 %v965, 4
        %v967 = vand.u32 %v965, 15
        %v968 = vsub.s32 0, %v967
        %v969 = vsel %vm963, %v968, %v967
        %vm970 = vcmp.lt.s32.totalorder %v872, 0
        %v971 = vsub.s32 0, %v872
        %v972 = vsel %vm970, %v971, %v872
        %v973 = vshrl.u32 %v972, 4
        %v974 = vand.u32 %v972, 15
        %v975 = vsub.s32 0, %v974
        %v976 = vsel %vm970, %v975, %v974
        %vm977 = vcmp.lt.s32.totalorder %v873, 0
        %v978 = vsub.s32 0, %v873
        %v979 = vsel %vm977, %v978, %v873
        %v980 = vshrl.u32 %v979, 4
        %v981 = vand.u32 %v979, 15
        %v982 = vsub.s32 0, %v981
        %v983 = vsel %vm977, %v982, %v981
        %vm984 = vcmp.lt.s32.totalorder %v874, 0
        %v985 = vsub.s32 0, %v874
        %v986 = vsel %vm984, %v985, %v874
        %v987 = vshrl.u32 %v986, 4
        %v988 = vand.u32 %v986, 15
        %v989 = vsub.s32 0, %v988
        %v990 = vsel %vm984, %v989, %v988
        %vm991 = vcmp.lt.s32.totalorder %v875, 0
        %v992 = vsub.s32 0, %v875
        %v993 = vsel %vm991, %v992, %v875
        %v994 = vshrl.u32 %v993, 4
        %v995 = vand.u32 %v993, 15
        %v996 = vsub.s32 0, %v995
        %v997 = vsel %vm991, %v996, %v995
        %vm998 = vcmp.lt.s32.totalorder %v876, 0
        %v999 = vsub.s32 0, %v876
        %v1000 = vsel %vm998, %v999, %v876
        %v1001 = vshrl.u32 %v1000, 4
        %v1002 = vand.u32 %v1000, 15
        %v1003 = vsub.s32 0, %v1002
        %v1004 = vsel %vm998, %v1003, %v1002
        %vm1005 = vcmp.lt.s32.totalorder %v877, 0
        %v1006 = vsub.s32 0, %v877
        %v1007 = vsel %vm1005, %v1006, %v877
        %v1008 = vshrl.u32 %v1007, 4
        %v1009 = vand.u32 %v1007, 15
        %v1010 = vsub.s32 0, %v1009
        %v1011 = vsel %vm1005, %v1010, %v1009
        %vm1012 = vcmp.lt.s32.totalorder %v878, 0
        %v1013 = vsub.s32 0, %v878
        %v1014 = vsel %vm1012, %v1013, %v878
        %v1015 = vshrl.u32 %v1014, 4
        %v1016 = vand.u32 %v1014, 15
        %v1017 = vsub.s32 0, %v1016
        %v1018 = vsel %vm1012, %v1017, %v1016
        %vm1019 = vcmp.lt.s32.totalorder %v879, 0
        %v1020 = vsub.s32 0, %v879
        %v1021 = vsel %vm1019, %v1020, %v879
        %v1022 = vshrl.u32 %v1021, 4
        %v1023 = vand.u32 %v1021, 15
        %v1024 = vsub.s32 0, %v1023
        %v1025 = vsel %vm1019, %v1024, %v1023
        %vm1026 = vcmp.lt.s32.totalorder %v880, 0
        %v1027 = vsub.s32 0, %v880
        %v1028 = vsel %vm1026, %v1027, %v880
        %v1029 = vshrl.u32 %v1028, 4
        %v1030 = vand.u32 %v1028, 15
        %v1031 = vsub.s32 0, %v1030
        %v1032 = vsel %vm1026, %v1031, %v1030
        %vm1033 = vcmp.lt.s32.totalorder %v881, 0
        %v1034 = vsub.s32 0, %v881
        %v1035 = vsel %vm1033, %v1034, %v881
        %v1036 = vshrl.u32 %v1035, 4
        %v1037 = vand.u32 %v1035, 15
        %v1038 = vsub.s32 0, %v1037
        %v1039 = vsel %vm1033, %v1038, %v1037
        %vm1040 = vcmp.lt.s32.totalorder %v882, 0
        %v1041 = vsub.s32 0, %v882
        %v1042 = vsel %vm1040, %v1041, %v882
        %v1043 = vshrl.u32 %v1042, 4
        %v1044 = vand.u32 %v1042, 15
        %v1045 = vsub.s32 0, %v1044
        %v1046 = vsel %vm1040, %v1045, %v1044
        %vm1047 = vcmp.lt.s32.totalorder %v883, 0
        %v1048 = vsub.s32 0, %v883
        %v1049 = vsel %vm1047, %v1048, %v883
        %v1050 = vshrl.u32 %v1049, 4
        %v1051 = vand.u32 %v1049, 15
        %v1052 = vsub.s32 0, %v1051
        %v1053 = vsel %vm1047, %v1052, %v1051
        %vm1054 = vcmp.lt.s32.totalorder %v884, 0
        %v1055 = vsub.s32 0, %v884
        %v1056 = vsel %vm1054, %v1055, %v884
        %v1057 = vshrl.u32 %v1056, 4
        %v1058 = vand.u32 %v1056, 15
        %v1059 = vsub.s32 0, %v1058
        %v1060 = vsel %vm1054, %v1059, %v1058
        %vm1061 = vcmp.lt.s32.totalorder %v885, 0
        %v1062 = vsub.s32 0, %v885
        %v1063 = vsel %vm1061, %v1062, %v885
        %v1064 = vshrl.u32 %v1063, 4
        %v1065 = vand.u32 %v1063, 15
        %v1066 = vsub.s32 0, %v1065
        %v1067 = vsel %vm1061, %v1066, %v1065
        %vm1068 = vcmp.lt.s32.totalorder %v886, 0
        %v1069 = vsub.s32 0, %v886
        %v1070 = vsel %vm1068, %v1069, %v886
        %v1071 = vshrl.u32 %v1070, 4
        %v1072 = vand.u32 %v1070, 15
        %v1073 = vsub.s32 0, %v1072
        %v1074 = vsel %vm1068, %v1073, %v1072
        %vm1075 = vcmp.lt.s32.totalorder %v887, 0
        %v1076 = vsub.s32 0, %v887
        %v1077 = vsel %vm1075, %v1076, %v887
        %v1078 = vshrl.u32 %v1077, 4
        %v1079 = vand.u32 %v1077, 15
        %v1080 = vsub.s32 0, %v1079
        %v1081 = vsel %vm1075, %v1080, %v1079
        %vm1082 = vcmp.lt.s32.totalorder %v888, 0
        %v1083 = vsub.s32 0, %v888
        %v1084 = vsel %vm1082, %v1083, %v888
        %v1085 = vshrl.u32 %v1084, 4
        %v1086 = vand.u32 %v1084, 15
        %v1087 = vsub.s32 0, %v1086
        %v1088 = vsel %vm1082, %v1087, %v1086
        %vm1089 = vcmp.lt.s32.totalorder %v889, 0
        %v1090 = vsub.s32 0, %v889
        %v1091 = vsel %vm1089, %v1090, %v889
        %v1092 = vshrl.u32 %v1091, 4
        %v1093 = vand.u32 %v1091, 15
        %v1094 = vsub.s32 0, %v1093
        %v1095 = vsel %vm1089, %v1094, %v1093
        %vm1096 = vcmp.lt.s32.totalorder %v890, 0
        %v1097 = vsub.s32 0, %v890
        %v1098 = vsel %vm1096, %v1097, %v890
        %v1099 = vshrl.u32 %v1098, 4
        %v1100 = vand.u32 %v1098, 15
        %v1101 = vsub.s32 0, %v1100
        %v1102 = vsel %vm1096, %v1101, %v1100
        %vm1103 = vcmp.lt.s32.totalorder %v891, 0
        %v1104 = vsub.s32 0, %v891
        %v1105 = vsel %vm1103, %v1104, %v891
        %v1106 = vshrl.u32 %v1105, 4
        %v1107 = vand.u32 %v1105, 15
        %v1108 = vsub.s32 0, %v1107
        %v1109 = vsel %vm1103, %v1108, %v1107
        %vm1110 = vcmp.lt.s32.totalorder %v892, 0
        %v1111 = vsub.s32 0, %v892
        %v1112 = vsel %vm1110, %v1111, %v892
        %v1113 = vshrl.u32 %v1112, 4
        %v1114 = vand.u32 %v1112, 15
        %v1115 = vsub.s32 0, %v1114
        %v1116 = vsel %vm1110, %v1115, %v1114
        %vm1117 = vcmp.ne.s32.totalorder %v899, 0
        %vm1118 = vcmp.ne.s32.totalorder %v906, 0
        %vm1119 = vcmp.ne.s32.totalorder %v913, 0
        %vm1120 = vcmp.ne.s32.totalorder %v920, 0
        %vm1121 = vcmp.ne.s32.totalorder %v927, 0
        %vm1122 = vcmp.ne.s32.totalorder %v934, 0
        %vm1123 = vcmp.ne.s32.totalorder %v941, 0
        %vm1124 = vcmp.ne.s32.totalorder %v948, 0
        %vm1125 = vcmp.ne.s32.totalorder %v955, 0
        %vm1126 = vcmp.ne.s32.totalorder %v962, 0
        %vm1127 = vcmp.ne.s32.totalorder %v969, 0
        %vm1128 = vcmp.ne.s32.totalorder %v976, 0
        %vm1129 = vcmp.ne.s32.totalorder %v983, 0
        %vm1130 = vcmp.ne.s32.totalorder %v990, 0
        %vm1131 = vcmp.ne.s32.totalorder %v997, 0
        %vm1132 = vcmp.ne.s32.totalorder %v1004, 0
        %vm1133 = vcmp.ne.s32.totalorder %v1011, 0
        %vm1134 = vcmp.ne.s32.totalorder %v1018, 0
        %vm1135 = vcmp.ne.s32.totalorder %v1025, 0
        %vm1136 = vcmp.ne.s32.totalorder %v1032, 0
        %vm1137 = vcmp.ne.s32.totalorder %v1039, 0
        %vm1138 = vcmp.ne.s32.totalorder %v1046, 0
        %vm1139 = vcmp.ne.s32.totalorder %v1053, 0
        %vm1140 = vcmp.ne.s32.totalorder %v1060, 0
        %vm1141 = vcmp.ne.s32.totalorder %v1067, 0
        %vm1142 = vcmp.ne.s32.totalorder %v1074, 0
        %vm1143 = vcmp.ne.s32.totalorder %v1081, 0
        %vm1144 = vcmp.ne.s32.totalorder %v1088, 0
        %vm1145 = vcmp.ne.s32.totalorder %v1095, 0
        %vm1146 = vcmp.ne.s32.totalorder %v1102, 0
        %vm1147 = vcmp.ne.s32.totalorder %v1109, 0
        %vm1148 = vcmp.ne.s32.totalorder %v1116, 0
        %vm1149 = vcmp.lt.s32.totalorder %v899, 0
        %vm1150 = vcmp.lt.s32.totalorder %v906, 0
        %vm1151 = vcmp.lt.s32.totalorder %v913, 0
        %vm1152 = vcmp.lt.s32.totalorder %v920, 0
        %vm1153 = vcmp.lt.s32.totalorder %v927, 0
        %vm1154 = vcmp.lt.s32.totalorder %v934, 0
        %vm1155 = vcmp.lt.s32.totalorder %v941, 0
        %vm1156 = vcmp.lt.s32.totalorder %v948, 0
        %vm1157 = vcmp.lt.s32.totalorder %v955, 0
        %vm1158 = vcmp.lt.s32.totalorder %v962, 0
        %vm1159 = vcmp.lt.s32.totalorder %v969, 0
        %vm1160 = vcmp.lt.s32.totalorder %v976, 0
        %vm1161 = vcmp.lt.s32.totalorder %v983, 0
        %vm1162 = vcmp.lt.s32.totalorder %v990, 0
        %vm1163 = vcmp.lt.s32.totalorder %v997, 0
        %vm1164 = vcmp.lt.s32.totalorder %v1004, 0
        %vm1165 = vcmp.lt.s32.totalorder %v1011, 0
        %vm1166 = vcmp.lt.s32.totalorder %v1018, 0
        %vm1167 = vcmp.lt.s32.totalorder %v1025, 0
        %vm1168 = vcmp.lt.s32.totalorder %v1032, 0
        %vm1169 = vcmp.lt.s32.totalorder %v1039, 0
        %vm1170 = vcmp.lt.s32.totalorder %v1046, 0
        %vm1171 = vcmp.lt.s32.totalorder %v1053, 0
        %vm1172 = vcmp.lt.s32.totalorder %v1060, 0
        %vm1173 = vcmp.lt.s32.totalorder %v1067, 0
        %vm1174 = vcmp.lt.s32.totalorder %v1074, 0
        %vm1175 = vcmp.lt.s32.totalorder %v1081, 0
        %vm1176 = vcmp.lt.s32.totalorder %v1088, 0
        %vm1177 = vcmp.lt.s32.totalorder %v1095, 0
        %vm1178 = vcmp.lt.s32.totalorder %v1102, 0
        %vm1179 = vcmp.lt.s32.totalorder %v1109, 0
        %vm1180 = vcmp.lt.s32.totalorder %v1116, 0
        %vm1181 = vmand %vm1149, %vm1117
        %vm1182 = vmand %vm1150, %vm1118
        %vm1183 = vmand %vm1151, %vm1119
        %vm1184 = vmand %vm1152, %vm1120
        %vm1185 = vmand %vm1153, %vm1121
        %vm1186 = vmand %vm1154, %vm1122
        %vm1187 = vmand %vm1155, %vm1123
        %vm1188 = vmand %vm1156, %vm1124
        %vm1189 = vmand %vm1157, %vm1125
        %vm1190 = vmand %vm1158, %vm1126
        %vm1191 = vmand %vm1159, %vm1127
        %vm1192 = vmand %vm1160, %vm1128
        %vm1193 = vmand %vm1161, %vm1129
        %vm1194 = vmand %vm1162, %vm1130
        %vm1195 = vmand %vm1163, %vm1131
        %vm1196 = vmand %vm1164, %vm1132
        %vm1197 = vmand %vm1165, %vm1133
        %vm1198 = vmand %vm1166, %vm1134
        %vm1199 = vmand %vm1167, %vm1135
        %vm1200 = vmand %vm1168, %vm1136
        %vm1201 = vmand %vm1169, %vm1137
        %vm1202 = vmand %vm1170, %vm1138
        %vm1203 = vmand %vm1171, %vm1139
        %vm1204 = vmand %vm1172, %vm1140
        %vm1205 = vmand %vm1173, %vm1141
        %vm1206 = vmand %vm1174, %vm1142
        %vm1207 = vmand %vm1175, %vm1143
        %vm1208 = vmand %vm1176, %vm1144
        %vm1209 = vmand %vm1177, %vm1145
        %vm1210 = vmand %vm1178, %vm1146
        %vm1211 = vmand %vm1179, %vm1147
        %vm1212 = vmand %vm1180, %vm1148
        %v1213 = vadd.s32 %v899, 16
        %v1214 = vadd.s32 %v906, 16
        %v1215 = vadd.s32 %v913, 16
        %v1216 = vadd.s32 %v920, 16
        %v1217 = vadd.s32 %v927, 16
        %v1218 = vadd.s32 %v934, 16
        %v1219 = vadd.s32 %v941, 16
        %v1220 = vadd.s32 %v948, 16
        %v1221 = vadd.s32 %v955, 16
        %v1222 = vadd.s32 %v962, 16
        %v1223 = vadd.s32 %v969, 16
        %v1224 = vadd.s32 %v976, 16
        %v1225 = vadd.s32 %v983, 16
        %v1226 = vadd.s32 %v990, 16
        %v1227 = vadd.s32 %v997, 16
        %v1228 = vadd.s32 %v1004, 16
        %v1229 = vadd.s32 %v1011, 16
        %v1230 = vadd.s32 %v1018, 16
        %v1231 = vadd.s32 %v1025, 16
        %v1232 = vadd.s32 %v1032, 16
        %v1233 = vadd.s32 %v1039, 16
        %v1234 = vadd.s32 %v1046, 16
        %v1235 = vadd.s32 %v1053, 16
        %v1236 = vadd.s32 %v1060, 16
        %v1237 = vadd.s32 %v1067, 16
        %v1238 = vadd.s32 %v1074, 16
        %v1239 = vadd.s32 %v1081, 16
        %v1240 = vadd.s32 %v1088, 16
        %v1241 = vadd.s32 %v1095, 16
        %v1242 = vadd.s32 %v1102, 16
        %v1243 = vadd.s32 %v1109, 16
        %v1244 = vadd.s32 %v1116, 16
        %v1245 = vsel %vm1181, %v1213, %v899
        %v1246 = vsel %vm1182, %v1214, %v906
        %v1247 = vsel %vm1183, %v1215, %v913
        %v1248 = vsel %vm1184, %v1216, %v920
        %v1249 = vsel %vm1185, %v1217, %v927
        %v1250 = vsel %vm1186, %v1218, %v934
        %v1251 = vsel %vm1187, %v1219, %v941
        %v1252 = vsel %vm1188, %v1220, %v948
        %v1253 = vsel %vm1189, %v1221, %v955
        %v1254 = vsel %vm1190, %v1222, %v962
        %v1255 = vsel %vm1191, %v1223, %v969
        %v1256 = vsel %vm1192, %v1224, %v976
        %v1257 = vsel %vm1193, %v1225, %v983
        %v1258 = vsel %vm1194, %v1226, %v990
        %v1259 = vsel %vm1195, %v1227, %v997
        %v1260 = vsel %vm1196, %v1228, %v1004
        %v1261 = vsel %vm1197, %v1229, %v1011
        %v1262 = vsel %vm1198, %v1230, %v1018
        %v1263 = vsel %vm1199, %v1231, %v1025
        %v1264 = vsel %vm1200, %v1232, %v1032
        %v1265 = vsel %vm1201, %v1233, %v1039
        %v1266 = vsel %vm1202, %v1234, %v1046
        %v1267 = vsel %vm1203, %v1235, %v1053
        %v1268 = vsel %vm1204, %v1236, %v1060
        %v1269 = vsel %vm1205, %v1237, %v1067
        %v1270 = vsel %vm1206, %v1238, %v1074
        %v1271 = vsel %vm1207, %v1239, %v1081
        %v1272 = vsel %vm1208, %v1240, %v1088
        %v1273 = vsel %vm1209, %v1241, %v1095
        %v1274 = vsel %vm1210, %v1242, %v1102
        %v1275 = vsel %vm1211, %v1243, %v1109
        %v1276 = vsel %vm1212, %v1244, %v1116
        %vm1277 = vcmp.gt.s32.totalorder %v1245, 0
        %vm1278 = vcmp.gt.s32.totalorder %v1246, 0
        %vm1279 = vcmp.gt.s32.totalorder %v1247, 0
        %vm1280 = vcmp.gt.s32.totalorder %v1248, 0
        %vm1281 = vcmp.gt.s32.totalorder %v1249, 0
        %vm1282 = vcmp.gt.s32.totalorder %v1250, 0
        %vm1283 = vcmp.gt.s32.totalorder %v1251, 0
        %vm1284 = vcmp.gt.s32.totalorder %v1252, 0
        %vm1285 = vcmp.gt.s32.totalorder %v1253, 0
        %vm1286 = vcmp.gt.s32.totalorder %v1254, 0
        %vm1287 = vcmp.gt.s32.totalorder %v1255, 0
        %vm1288 = vcmp.gt.s32.totalorder %v1256, 0
        %vm1289 = vcmp.gt.s32.totalorder %v1257, 0
        %vm1290 = vcmp.gt.s32.totalorder %v1258, 0
        %vm1291 = vcmp.gt.s32.totalorder %v1259, 0
        %vm1292 = vcmp.gt.s32.totalorder %v1260, 0
        %vm1293 = vcmp.gt.s32.totalorder %v1261, 0
        %vm1294 = vcmp.gt.s32.totalorder %v1262, 0
        %vm1295 = vcmp.gt.s32.totalorder %v1263, 0
        %vm1296 = vcmp.gt.s32.totalorder %v1264, 0
        %vm1297 = vcmp.gt.s32.totalorder %v1265, 0
        %vm1298 = vcmp.gt.s32.totalorder %v1266, 0
        %vm1299 = vcmp.gt.s32.totalorder %v1267, 0
        %vm1300 = vcmp.gt.s32.totalorder %v1268, 0
        %vm1301 = vcmp.gt.s32.totalorder %v1269, 0
        %vm1302 = vcmp.gt.s32.totalorder %v1270, 0
        %vm1303 = vcmp.gt.s32.totalorder %v1271, 0
        %vm1304 = vcmp.gt.s32.totalorder %v1272, 0
        %vm1305 = vcmp.gt.s32.totalorder %v1273, 0
        %vm1306 = vcmp.gt.s32.totalorder %v1274, 0
        %vm1307 = vcmp.gt.s32.totalorder %v1275, 0
        %vm1308 = vcmp.gt.s32.totalorder %v1276, 0
        %vm1309 = vcmp.lt.s32.totalorder %v1245, 15
        %vm1310 = vcmp.lt.s32.totalorder %v1246, 15
        %vm1311 = vcmp.lt.s32.totalorder %v1247, 15
        %vm1312 = vcmp.lt.s32.totalorder %v1248, 15
        %vm1313 = vcmp.lt.s32.totalorder %v1249, 15
        %vm1314 = vcmp.lt.s32.totalorder %v1250, 15
        %vm1315 = vcmp.lt.s32.totalorder %v1251, 15
        %vm1316 = vcmp.lt.s32.totalorder %v1252, 15
        %vm1317 = vcmp.lt.s32.totalorder %v1253, 15
        %vm1318 = vcmp.lt.s32.totalorder %v1254, 15
        %vm1319 = vcmp.lt.s32.totalorder %v1255, 15
        %vm1320 = vcmp.lt.s32.totalorder %v1256, 15
        %vm1321 = vcmp.lt.s32.totalorder %v1257, 15
        %vm1322 = vcmp.lt.s32.totalorder %v1258, 15
        %vm1323 = vcmp.lt.s32.totalorder %v1259, 15
        %vm1324 = vcmp.lt.s32.totalorder %v1260, 15
        %vm1325 = vcmp.lt.s32.totalorder %v1261, 15
        %vm1326 = vcmp.lt.s32.totalorder %v1262, 15
        %vm1327 = vcmp.lt.s32.totalorder %v1263, 15
        %vm1328 = vcmp.lt.s32.totalorder %v1264, 15
        %vm1329 = vcmp.lt.s32.totalorder %v1265, 15
        %vm1330 = vcmp.lt.s32.totalorder %v1266, 15
        %vm1331 = vcmp.lt.s32.totalorder %v1267, 15
        %vm1332 = vcmp.lt.s32.totalorder %v1268, 15
        %vm1333 = vcmp.lt.s32.totalorder %v1269, 15
        %vm1334 = vcmp.lt.s32.totalorder %v1270, 15
        %vm1335 = vcmp.lt.s32.totalorder %v1271, 15
        %vm1336 = vcmp.lt.s32.totalorder %v1272, 15
        %vm1337 = vcmp.lt.s32.totalorder %v1273, 15
        %vm1338 = vcmp.lt.s32.totalorder %v1274, 15
        %vm1339 = vcmp.lt.s32.totalorder %v1275, 15
        %vm1340 = vcmp.lt.s32.totalorder %v1276, 15
        %v1341 = vld [vmem:[#allocation2 + $0x7] sm:$0xff]
        %v1342 = vld [vmem:[#allocation2 + $0xf] sm:$0xff]
        %v1343 = vld [vmem:[#allocation2 + $0x17] sm:$0xff]
        %v1344 = vld [vmem:[#allocation2 + $0x1f] sm:$0xff]
        %v1345 = vld [vmem:[#allocation2 + $0x27] sm:$0xff]
        %v1346 = vld [vmem:[#allocation2 + $0x2f] sm:$0xff]
        %v1347 = vld [vmem:[#allocation2 + $0x37] sm:$0xff]
        %v1348 = vld [vmem:[#allocation2 + $0x3f] sm:$0xff]
        %v1349 = vld [vmem:[#allocation2 + $0x47] sm:$0xff]
        %v1350 = vld [vmem:[#allocation2 + $0x4f] sm:$0xff]
        %v1351 = vld [vmem:[#allocation2 + $0x57] sm:$0xff]
        %v1352 = vld [vmem:[#allocation2 + $0x5f] sm:$0xff]
        %v1353 = vld [vmem:[#allocation2 + $0x67] sm:$0xff]
        %v1354 = vld [vmem:[#allocation2 + $0x6f] sm:$0xff]
        %v1355 = vld [vmem:[#allocation2 + $0x77] sm:$0xff]
        %v1356 = vld [vmem:[#allocation2 + $0x7f] sm:$0xff]
        %v1357 = vld [vmem:[#allocation2 + $0x87] sm:$0xff]
        %v1358 = vld [vmem:[#allocation2 + $0x8f] sm:$0xff]
        %v1359 = vld [vmem:[#allocation2 + $0x97] sm:$0xff]
        %v1360 = vld [vmem:[#allocation2 + $0x9f] sm:$0xff]
        %v1361 = vld [vmem:[#allocation2 + $0xa7] sm:$0xff]
        %v1362 = vld [vmem:[#allocation2 + $0xaf] sm:$0xff]
        %v1363 = vld [vmem:[#allocation2 + $0xb7] sm:$0xff]
        %v1364 = vld [vmem:[#allocation2 + $0xbf] sm:$0xff]
        %v1365 = vld [vmem:[#allocation2 + $0xc7] sm:$0xff]
        %v1366 = vld [vmem:[#allocation2 + $0xcf] sm:$0xff]
        %v1367 = vld [vmem:[#allocation2 + $0xd7] sm:$0xff]
        %v1368 = vld [vmem:[#allocation2 + $0xdf] sm:$0xff]
        %v1369 = vld [vmem:[#allocation2 + $0xe7] sm:$0xff]
        %v1370 = vld [vmem:[#allocation2 + $0xef] sm:$0xff]
        %v1371 = vld [vmem:[#allocation2 + $0xf7] sm:$0xff]
        %v1372 = vld [vmem:[#allocation2 + $0xff] sm:$0xff]
        %v1373 = vsel %vm1277, 1, 0
        %v1374 = vsel %vm1278, 1, 0
        %v1375 = vsel %vm1279, 1, 0
        %v1376 = vsel %vm1280, 1, 0
        %v1377 = vsel %vm1281, 1, 0
        %v1378 = vsel %vm1282, 1, 0
        %v1379 = vsel %vm1283, 1, 0
        %v1380 = vsel %vm1284, 1, 0
        %v1381 = vsel %vm1285, 1, 0
        %v1382 = vsel %vm1286, 1, 0
        %v1383 = vsel %vm1287, 1, 0
        %v1384 = vsel %vm1288, 1, 0
        %v1385 = vsel %vm1289, 1, 0
        %v1386 = vsel %vm1290, 1, 0
        %v1387 = vsel %vm1291, 1, 0
        %v1388 = vsel %vm1292, 1, 0
        %v1389 = vsel %vm1293, 1, 0
        %v1390 = vsel %vm1294, 1, 0
        %v1391 = vsel %vm1295, 1, 0
        %v1392 = vsel %vm1296, 1, 0
        %v1393 = vsel %vm1297, 1, 0
        %v1394 = vsel %vm1298, 1, 0
        %v1395 = vsel %vm1299, 1, 0
        %v1396 = vsel %vm1300, 1, 0
        %v1397 = vsel %vm1301, 1, 0
        %v1398 = vsel %vm1302, 1, 0
        %v1399 = vsel %vm1303, 1, 0
        %v1400 = vsel %vm1304, 1, 0
        %v1401 = vsel %vm1305, 1, 0
        %v1402 = vsel %vm1306, 1, 0
        %v1403 = vsel %vm1307, 1, 0
        %v1404 = vsel %vm1308, 1, 0
        %vm1405 = vcmp.eq.s32.totalorder %v1373, 1
        %vm1406 = vcmp.eq.s32.totalorder %v1374, 1
        %vm1407 = vcmp.eq.s32.totalorder %v1375, 1
        %vm1408 = vcmp.eq.s32.totalorder %v1376, 1
        %vm1409 = vcmp.eq.s32.totalorder %v1377, 1
        %vm1410 = vcmp.eq.s32.totalorder %v1378, 1
        %vm1411 = vcmp.eq.s32.totalorder %v1379, 1
        %vm1412 = vcmp.eq.s32.totalorder %v1380, 1
        %vm1413 = vcmp.eq.s32.totalorder %v1381, 1
        %vm1414 = vcmp.eq.s32.totalorder %v1382, 1
        %vm1415 = vcmp.eq.s32.totalorder %v1383, 1
        %vm1416 = vcmp.eq.s32.totalorder %v1384, 1
        %vm1417 = vcmp.eq.s32.totalorder %v1385, 1
        %vm1418 = vcmp.eq.s32.totalorder %v1386, 1
        %vm1419 = vcmp.eq.s32.totalorder %v1387, 1
        %vm1420 = vcmp.eq.s32.totalorder %v1388, 1
        %vm1421 = vcmp.eq.s32.totalorder %v1389, 1
        %vm1422 = vcmp.eq.s32.totalorder %v1390, 1
        %vm1423 = vcmp.eq.s32.totalorder %v1391, 1
        %vm1424 = vcmp.eq.s32.totalorder %v1392, 1
        %vm1425 = vcmp.eq.s32.totalorder %v1393, 1
        %vm1426 = vcmp.eq.s32.totalorder %v1394, 1
        %vm1427 = vcmp.eq.s32.totalorder %v1395, 1
        %vm1428 = vcmp.eq.s32.totalorder %v1396, 1
        %vm1429 = vcmp.eq.s32.totalorder %v1397, 1
        %vm1430 = vcmp.eq.s32.totalorder %v1398, 1
        %vm1431 = vcmp.eq.s32.totalorder %v1399, 1
        %vm1432 = vcmp.eq.s32.totalorder %v1400, 1
        %vm1433 = vcmp.eq.s32.totalorder %v1401, 1
        %vm1434 = vcmp.eq.s32.totalorder %v1402, 1
        %vm1435 = vcmp.eq.s32.totalorder %v1403, 1
        %vm1436 = vcmp.eq.s32.totalorder %v1404, 1
        %v1437 = vsel %vm1405, %v1341, 0.0
        %v1438 = vsel %vm1406, %v1342, 0.0
        %v1439 = vsel %vm1407, %v1343, 0.0
        %v1440 = vsel %vm1408, %v1344, 0.0
        %v1441 = vsel %vm1409, %v1345, 0.0
        %v1442 = vsel %vm1410, %v1346, 0.0
        %v1443 = vsel %vm1411, %v1347, 0.0
        %v1444 = vsel %vm1412, %v1348, 0.0
        %v1445 = vsel %vm1413, %v1349, 0.0
        %v1446 = vsel %vm1414, %v1350, 0.0
        %v1447 = vsel %vm1415, %v1351, 0.0
        %v1448 = vsel %vm1416, %v1352, 0.0
        %v1449 = vsel %vm1417, %v1353, 0.0
        %v1450 = vsel %vm1418, %v1354, 0.0
        %v1451 = vsel %vm1419, %v1355, 0.0
        %v1452 = vsel %vm1420, %v1356, 0.0
        %v1453 = vsel %vm1421, %v1357, 0.0
        %v1454 = vsel %vm1422, %v1358, 0.0
        %v1455 = vsel %vm1423, %v1359, 0.0
        %v1456 = vsel %vm1424, %v1360, 0.0
        %v1457 = vsel %vm1425, %v1361, 0.0
        %v1458 = vsel %vm1426, %v1362, 0.0
        %v1459 = vsel %vm1427, %v1363, 0.0
        %v1460 = vsel %vm1428, %v1364, 0.0
        %v1461 = vsel %vm1429, %v1365, 0.0
        %v1462 = vsel %vm1430, %v1366, 0.0
        %v1463 = vsel %vm1431, %v1367, 0.0
        %v1464 = vsel %vm1432, %v1368, 0.0
        %v1465 = vsel %vm1433, %v1369, 0.0
        %v1466 = vsel %vm1434, %v1370, 0.0
        %v1467 = vsel %vm1435, %v1371, 0.0
        %v1468 = vsel %vm1436, %v1372, 0.0
        %1469 = vst [vmem:[#allocation3] sm:$0xff] %v1437
        %1470 = vst [vmem:[#allocation3 + $0x48] sm:$0xff] %v1438
        %1471 = vst [vmem:[#allocation3 + $0x90] sm:$0xff] %v1439
        %1472 = vst [vmem:[#allocation3 + $0xd8] sm:$0xff] %v1440
        %1473 = vst [vmem:[#allocation3 + $0x120] sm:$0xff] %v1441
        %1474 = vst [vmem:[#allocation3 + $0x168] sm:$0xff] %v1442
        %1475 = vst [vmem:[#allocation3 + $0x1b0] sm:$0xff] %v1443
        %1476 = vst [vmem:[#allocation3 + $0x1f8] sm:$0xff] %v1444
        %1477 = vst [vmem:[#allocation3 + $0x240] sm:$0xff] %v1445
        %1478 = vst [vmem:[#allocation3 + $0x288] sm:$0xff] %v1446
        %1479 = vst [vmem:[#allocation3 + $0x2d0] sm:$0xff] %v1447
        %1480 = vst [vmem:[#allocation3 + $0x318] sm:$0xff] %v1448
        %1481 = vst [vmem:[#allocation3 + $0x360] sm:$0xff] %v1449
        %1482 = vst [vmem:[#allocation3 + $0x3a8] sm:$0xff] %v1450
        %1483 = vst [vmem:[#allocation3 + $0x3f0] sm:$0xff] %v1451
        %1484 = vst [vmem:[#allocation3 + $0x438] sm:$0xff] %v1452
        %1485 = vst [vmem:[#allocation3 + $0x480] sm:$0xff] %v1453
        %1486 = vst [vmem:[#allocation3 + $0x4c8] sm:$0xff] %v1454
        %1487 = vst [vmem:[#allocation3 + $0x510] sm:$0xff] %v1455
        %1488 = vst [vmem:[#allocation3 + $0x558] sm:$0xff] %v1456
        %1489 = vst [vmem:[#allocation3 + $0x5a0] sm:$0xff] %v1457
        %1490 = vst [vmem:[#allocation3 + $0x5e8] sm:$0xff] %v1458
        %1491 = vst [vmem:[#allocation3 + $0x630] sm:$0xff] %v1459
        %1492 = vst [vmem:[#allocation3 + $0x678] sm:$0xff] %v1460
        %1493 = vst [vmem:[#allocation3 + $0x6c0] sm:$0xff] %v1461
        %1494 = vst [vmem:[#allocation3 + $0x708] sm:$0xff] %v1462
        %1495 = vst [vmem:[#allocation3 + $0x750] sm:$0xff] %v1463
        %1496 = vst [vmem:[#allocation3 + $0x798] sm:$0xff] %v1464
        %1497 = vst [vmem:[#allocation3 + $0x7e0] sm:$0xff] %v1465
        %1498 = vst [vmem:[#allocation3 + $0x828] sm:$0xff] %v1466
        %1499 = vst [vmem:[#allocation3 + $0x870] sm:$0xff] %v1467
        %1500 = vst [vmem:[#allocation3 + $0x8b8] sm:$0xff] %v1468
        %v1501 = vld [vmem:[#allocation2 + $0x8] sm:$0xff]
        %v1502 = vld [vmem:[#allocation2 + $0x10] sm:$0xff]
        %v1503 = vld [vmem:[#allocation2 + $0x18] sm:$0xff]
        %v1504 = vld [vmem:[#allocation2 + $0x20] sm:$0xff]
        %v1505 = vld [vmem:[#allocation2 + $0x28] sm:$0xff]
        %v1506 = vld [vmem:[#allocation2 + $0x30] sm:$0xff]
        %v1507 = vld [vmem:[#allocation2 + $0x38] sm:$0xff]
        %v1508 = vld [vmem:[#allocation2 + $0x40] sm:$0xff]
        %v1509 = vld [vmem:[#allocation2 + $0x48] sm:$0xff]
        %v1510 = vld [vmem:[#allocation2 + $0x50] sm:$0xff]
        %v1511 = vld [vmem:[#allocation2 + $0x58] sm:$0xff]
        %v1512 = vld [vmem:[#allocation2 + $0x60] sm:$0xff]
        %v1513 = vld [vmem:[#allocation2 + $0x68] sm:$0xff]
        %v1514 = vld [vmem:[#allocation2 + $0x70] sm:$0xff]
        %v1515 = vld [vmem:[#allocation2 + $0x78] sm:$0xff]
        %v1516 = vld [vmem:[#allocation2 + $0x80] sm:$0xff]
        %v1517 = vld [vmem:[#allocation2 + $0x88] sm:$0xff]
        %v1518 = vld [vmem:[#allocation2 + $0x90] sm:$0xff]
        %v1519 = vld [vmem:[#allocation2 + $0x98] sm:$0xff]
        %v1520 = vld [vmem:[#allocation2 + $0xa0] sm:$0xff]
        %v1521 = vld [vmem:[#allocation2 + $0xa8] sm:$0xff]
        %v1522 = vld [vmem:[#allocation2 + $0xb0] sm:$0xff]
        %v1523 = vld [vmem:[#allocation2 + $0xb8] sm:$0xff]
        %v1524 = vld [vmem:[#allocation2 + $0xc0] sm:$0xff]
        %v1525 = vld [vmem:[#allocation2 + $0xc8] sm:$0xff]
        %v1526 = vld [vmem:[#allocation2 + $0xd0] sm:$0xff]
        %v1527 = vld [vmem:[#allocation2 + $0xd8] sm:$0xff]
        %v1528 = vld [vmem:[#allocation2 + $0xe0] sm:$0xff]
        %v1529 = vld [vmem:[#allocation2 + $0xe8] sm:$0xff]
        %v1530 = vld [vmem:[#allocation2 + $0xf0] sm:$0xff]
        %v1531 = vld [vmem:[#allocation2 + $0xf8] sm:$0xff]
        %v1532 = vld [vmem:[#allocation2 + $0x100] sm:$0xff]
        %1533 = vst [vmem:[#allocation3 + $0x8] sm:$0xff] %v1501
        %1534 = vst [vmem:[#allocation3 + $0x50] sm:$0xff] %v1502
        %1535 = vst [vmem:[#allocation3 + $0x98] sm:$0xff] %v1503
        %1536 = vst [vmem:[#allocation3 + $0xe0] sm:$0xff] %v1504
        %1537 = vst [vmem:[#allocation3 + $0x128] sm:$0xff] %v1505
        %1538 = vst [vmem:[#allocation3 + $0x170] sm:$0xff] %v1506
        %1539 = vst [vmem:[#allocation3 + $0x1b8] sm:$0xff] %v1507
        %1540 = vst [vmem:[#allocation3 + $0x200] sm:$0xff] %v1508
        %1541 = vst [vmem:[#allocation3 + $0x248] sm:$0xff] %v1509
        %1542 = vst [vmem:[#allocation3 + $0x290] sm:$0xff] %v1510
        %1543 = vst [vmem:[#allocation3 + $0x2d8] sm:$0xff] %v1511
        %1544 = vst [vmem:[#allocation3 + $0x320] sm:$0xff] %v1512
        %1545 = vst [vmem:[#allocation3 + $0x368] sm:$0xff] %v1513
        %1546 = vst [vmem:[#allocation3 + $0x3b0] sm:$0xff] %v1514
        %1547 = vst [vmem:[#allocation3 + $0x3f8] sm:$0xff] %v1515
        %1548 = vst [vmem:[#allocation3 + $0x440] sm:$0xff] %v1516
        %1549 = vst [vmem:[#allocation3 + $0x488] sm:$0xff] %v1517
        %1550 = vst [vmem:[#allocation3 + $0x4d0] sm:$0xff] %v1518
        %1551 = vst [vmem:[#allocation3 + $0x518] sm:$0xff] %v1519
        %1552 = vst [vmem:[#allocation3 + $0x560] sm:$0xff] %v1520
        %1553 = vst [vmem:[#allocation3 + $0x5a8] sm:$0xff] %v1521
        %1554 = vst [vmem:[#allocation3 + $0x5f0] sm:$0xff] %v1522
        %1555 = vst [vmem:[#allocation3 + $0x638] sm:$0xff] %v1523
        %1556 = vst [vmem:[#allocation3 + $0x680] sm:$0xff] %v1524
        %1557 = vst [vmem:[#allocation3 + $0x6c8] sm:$0xff] %v1525
        %1558 = vst [vmem:[#allocation3 + $0x710] sm:$0xff] %v1526
        %1559 = vst [vmem:[#allocation3 + $0x758] sm:$0xff] %v1527
        %1560 = vst [vmem:[#allocation3 + $0x7a0] sm:$0xff] %v1528
        %1561 = vst [vmem:[#allocation3 + $0x7e8] sm:$0xff] %v1529
        %1562 = vst [vmem:[#allocation3 + $0x830] sm:$0xff] %v1530
        %1563 = vst [vmem:[#allocation3 + $0x878] sm:$0xff] %v1531
        %1564 = vst [vmem:[#allocation3 + $0x8c0] sm:$0xff] %v1532
        %v1565 = vld [vmem:[#allocation2 + $0x9] sm:$0xff]
        %v1566 = vld [vmem:[#allocation2 + $0x11] sm:$0xff]
        %v1567 = vld [vmem:[#allocation2 + $0x19] sm:$0xff]
        %v1568 = vld [vmem:[#allocation2 + $0x21] sm:$0xff]
        %v1569 = vld [vmem:[#allocation2 + $0x29] sm:$0xff]
        %v1570 = vld [vmem:[#allocation2 + $0x31] sm:$0xff]
        %v1571 = vld [vmem:[#allocation2 + $0x39] sm:$0xff]
        %v1572 = vld [vmem:[#allocation2 + $0x41] sm:$0xff]
        %v1573 = vld [vmem:[#allocation2 + $0x49] sm:$0xff]
        %v1574 = vld [vmem:[#allocation2 + $0x51] sm:$0xff]
        %v1575 = vld [vmem:[#allocation2 + $0x59] sm:$0xff]
        %v1576 = vld [vmem:[#allocation2 + $0x61] sm:$0xff]
        %v1577 = vld [vmem:[#allocation2 + $0x69] sm:$0xff]
        %v1578 = vld [vmem:[#allocation2 + $0x71] sm:$0xff]
        %v1579 = vld [vmem:[#allocation2 + $0x79] sm:$0xff]
        %v1580 = vld [vmem:[#allocation2 + $0x81] sm:$0xff]
        %v1581 = vld [vmem:[#allocation2 + $0x89] sm:$0xff]
        %v1582 = vld [vmem:[#allocation2 + $0x91] sm:$0xff]
        %v1583 = vld [vmem:[#allocation2 + $0x99] sm:$0xff]
        %v1584 = vld [vmem:[#allocation2 + $0xa1] sm:$0xff]
        %v1585 = vld [vmem:[#allocation2 + $0xa9] sm:$0xff]
        %v1586 = vld [vmem:[#allocation2 + $0xb1] sm:$0xff]
        %v1587 = vld [vmem:[#allocation2 + $0xb9] sm:$0xff]
        %v1588 = vld [vmem:[#allocation2 + $0xc1] sm:$0xff]
        %v1589 = vld [vmem:[#allocation2 + $0xc9] sm:$0xff]
        %v1590 = vld [vmem:[#allocation2 + $0xd1] sm:$0xff]
        %v1591 = vld [vmem:[#allocation2 + $0xd9] sm:$0xff]
        %v1592 = vld [vmem:[#allocation2 + $0xe1] sm:$0xff]
        %v1593 = vld [vmem:[#allocation2 + $0xe9] sm:$0xff]
        %v1594 = vld [vmem:[#allocation2 + $0xf1] sm:$0xff]
        %v1595 = vld [vmem:[#allocation2 + $0xf9] sm:$0xff]
        %v1596 = vld [vmem:[#allocation2 + $0x101] sm:$0xff]
        %v1597 = vsel %vm1309, 1, 0
        %v1598 = vsel %vm1310, 1, 0
        %v1599 = vsel %vm1311, 1, 0
        %v1600 = vsel %vm1312, 1, 0
        %v1601 = vsel %vm1313, 1, 0
        %v1602 = vsel %vm1314, 1, 0
        %v1603 = vsel %vm1315, 1, 0
        %v1604 = vsel %vm1316, 1, 0
        %v1605 = vsel %vm1317, 1, 0
        %v1606 = vsel %vm1318, 1, 0
        %v1607 = vsel %vm1319, 1, 0
        %v1608 = vsel %vm1320, 1, 0
        %v1609 = vsel %vm1321, 1, 0
        %v1610 = vsel %vm1322, 1, 0
        %v1611 = vsel %vm1323, 1, 0
        %v1612 = vsel %vm1324, 1, 0
        %v1613 = vsel %vm1325, 1, 0
        %v1614 = vsel %vm1326, 1, 0
        %v1615 = vsel %vm1327, 1, 0
        %v1616 = vsel %vm1328, 1, 0
        %v1617 = vsel %vm1329, 1, 0
        %v1618 = vsel %vm1330, 1, 0
        %v1619 = vsel %vm1331, 1, 0
        %v1620 = vsel %vm1332, 1, 0
        %v1621 = vsel %vm1333, 1, 0
        %v1622 = vsel %vm1334, 1, 0
        %v1623 = vsel %vm1335, 1, 0
        %v1624 = vsel %vm1336, 1, 0
        %v1625 = vsel %vm1337, 1, 0
        %v1626 = vsel %vm1338, 1, 0
        %v1627 = vsel %vm1339, 1, 0
        %v1628 = vsel %vm1340, 1, 0
        %vm1629 = vcmp.eq.s32.totalorder %v1597, 1
        %vm1630 = vcmp.eq.s32.totalorder %v1598, 1
        %vm1631 = vcmp.eq.s32.totalorder %v1599, 1
        %vm1632 = vcmp.eq.s32.totalorder %v1600, 1
        %vm1633 = vcmp.eq.s32.totalorder %v1601, 1
        %vm1634 = vcmp.eq.s32.totalorder %v1602, 1
        %vm1635 = vcmp.eq.s32.totalorder %v1603, 1
        %vm1636 = vcmp.eq.s32.totalorder %v1604, 1
        %vm1637 = vcmp.eq.s32.totalorder %v1605, 1
        %vm1638 = vcmp.eq.s32.totalorder %v1606, 1
        %vm1639 = vcmp.eq.s32.totalorder %v1607, 1
        %vm1640 = vcmp.eq.s32.totalorder %v1608, 1
        %vm1641 = vcmp.eq.s32.totalorder %v1609, 1
        %vm1642 = vcmp.eq.s32.totalorder %v1610, 1
        %vm1643 = vcmp.eq.s32.totalorder %v1611, 1
        %vm1644 = vcmp.eq.s32.totalorder %v1612, 1
        %vm1645 = vcmp.eq.s32.totalorder %v1613, 1
        %vm1646 = vcmp.eq.s32.totalorder %v1614, 1
        %vm1647 = vcmp.eq.s32.totalorder %v1615, 1
        %vm1648 = vcmp.eq.s32.totalorder %v1616, 1
        %vm1649 = vcmp.eq.s32.totalorder %v1617, 1
        %vm1650 = vcmp.eq.s32.totalorder %v1618, 1
        %vm1651 = vcmp.eq.s32.totalorder %v1619, 1
        %vm1652 = vcmp.eq.s32.totalorder %v1620, 1
        %vm1653 = vcmp.eq.s32.totalorder %v1621, 1
        %vm1654 = vcmp.eq.s32.totalorder %v1622, 1
        %vm1655 = vcmp.eq.s32.totalorder %v1623, 1
        %vm1656 = vcmp.eq.s32.totalorder %v1624, 1
        %vm1657 = vcmp.eq.s32.totalorder %v1625, 1
        %vm1658 = vcmp.eq.s32.totalorder %v1626, 1
        %vm1659 = vcmp.eq.s32.totalorder %v1627, 1
        %vm1660 = vcmp.eq.s32.totalorder %v1628, 1
        %v1661 = vsel %vm1629, %v1565, 0.0
        %v1662 = vsel %vm1630, %v1566, 0.0
        %v1663 = vsel %vm1631, %v1567, 0.0
        %v1664 = vsel %vm1632, %v1568, 0.0
        %v1665 = vsel %vm1633, %v1569, 0.0
        %v1666 = vsel %vm1634, %v1570, 0.0
        %v1667 = vsel %vm1635, %v1571, 0.0
        %v1668 = vsel %vm1636, %v1572, 0.0
        %v1669 = vsel %vm1637, %v1573, 0.0
        %v1670 = vsel %vm1638, %v1574, 0.0
        %v1671 = vsel %vm1639, %v1575, 0.0
        %v1672 = vsel %vm1640, %v1576, 0.0
        %v1673 = vsel %vm1641, %v1577, 0.0
        %v1674 = vsel %vm1642, %v1578, 0.0
        %v1675 = vsel %vm1643, %v1579, 0.0
        %v1676 = vsel %vm1644, %v1580, 0.0
        %v1677 = vsel %vm1645, %v1581, 0.0
        %v1678 = vsel %vm1646, %v1582, 0.0
        %v1679 = vsel %vm1647, %v1583, 0.0
        %v1680 = vsel %vm1648, %v1584, 0.0
        %v1681 = vsel %vm1649, %v1585, 0.0
        %v1682 = vsel %vm1650, %v1586, 0.0
        %v1683 = vsel %vm1651, %v1587, 0.0
        %v1684 = vsel %vm1652, %v1588, 0.0
        %v1685 = vsel %vm1653, %v1589, 0.0
        %v1686 = vsel %vm1654, %v1590, 0.0
        %v1687 = vsel %vm1655, %v1591, 0.0
        %v1688 = vsel %vm1656, %v1592, 0.0
        %v1689 = vsel %vm1657, %v1593, 0.0
        %v1690 = vsel %vm1658, %v1594, 0.0
        %v1691 = vsel %vm1659, %v1595, 0.0
        %v1692 = vsel %vm1660, %v1596, 0.0
        %1693 = vst [vmem:[#allocation3 + $0x10] sm:$0xff] %v1661
        %1694 = vst [vmem:[#allocation3 + $0x58] sm:$0xff] %v1662
        %1695 = vst [vmem:[#allocation3 + $0xa0] sm:$0xff] %v1663
        %1696 = vst [vmem:[#allocation3 + $0xe8] sm:$0xff] %v1664
        %1697 = vst [vmem:[#allocation3 + $0x130] sm:$0xff] %v1665
        %1698 = vst [vmem:[#allocation3 + $0x178] sm:$0xff] %v1666
        %1699 = vst [vmem:[#allocation3 + $0x1c0] sm:$0xff] %v1667
        %1700 = vst [vmem:[#allocation3 + $0x208] sm:$0xff] %v1668
        %1701 = vst [vmem:[#allocation3 + $0x250] sm:$0xff] %v1669
        %1702 = vst [vmem:[#allocation3 + $0x298] sm:$0xff] %v1670
        %1703 = vst [vmem:[#allocation3 + $0x2e0] sm:$0xff] %v1671
        %1704 = vst [vmem:[#allocation3 + $0x328] sm:$0xff] %v1672
        %1705 = vst [vmem:[#allocation3 + $0x370] sm:$0xff] %v1673
        %1706 = vst [vmem:[#allocation3 + $0x3b8] sm:$0xff] %v1674
        %1707 = vst [vmem:[#allocation3 + $0x400] sm:$0xff] %v1675
        %1708 = vst [vmem:[#allocation3 + $0x448] sm:$0xff] %v1676
        %1709 = vst [vmem:[#allocation3 + $0x490] sm:$0xff] %v1677
        %1710 = vst [vmem:[#allocation3 + $0x4d8] sm:$0xff] %v1678
        %1711 = vst [vmem:[#allocation3 + $0x520] sm:$0xff] %v1679
        %1712 = vst [vmem:[#allocation3 + $0x568] sm:$0xff] %v1680
        %1713 = vst [vmem:[#allocation3 + $0x5b0] sm:$0xff] %v1681
        %1714 = vst [vmem:[#allocation3 + $0x5f8] sm:$0xff] %v1682
        %1715 = vst [vmem:[#allocation3 + $0x640] sm:$0xff] %v1683
        %1716 = vst [vmem:[#allocation3 + $0x688] sm:$0xff] %v1684
        %1717 = vst [vmem:[#allocation3 + $0x6d0] sm:$0xff] %v1685
        %1718 = vst [vmem:[#allocation3 + $0x718] sm:$0xff] %v1686
        %1719 = vst [vmem:[#allocation3 + $0x760] sm:$0xff] %v1687
        %1720 = vst [vmem:[#allocation3 + $0x7a8] sm:$0xff] %v1688
        %1721 = vst [vmem:[#allocation3 + $0x7f0] sm:$0xff] %v1689
        %1722 = vst [vmem:[#allocation3 + $0x838] sm:$0xff] %v1690
        %1723 = vst [vmem:[#allocation3 + $0x880] sm:$0xff] %v1691
        %1724 = vst [vmem:[#allocation3 + $0x8c8] sm:$0xff] %v1692
        %v1725 = vld [vmem:[#allocation2 + $0x17] sm:$0xff]
        %v1726 = vld [vmem:[#allocation2 + $0x1f] sm:$0xff]
        %v1727 = vld [vmem:[#allocation2 + $0x27] sm:$0xff]
        %v1728 = vld [vmem:[#allocation2 + $0x2f] sm:$0xff]
        %v1729 = vld [vmem:[#allocation2 + $0x37] sm:$0xff]
        %v1730 = vld [vmem:[#allocation2 + $0x3f] sm:$0xff]
        %v1731 = vld [vmem:[#allocation2 + $0x47] sm:$0xff]
        %v1732 = vld [vmem:[#allocation2 + $0x4f] sm:$0xff]
        %v1733 = vld [vmem:[#allocation2 + $0x57] sm:$0xff]
        %v1734 = vld [vmem:[#allocation2 + $0x5f] sm:$0xff]
        %v1735 = vld [vmem:[#allocation2 + $0x67] sm:$0xff]
        %v1736 = vld [vmem:[#allocation2 + $0x6f] sm:$0xff]
        %v1737 = vld [vmem:[#allocation2 + $0x77] sm:$0xff]
        %v1738 = vld [vmem:[#allocation2 + $0x7f] sm:$0xff]
        %v1739 = vld [vmem:[#allocation2 + $0x87] sm:$0xff]
        %v1740 = vld [vmem:[#allocation2 + $0x8f] sm:$0xff]
        %v1741 = vld [vmem:[#allocation2 + $0x97] sm:$0xff]
        %v1742 = vld [vmem:[#allocation2 + $0x9f] sm:$0xff]
        %v1743 = vld [vmem:[#allocation2 + $0xa7] sm:$0xff]
        %v1744 = vld [vmem:[#allocation2 + $0xaf] sm:$0xff]
        %v1745 = vld [vmem:[#allocation2 + $0xb7] sm:$0xff]
        %v1746 = vld [vmem:[#allocation2 + $0xbf] sm:$0xff]
        %v1747 = vld [vmem:[#allocation2 + $0xc7] sm:$0xff]
        %v1748 = vld [vmem:[#allocation2 + $0xcf] sm:$0xff]
        %v1749 = vld [vmem:[#allocation2 + $0xd7] sm:$0xff]
        %v1750 = vld [vmem:[#allocation2 + $0xdf] sm:$0xff]
        %v1751 = vld [vmem:[#allocation2 + $0xe7] sm:$0xff]
        %v1752 = vld [vmem:[#allocation2 + $0xef] sm:$0xff]
        %v1753 = vld [vmem:[#allocation2 + $0xf7] sm:$0xff]
        %v1754 = vld [vmem:[#allocation2 + $0xff] sm:$0xff]
        %v1755 = vld [vmem:[#allocation2 + $0x107] sm:$0xff]
        %v1756 = vld [vmem:[#allocation2 + $0x10f] sm:$0xff]
        %v1757 = vsel %vm1405, %v1725, 0.0
        %v1758 = vsel %vm1406, %v1726, 0.0
        %v1759 = vsel %vm1407, %v1727, 0.0
        %v1760 = vsel %vm1408, %v1728, 0.0
        %v1761 = vsel %vm1409, %v1729, 0.0
        %v1762 = vsel %vm1410, %v1730, 0.0
        %v1763 = vsel %vm1411, %v1731, 0.0
        %v1764 = vsel %vm1412, %v1732, 0.0
        %v1765 = vsel %vm1413, %v1733, 0.0
        %v1766 = vsel %vm1414, %v1734, 0.0
        %v1767 = vsel %vm1415, %v1735, 0.0
        %v1768 = vsel %vm1416, %v1736, 0.0
        %v1769 = vsel %vm1417, %v1737, 0.0
        %v1770 = vsel %vm1418, %v1738, 0.0
        %v1771 = vsel %vm1419, %v1739, 0.0
        %v1772 = vsel %vm1420, %v1740, 0.0
        %v1773 = vsel %vm1421, %v1741, 0.0
        %v1774 = vsel %vm1422, %v1742, 0.0
        %v1775 = vsel %vm1423, %v1743, 0.0
        %v1776 = vsel %vm1424, %v1744, 0.0
        %v1777 = vsel %vm1425, %v1745, 0.0
        %v1778 = vsel %vm1426, %v1746, 0.0
        %v1779 = vsel %vm1427, %v1747, 0.0
        %v1780 = vsel %vm1428, %v1748, 0.0
        %v1781 = vsel %vm1429, %v1749, 0.0
        %v1782 = vsel %vm1430, %v1750, 0.0
        %v1783 = vsel %vm1431, %v1751, 0.0
        %v1784 = vsel %vm1432, %v1752, 0.0
        %v1785 = vsel %vm1433, %v1753, 0.0
        %v1786 = vsel %vm1434, %v1754, 0.0
        %v1787 = vsel %vm1435, %v1755, 0.0
        %v1788 = vsel %vm1436, %v1756, 0.0
        %1789 = vst [vmem:[#allocation3 + $0x18] sm:$0xff] %v1757
        %1790 = vst [vmem:[#allocation3 + $0x60] sm:$0xff] %v1758
        %1791 = vst [vmem:[#allocation3 + $0xa8] sm:$0xff] %v1759
        %1792 = vst [vmem:[#allocation3 + $0xf0] sm:$0xff] %v1760
        %1793 = vst [vmem:[#allocation3 + $0x138] sm:$0xff] %v1761
        %1794 = vst [vmem:[#allocation3 + $0x180] sm:$0xff] %v1762
        %1795 = vst [vmem:[#allocation3 + $0x1c8] sm:$0xff] %v1763
        %1796 = vst [vmem:[#allocation3 + $0x210] sm:$0xff] %v1764
        %1797 = vst [vmem:[#allocation3 + $0x258] sm:$0xff] %v1765
        %1798 = vst [vmem:[#allocation3 + $0x2a0] sm:$0xff] %v1766
        %1799 = vst [vmem:[#allocation3 + $0x2e8] sm:$0xff] %v1767
        %1800 = vst [vmem:[#allocation3 + $0x330] sm:$0xff] %v1768
        %1801 = vst [vmem:[#allocation3 + $0x378] sm:$0xff] %v1769
        %1802 = vst [vmem:[#allocation3 + $0x3c0] sm:$0xff] %v1770
        %1803 = vst [vmem:[#allocation3 + $0x408] sm:$0xff] %v1771
        %1804 = vst [vmem:[#allocation3 + $0x450] sm:$0xff] %v1772
        %1805 = vst [vmem:[#allocation3 + $0x498] sm:$0xff] %v1773
        %1806 = vst [vmem:[#allocation3 + $0x4e0] sm:$0xff] %v1774
        %1807 = vst [vmem:[#allocation3 + $0x528] sm:$0xff] %v1775
        %1808 = vst [vmem:[#allocation3 + $0x570] sm:$0xff] %v1776
        %1809 = vst [vmem:[#allocation3 + $0x5b8] sm:$0xff] %v1777
        %1810 = vst [vmem:[#allocation3 + $0x600] sm:$0xff] %v1778
        %1811 = vst [vmem:[#allocation3 + $0x648] sm:$0xff] %v1779
        %1812 = vst [vmem:[#allocation3 + $0x690] sm:$0xff] %v1780
        %1813 = vst [vmem:[#allocation3 + $0x6d8] sm:$0xff] %v1781
        %1814 = vst [vmem:[#allocation3 + $0x720] sm:$0xff] %v1782
        %1815 = vst [vmem:[#allocation3 + $0x768] sm:$0xff] %v1783
        %1816 = vst [vmem:[#allocation3 + $0x7b0] sm:$0xff] %v1784
        %1817 = vst [vmem:[#allocation3 + $0x7f8] sm:$0xff] %v1785
        %1818 = vst [vmem:[#allocation3 + $0x840] sm:$0xff] %v1786
        %1819 = vst [vmem:[#allocation3 + $0x888] sm:$0xff] %v1787
        %1820 = vst [vmem:[#allocation3 + $0x8d0] sm:$0xff] %v1788
        %v1821 = vld [vmem:[#allocation2 + $0x18] sm:$0xff]
        %v1822 = vld [vmem:[#allocation2 + $0x20] sm:$0xff]
        %v1823 = vld [vmem:[#allocation2 + $0x28] sm:$0xff]
        %v1824 = vld [vmem:[#allocation2 + $0x30] sm:$0xff]
        %v1825 = vld [vmem:[#allocation2 + $0x38] sm:$0xff]
        %v1826 = vld [vmem:[#allocation2 + $0x40] sm:$0xff]
        %v1827 = vld [vmem:[#allocation2 + $0x48] sm:$0xff]
        %v1828 = vld [vmem:[#allocation2 + $0x50] sm:$0xff]
        %v1829 = vld [vmem:[#allocation2 + $0x58] sm:$0xff]
        %v1830 = vld [vmem:[#allocation2 + $0x60] sm:$0xff]
        %v1831 = vld [vmem:[#allocation2 + $0x68] sm:$0xff]
        %v1832 = vld [vmem:[#allocation2 + $0x70] sm:$0xff]
        %v1833 = vld [vmem:[#allocation2 + $0x78] sm:$0xff]
        %v1834 = vld [vmem:[#allocation2 + $0x80] sm:$0xff]
        %v1835 = vld [vmem:[#allocation2 + $0x88] sm:$0xff]
        %v1836 = vld [vmem:[#allocation2 + $0x90] sm:$0xff]
        %v1837 = vld [vmem:[#allocation2 + $0x98] sm:$0xff]
        %v1838 = vld [vmem:[#allocation2 + $0xa0] sm:$0xff]
        %v1839 = vld [vmem:[#allocation2 + $0xa8] sm:$0xff]
        %v1840 = vld [vmem:[#allocation2 + $0xb0] sm:$0xff]
        %v1841 = vld [vmem:[#allocation2 + $0xb8] sm:$0xff]
        %v1842 = vld [vmem:[#allocation2 + $0xc0] sm:$0xff]
        %v1843 = vld [vmem:[#allocation2 + $0xc8] sm:$0xff]
        %v1844 = vld [vmem:[#allocation2 + $0xd0] sm:$0xff]
        %v1845 = vld [vmem:[#allocation2 + $0xd8] sm:$0xff]
        %v1846 = vld [vmem:[#allocation2 + $0xe0] sm:$0xff]
        %v1847 = vld [vmem:[#allocation2 + $0xe8] sm:$0xff]
        %v1848 = vld [vmem:[#allocation2 + $0xf0] sm:$0xff]
        %v1849 = vld [vmem:[#allocation2 + $0xf8] sm:$0xff]
        %v1850 = vld [vmem:[#allocation2 + $0x100] sm:$0xff]
        %v1851 = vld [vmem:[#allocation2 + $0x108] sm:$0xff]
        %v1852 = vld [vmem:[#allocation2 + $0x110] sm:$0xff]
        %1853 = vst [vmem:[#allocation3 + $0x20] sm:$0xff] %v1821
        %1854 = vst [vmem:[#allocation3 + $0x68] sm:$0xff] %v1822
        %1855 = vst [vmem:[#allocation3 + $0xb0] sm:$0xff] %v1823
        %1856 = vst [vmem:[#allocation3 + $0xf8] sm:$0xff] %v1824
        %1857 = vst [vmem:[#allocation3 + $0x140] sm:$0xff] %v1825
        %1858 = vst [vmem:[#allocation3 + $0x188] sm:$0xff] %v1826
        %1859 = vst [vmem:[#allocation3 + $0x1d0] sm:$0xff] %v1827
        %1860 = vst [vmem:[#allocation3 + $0x218] sm:$0xff] %v1828
        %1861 = vst [vmem:[#allocation3 + $0x260] sm:$0xff] %v1829
        %1862 = vst [vmem:[#allocation3 + $0x2a8] sm:$0xff] %v1830
        %1863 = vst [vmem:[#allocation3 + $0x2f0] sm:$0xff] %v1831
        %1864 = vst [vmem:[#allocation3 + $0x338] sm:$0xff] %v1832
        %1865 = vst [vmem:[#allocation3 + $0x380] sm:$0xff] %v1833
        %1866 = vst [vmem:[#allocation3 + $0x3c8] sm:$0xff] %v1834
        %1867 = vst [vmem:[#allocation3 + $0x410] sm:$0xff] %v1835
        %1868 = vst [vmem:[#allocation3 + $0x458] sm:$0xff] %v1836
        %1869 = vst [vmem:[#allocation3 + $0x4a0] sm:$0xff] %v1837
        %1870 = vst [vmem:[#allocation3 + $0x4e8] sm:$0xff] %v1838
        %1871 = vst [vmem:[#allocation3 + $0x530] sm:$0xff] %v1839
        %1872 = vst [vmem:[#allocation3 + $0x578] sm:$0xff] %v1840
        %1873 = vst [vmem:[#allocation3 + $0x5c0] sm:$0xff] %v1841
        %1874 = vst [vmem:[#allocation3 + $0x608] sm:$0xff] %v1842
        %1875 = vst [vmem:[#allocation3 + $0x650] sm:$0xff] %v1843
        %1876 = vst [vmem:[#allocation3 + $0x698] sm:$0xff] %v1844
        %1877 = vst [vmem:[#allocation3 + $0x6e0] sm:$0xff] %v1845
        %1878 = vst [vmem:[#allocation3 + $0x728] sm:$0xff] %v1846
        %1879 = vst [vmem:[#allocation3 + $0x770] sm:$0xff] %v1847
        %1880 = vst [vmem:[#allocation3 + $0x7b8] sm:$0xff] %v1848
        %1881 = vst [vmem:[#allocation3 + $0x800] sm:$0xff] %v1849
        %1882 = vst [vmem:[#allocation3 + $0x848] sm:$0xff] %v1850
        %1883 = vst [vmem:[#allocation3 + $0x890] sm:$0xff] %v1851
        %1884 = vst [vmem:[#allocation3 + $0x8d8] sm:$0xff] %v1852
        %v1885 = vld [vmem:[#allocation2 + $0x19] sm:$0xff]
        %v1886 = vld [vmem:[#allocation2 + $0x21] sm:$0xff]
        %v1887 = vld [vmem:[#allocation2 + $0x29] sm:$0xff]
        %v1888 = vld [vmem:[#allocation2 + $0x31] sm:$0xff]
        %v1889 = vld [vmem:[#allocation2 + $0x39] sm:$0xff]
        %v1890 = vld [vmem:[#allocation2 + $0x41] sm:$0xff]
        %v1891 = vld [vmem:[#allocation2 + $0x49] sm:$0xff]
        %v1892 = vld [vmem:[#allocation2 + $0x51] sm:$0xff]
        %v1893 = vld [vmem:[#allocation2 + $0x59] sm:$0xff]
        %v1894 = vld [vmem:[#allocation2 + $0x61] sm:$0xff]
        %v1895 = vld [vmem:[#allocation2 + $0x69] sm:$0xff]
        %v1896 = vld [vmem:[#allocation2 + $0x71] sm:$0xff]
        %v1897 = vld [vmem:[#allocation2 + $0x79] sm:$0xff]
        %v1898 = vld [vmem:[#allocation2 + $0x81] sm:$0xff]
        %v1899 = vld [vmem:[#allocation2 + $0x89] sm:$0xff]
        %v1900 = vld [vmem:[#allocation2 + $0x91] sm:$0xff]
        %v1901 = vld [vmem:[#allocation2 + $0x99] sm:$0xff]
        %v1902 = vld [vmem:[#allocation2 + $0xa1] sm:$0xff]
        %v1903 = vld [vmem:[#allocation2 + $0xa9] sm:$0xff]
        %v1904 = vld [vmem:[#allocation2 + $0xb1] sm:$0xff]
        %v1905 = vld [vmem:[#allocation2 + $0xb9] sm:$0xff]
        %v1906 = vld [vmem:[#allocation2 + $0xc1] sm:$0xff]
        %v1907 = vld [vmem:[#allocation2 + $0xc9] sm:$0xff]
        %v1908 = vld [vmem:[#allocation2 + $0xd1] sm:$0xff]
        %v1909 = vld [vmem:[#allocation2 + $0xd9] sm:$0xff]
        %v1910 = vld [vmem:[#allocation2 + $0xe1] sm:$0xff]
        %v1911 = vld [vmem:[#allocation2 + $0xe9] sm:$0xff]
        %v1912 = vld [vmem:[#allocation2 + $0xf1] sm:$0xff]
        %v1913 = vld [vmem:[#allocation2 + $0xf9] sm:$0xff]
        %v1914 = vld [vmem:[#allocation2 + $0x101] sm:$0xff]
        %v1915 = vld [vmem:[#allocation2 + $0x109] sm:$0xff]
        %v1916 = vld [vmem:[#allocation2 + $0x111] sm:$0xff]
        %v1917 = vsel %vm1629, %v1885, 0.0
        %v1918 = vsel %vm1630, %v1886, 0.0
        %v1919 = vsel %vm1631, %v1887, 0.0
        %v1920 = vsel %vm1632, %v1888, 0.0
        %v1921 = vsel %vm1633, %v1889, 0.0
        %v1922 = vsel %vm1634, %v1890, 0.0
        %v1923 = vsel %vm1635, %v1891, 0.0
        %v1924 = vsel %vm1636, %v1892, 0.0
        %v1925 = vsel %vm1637, %v1893, 0.0
        %v1926 = vsel %vm1638, %v1894, 0.0
        %v1927 = vsel %vm1639, %v1895, 0.0
        %v1928 = vsel %vm1640, %v1896, 0.0
        %v1929 = vsel %vm1641, %v1897, 0.0
        %v1930 = vsel %vm1642, %v1898, 0.0
        %v1931 = vsel %vm1643, %v1899, 0.0
        %v1932 = vsel %vm1644, %v1900, 0.0
        %v1933 = vsel %vm1645, %v1901, 0.0
        %v1934 = vsel %vm1646, %v1902, 0.0
        %v1935 = vsel %vm1647, %v1903, 0.0
        %v1936 = vsel %vm1648, %v1904, 0.0
        %v1937 = vsel %vm1649, %v1905, 0.0
        %v1938 = vsel %vm1650, %v1906, 0.0
        %v1939 = vsel %vm1651, %v1907, 0.0
        %v1940 = vsel %vm1652, %v1908, 0.0
        %v1941 = vsel %vm1653, %v1909, 0.0
        %v1942 = vsel %vm1654, %v1910, 0.0
        %v1943 = vsel %vm1655, %v1911, 0.0
        %v1944 = vsel %vm1656, %v1912, 0.0
        %v1945 = vsel %vm1657, %v1913, 0.0
        %v1946 = vsel %vm1658, %v1914, 0.0
        %v1947 = vsel %vm1659, %v1915, 0.0
        %v1948 = vsel %vm1660, %v1916, 0.0
        %1949 = vst [vmem:[#allocation3 + $0x28] sm:$0xff] %v1917
        %1950 = vst [vmem:[#allocation3 + $0x70] sm:$0xff] %v1918
        %1951 = vst [vmem:[#allocation3 + $0xb8] sm:$0xff] %v1919
        %1952 = vst [vmem:[#allocation3 + $0x100] sm:$0xff] %v1920
        %1953 = vst [vmem:[#allocation3 + $0x148] sm:$0xff] %v1921
        %1954 = vst [vmem:[#allocation3 + $0x190] sm:$0xff] %v1922
        %1955 = vst [vmem:[#allocation3 + $0x1d8] sm:$0xff] %v1923
        %1956 = vst [vmem:[#allocation3 + $0x220] sm:$0xff] %v1924
        %1957 = vst [vmem:[#allocation3 + $0x268] sm:$0xff] %v1925
        %1958 = vst [vmem:[#allocation3 + $0x2b0] sm:$0xff] %v1926
        %1959 = vst [vmem:[#allocation3 + $0x2f8] sm:$0xff] %v1927
        %1960 = vst [vmem:[#allocation3 + $0x340] sm:$0xff] %v1928
        %1961 = vst [vmem:[#allocation3 + $0x388] sm:$0xff] %v1929
        %1962 = vst [vmem:[#allocation3 + $0x3d0] sm:$0xff] %v1930
        %1963 = vst [vmem:[#allocation3 + $0x418] sm:$0xff] %v1931
        %1964 = vst [vmem:[#allocation3 + $0x460] sm:$0xff] %v1932
        %1965 = vst [vmem:[#allocation3 + $0x4a8] sm:$0xff] %v1933
        %1966 = vst [vmem:[#allocation3 + $0x4f0] sm:$0xff] %v1934
        %1967 = vst [vmem:[#allocation3 + $0x538] sm:$0xff] %v1935
        %1968 = vst [vmem:[#allocation3 + $0x580] sm:$0xff] %v1936
        %1969 = vst [vmem:[#allocation3 + $0x5c8] sm:$0xff] %v1937
        %1970 = vst [vmem:[#allocation3 + $0x610] sm:$0xff] %v1938
        %1971 = vst [vmem:[#allocation3 + $0x658] sm:$0xff] %v1939
        %1972 = vst [vmem:[#allocation3 + $0x6a0] sm:$0xff] %v1940
        %1973 = vst [vmem:[#allocation3 + $0x6e8] sm:$0xff] %v1941
        %1974 = vst [vmem:[#allocation3 + $0x730] sm:$0xff] %v1942
        %1975 = vst [vmem:[#allocation3 + $0x778] sm:$0xff] %v1943
        %1976 = vst [vmem:[#allocation3 + $0x7c0] sm:$0xff] %v1944
        %1977 = vst [vmem:[#allocation3 + $0x808] sm:$0xff] %v1945
        %1978 = vst [vmem:[#allocation3 + $0x850] sm:$0xff] %v1946
        %1979 = vst [vmem:[#allocation3 + $0x898] sm:$0xff] %v1947
        %1980 = vst [vmem:[#allocation3 + $0x8e0] sm:$0xff] %v1948
        %v1981 = vld [vmem:[#allocation2 + $0x27] sm:$0xff]
        %v1982 = vld [vmem:[#allocation2 + $0x2f] sm:$0xff]
        %v1983 = vld [vmem:[#allocation2 + $0x37] sm:$0xff]
        %v1984 = vld [vmem:[#allocation2 + $0x3f] sm:$0xff]
        %v1985 = vld [vmem:[#allocation2 + $0x47] sm:$0xff]
        %v1986 = vld [vmem:[#allocation2 + $0x4f] sm:$0xff]
        %v1987 = vld [vmem:[#allocation2 + $0x57] sm:$0xff]
        %v1988 = vld [vmem:[#allocation2 + $0x5f] sm:$0xff]
        %v1989 = vld [vmem:[#allocation2 + $0x67] sm:$0xff]
        %v1990 = vld [vmem:[#allocation2 + $0x6f] sm:$0xff]
        %v1991 = vld [vmem:[#allocation2 + $0x77] sm:$0xff]
        %v1992 = vld [vmem:[#allocation2 + $0x7f] sm:$0xff]
        %v1993 = vld [vmem:[#allocation2 + $0x87] sm:$0xff]
        %v1994 = vld [vmem:[#allocation2 + $0x8f] sm:$0xff]
        %v1995 = vld [vmem:[#allocation2 + $0x97] sm:$0xff]
        %v1996 = vld [vmem:[#allocation2 + $0x9f] sm:$0xff]
        %v1997 = vld [vmem:[#allocation2 + $0xa7] sm:$0xff]
        %v1998 = vld [vmem:[#allocation2 + $0xaf] sm:$0xff]
        %v1999 = vld [vmem:[#allocation2 + $0xb7] sm:$0xff]
        %v2000 = vld [vmem:[#allocation2 + $0xbf] sm:$0xff]
        %v2001 = vld [vmem:[#allocation2 + $0xc7] sm:$0xff]
        %v2002 = vld [vmem:[#allocation2 + $0xcf] sm:$0xff]
        %v2003 = vld [vmem:[#allocation2 + $0xd7] sm:$0xff]
        %v2004 = vld [vmem:[#allocation2 + $0xdf] sm:$0xff]
        %v2005 = vld [vmem:[#allocation2 + $0xe7] sm:$0xff]
        %v2006 = vld [vmem:[#allocation2 + $0xef] sm:$0xff]
        %v2007 = vld [vmem:[#allocation2 + $0xf7] sm:$0xff]
        %v2008 = vld [vmem:[#allocation2 + $0xff] sm:$0xff]
        %v2009 = vld [vmem:[#allocation2 + $0x107] sm:$0xff]
        %v2010 = vld [vmem:[#allocation2 + $0x10f] sm:$0xff]
        %v2011 = vld [vmem:[#allocation2 + $0x117] sm:$0xff]
        %v2012 = vld [vmem:[#allocation2 + $0x11f] sm:$0xff]
        %v2013 = vsel %vm1405, %v1981, 0.0
        %v2014 = vsel %vm1406, %v1982, 0.0
        %v2015 = vsel %vm1407, %v1983, 0.0
        %v2016 = vsel %vm1408, %v1984, 0.0
        %v2017 = vsel %vm1409, %v1985, 0.0
        %v2018 = vsel %vm1410, %v1986, 0.0
        %v2019 = vsel %vm1411, %v1987, 0.0
        %v2020 = vsel %vm1412, %v1988, 0.0
        %v2021 = vsel %vm1413, %v1989, 0.0
        %v2022 = vsel %vm1414, %v1990, 0.0
        %v2023 = vsel %vm1415, %v1991, 0.0
        %v2024 = vsel %vm1416, %v1992, 0.0
        %v2025 = vsel %vm1417, %v1993, 0.0
        %v2026 = vsel %vm1418, %v1994, 0.0
        %v2027 = vsel %vm1419, %v1995, 0.0
        %v2028 = vsel %vm1420, %v1996, 0.0
        %v2029 = vsel %vm1421, %v1997, 0.0
        %v2030 = vsel %vm1422, %v1998, 0.0
        %v2031 = vsel %vm1423, %v1999, 0.0
        %v2032 = vsel %vm1424, %v2000, 0.0
        %v2033 = vsel %vm1425, %v2001, 0.0
        %v2034 = vsel %vm1426, %v2002, 0.0
        %v2035 = vsel %vm1427, %v2003, 0.0
        %v2036 = vsel %vm1428, %v2004, 0.0
        %v2037 = vsel %vm1429, %v2005, 0.0
        %v2038 = vsel %vm1430, %v2006, 0.0
        %v2039 = vsel %vm1431, %v2007, 0.0
        %v2040 = vsel %vm1432, %v2008, 0.0
        %v2041 = vsel %vm1433, %v2009, 0.0
        %v2042 = vsel %vm1434, %v2010, 0.0
        %v2043 = vsel %vm1435, %v2011, 0.0
        %v2044 = vsel %vm1436, %v2012, 0.0
        %2045 = vst [vmem:[#allocation3 + $0x30] sm:$0xff] %v2013
        %2046 = vst [vmem:[#allocation3 + $0x78] sm:$0xff] %v2014
        %2047 = vst [vmem:[#allocation3 + $0xc0] sm:$0xff] %v2015
        %2048 = vst [vmem:[#allocation3 + $0x108] sm:$0xff] %v2016
        %2049 = vst [vmem:[#allocation3 + $0x150] sm:$0xff] %v2017
        %2050 = vst [vmem:[#allocation3 + $0x198] sm:$0xff] %v2018
        %2051 = vst [vmem:[#allocation3 + $0x1e0] sm:$0xff] %v2019
        %2052 = vst [vmem:[#allocation3 + $0x228] sm:$0xff] %v2020
        %2053 = vst [vmem:[#allocation3 + $0x270] sm:$0xff] %v2021
        %2054 = vst [vmem:[#allocation3 + $0x2b8] sm:$0xff] %v2022
        %2055 = vst [vmem:[#allocation3 + $0x300] sm:$0xff] %v2023
        %2056 = vst [vmem:[#allocation3 + $0x348] sm:$0xff] %v2024
        %2057 = vst [vmem:[#allocation3 + $0x390] sm:$0xff] %v2025
        %2058 = vst [vmem:[#allocation3 + $0x3d8] sm:$0xff] %v2026
        %2059 = vst [vmem:[#allocation3 + $0x420] sm:$0xff] %v2027
        %2060 = vst [vmem:[#allocation3 + $0x468] sm:$0xff] %v2028
        %2061 = vst [vmem:[#allocation3 + $0x4b0] sm:$0xff] %v2029
        %2062 = vst [vmem:[#allocation3 + $0x4f8] sm:$0xff] %v2030
        %2063 = vst [vmem:[#allocation3 + $0x540] sm:$0xff] %v2031
        %2064 = vst [vmem:[#allocation3 + $0x588] sm:$0xff] %v2032
        %2065 = vst [vmem:[#allocation3 + $0x5d0] sm:$0xff] %v2033
        %2066 = vst [vmem:[#allocation3 + $0x618] sm:$0xff] %v2034
        %2067 = vst [vmem:[#allocation3 + $0x660] sm:$0xff] %v2035
        %2068 = vst [vmem:[#allocation3 + $0x6a8] sm:$0xff] %v2036
        %2069 = vst [vmem:[#allocation3 + $0x6f0] sm:$0xff] %v2037
        %2070 = vst [vmem:[#allocation3 + $0x738] sm:$0xff] %v2038
        %2071 = vst [vmem:[#allocation3 + $0x780] sm:$0xff] %v2039
        %2072 = vst [vmem:[#allocation3 + $0x7c8] sm:$0xff] %v2040
        %2073 = vst [vmem:[#allocation3 + $0x810] sm:$0xff] %v2041
        %2074 = vst [vmem:[#allocation3 + $0x858] sm:$0xff] %v2042
        %2075 = vst [vmem:[#allocation3 + $0x8a0] sm:$0xff] %v2043
        %2076 = vst [vmem:[#allocation3 + $0x8e8] sm:$0xff] %v2044
        %v2077 = vld [vmem:[#allocation2 + $0x28] sm:$0xff]
        %v2078 = vld [vmem:[#allocation2 + $0x30] sm:$0xff]
        %v2079 = vld [vmem:[#allocation2 + $0x38] sm:$0xff]
        %v2080 = vld [vmem:[#allocation2 + $0x40] sm:$0xff]
        %v2081 = vld [vmem:[#allocation2 + $0x48] sm:$0xff]
        %v2082 = vld [vmem:[#allocation2 + $0x50] sm:$0xff]
        %v2083 = vld [vmem:[#allocation2 + $0x58] sm:$0xff]
        %v2084 = vld [vmem:[#allocation2 + $0x60] sm:$0xff]
        %v2085 = vld [vmem:[#allocation2 + $0x68] sm:$0xff]
        %v2086 = vld [vmem:[#allocation2 + $0x70] sm:$0xff]
        %v2087 = vld [vmem:[#allocation2 + $0x78] sm:$0xff]
        %v2088 = vld [vmem:[#allocation2 + $0x80] sm:$0xff]
        %v2089 = vld [vmem:[#allocation2 + $0x88] sm:$0xff]
        %v2090 = vld [vmem:[#allocation2 + $0x90] sm:$0xff]
        %v2091 = vld [vmem:[#allocation2 + $0x98] sm:$0xff]
        %v2092 = vld [vmem:[#allocation2 + $0xa0] sm:$0xff]
        %v2093 = vld [vmem:[#allocation2 + $0xa8] sm:$0xff]
        %v2094 = vld [vmem:[#allocation2 + $0xb0] sm:$0xff]
        %v2095 = vld [vmem:[#allocation2 + $0xb8] sm:$0xff]
        %v2096 = vld [vmem:[#allocation2 + $0xc0] sm:$0xff]
        %v2097 = vld [vmem:[#allocation2 + $0xc8] sm:$0xff]
        %v2098 = vld [vmem:[#allocation2 + $0xd0] sm:$0xff]
        %v2099 = vld [vmem:[#allocation2 + $0xd8] sm:$0xff]
        %v2100 = vld [vmem:[#allocation2 + $0xe0] sm:$0xff]
        %v2101 = vld [vmem:[#allocation2 + $0xe8] sm:$0xff]
        %v2102 = vld [vmem:[#allocation2 + $0xf0] sm:$0xff]
        %v2103 = vld [vmem:[#allocation2 + $0xf8] sm:$0xff]
        %v2104 = vld [vmem:[#allocation2 + $0x100] sm:$0xff]
        %v2105 = vld [vmem:[#allocation2 + $0x108] sm:$0xff]
        %v2106 = vld [vmem:[#allocation2 + $0x110] sm:$0xff]
        %v2107 = vld [vmem:[#allocation2 + $0x118] sm:$0xff]
        %v2108 = vld [vmem:[#allocation2 + $0x120] sm:$0xff]
        %2109 = vst [vmem:[#allocation3 + $0x38] sm:$0xff] %v2077
        %2110 = vst [vmem:[#allocation3 + $0x80] sm:$0xff] %v2078
        %2111 = vst [vmem:[#allocation3 + $0xc8] sm:$0xff] %v2079
        %2112 = vst [vmem:[#allocation3 + $0x110] sm:$0xff] %v2080
        %2113 = vst [vmem:[#allocation3 + $0x158] sm:$0xff] %v2081
        %2114 = vst [vmem:[#allocation3 + $0x1a0] sm:$0xff] %v2082
        %2115 = vst [vmem:[#allocation3 + $0x1e8] sm:$0xff] %v2083
        %2116 = vst [vmem:[#allocation3 + $0x230] sm:$0xff] %v2084
        %2117 = vst [vmem:[#allocation3 + $0x278] sm:$0xff] %v2085
        %2118 = vst [vmem:[#allocation3 + $0x2c0] sm:$0xff] %v2086
        %2119 = vst [vmem:[#allocation3 + $0x308] sm:$0xff] %v2087
        %2120 = vst [vmem:[#allocation3 + $0x350] sm:$0xff] %v2088
        %2121 = vst [vmem:[#allocation3 + $0x398] sm:$0xff] %v2089
        %2122 = vst [vmem:[#allocation3 + $0x3e0] sm:$0xff] %v2090
        %2123 = vst [vmem:[#allocation3 + $0x428] sm:$0xff] %v2091
        %2124 = vst [vmem:[#allocation3 + $0x470] sm:$0xff] %v2092
        %2125 = vst [vmem:[#allocation3 + $0x4b8] sm:$0xff] %v2093
        %2126 = vst [vmem:[#allocation3 + $0x500] sm:$0xff] %v2094
        %2127 = vst [vmem:[#allocation3 + $0x548] sm:$0xff] %v2095
        %2128 = vst [vmem:[#allocation3 + $0x590] sm:$0xff] %v2096
        %2129 = vst [vmem:[#allocation3 + $0x5d8] sm:$0xff] %v2097
        %2130 = vst [vmem:[#allocation3 + $0x620] sm:$0xff] %v2098
        %2131 = vst [vmem:[#allocation3 + $0x668] sm:$0xff] %v2099
        %2132 = vst [vmem:[#allocation3 + $0x6b0] sm:$0xff] %v2100
        %2133 = vst [vmem:[#allocation3 + $0x6f8] sm:$0xff] %v2101
        %2134 = vst [vmem:[#allocation3 + $0x740] sm:$0xff] %v2102
        %2135 = vst [vmem:[#allocation3 + $0x788] sm:$0xff] %v2103
        %2136 = vst [vmem:[#allocation3 + $0x7d0] sm:$0xff] %v2104
        %2137 = vst [vmem:[#allocation3 + $0x818] sm:$0xff] %v2105
        %2138 = vst [vmem:[#allocation3 + $0x860] sm:$0xff] %v2106
        %2139 = vst [vmem:[#allocation3 + $0x8a8] sm:$0xff] %v2107
        %2140 = vst [vmem:[#allocation3 + $0x8f0] sm:$0xff] %v2108
        %v2141 = vld [vmem:[#allocation2 + $0x29] sm:$0xff]
        %v2142 = vld [vmem:[#allocation2 + $0x31] sm:$0xff]
        %v2143 = vld [vmem:[#allocation2 + $0x39] sm:$0xff]
        %v2144 = vld [vmem:[#allocation2 + $0x41] sm:$0xff]
        %v2145 = vld [vmem:[#allocation2 + $0x49] sm:$0xff]
        %v2146 = vld [vmem:[#allocation2 + $0x51] sm:$0xff]
        %v2147 = vld [vmem:[#allocation2 + $0x59] sm:$0xff]
        %v2148 = vld [vmem:[#allocation2 + $0x61] sm:$0xff]
        %v2149 = vld [vmem:[#allocation2 + $0x69] sm:$0xff]
        %v2150 = vld [vmem:[#allocation2 + $0x71] sm:$0xff]
        %v2151 = vld [vmem:[#allocation2 + $0x79] sm:$0xff]
        %v2152 = vld [vmem:[#allocation2 + $0x81] sm:$0xff]
        %v2153 = vld [vmem:[#allocation2 + $0x89] sm:$0xff]
        %v2154 = vld [vmem:[#allocation2 + $0x91] sm:$0xff]
        %v2155 = vld [vmem:[#allocation2 + $0x99] sm:$0xff]
        %v2156 = vld [vmem:[#allocation2 + $0xa1] sm:$0xff]
        %v2157 = vld [vmem:[#allocation2 + $0xa9] sm:$0xff]
        %v2158 = vld [vmem:[#allocation2 + $0xb1] sm:$0xff]
        %v2159 = vld [vmem:[#allocation2 + $0xb9] sm:$0xff]
        %v2160 = vld [vmem:[#allocation2 + $0xc1] sm:$0xff]
        %v2161 = vld [vmem:[#allocation2 + $0xc9] sm:$0xff]
        %v2162 = vld [vmem:[#allocation2 + $0xd1] sm:$0xff]
        %v2163 = vld [vmem:[#allocation2 + $0xd9] sm:$0xff]
        %v2164 = vld [vmem:[#allocation2 + $0xe1] sm:$0xff]
        %v2165 = vld [vmem:[#allocation2 + $0xe9] sm:$0xff]
        %v2166 = vld [vmem:[#allocation2 + $0xf1] sm:$0xff]
        %v2167 = vld [vmem:[#allocation2 + $0xf9] sm:$0xff]
        %v2168 = vld [vmem:[#allocation2 + $0x101] sm:$0xff]
        %v2169 = vld [vmem:[#allocation2 + $0x109] sm:$0xff]
        %v2170 = vld [vmem:[#allocation2 + $0x111] sm:$0xff]
        %v2171 = vld [vmem:[#allocation2 + $0x119] sm:$0xff]
        %v2172 = vld [vmem:[#allocation2 + $0x121] sm:$0xff]
        %v2173 = vsel %vm1629, %v2141, 0.0
        %v2174 = vsel %vm1630, %v2142, 0.0
        %v2175 = vsel %vm1631, %v2143, 0.0
        %v2176 = vsel %vm1632, %v2144, 0.0
        %v2177 = vsel %vm1633, %v2145, 0.0
        %v2178 = vsel %vm1634, %v2146, 0.0
        %v2179 = vsel %vm1635, %v2147, 0.0
        %v2180 = vsel %vm1636, %v2148, 0.0
        %v2181 = vsel %vm1637, %v2149, 0.0
        %v2182 = vsel %vm1638, %v2150, 0.0
        %v2183 = vsel %vm1639, %v2151, 0.0
        %v2184 = vsel %vm1640, %v2152, 0.0
        %v2185 = vsel %vm1641, %v2153, 0.0
        %v2186 = vsel %vm1642, %v2154, 0.0
        %v2187 = vsel %vm1643, %v2155, 0.0
        %v2188 = vsel %vm1644, %v2156, 0.0
        %v2189 = vsel %vm1645, %v2157, 0.0
        %v2190 = vsel %vm1646, %v2158, 0.0
        %v2191 = vsel %vm1647, %v2159, 0.0
        %v2192 = vsel %vm1648, %v2160, 0.0
        %v2193 = vsel %vm1649, %v2161, 0.0
        %v2194 = vsel %vm1650, %v2162, 0.0
        %v2195 = vsel %vm1651, %v2163, 0.0
        %v2196 = vsel %vm1652, %v2164, 0.0
        %v2197 = vsel %vm1653, %v2165, 0.0
        %v2198 = vsel %vm1654, %v2166, 0.0
        %v2199 = vsel %vm1655, %v2167, 0.0
        %v2200 = vsel %vm1656, %v2168, 0.0
        %v2201 = vsel %vm1657, %v2169, 0.0
        %v2202 = vsel %vm1658, %v2170, 0.0
        %v2203 = vsel %vm1659, %v2171, 0.0
        %v2204 = vsel %vm1660, %v2172, 0.0
        %2205 = vst [vmem:[#allocation3 + $0x40] sm:$0xff] %v2173
        %2206 = vst [vmem:[#allocation3 + $0x88] sm:$0xff] %v2174
        %2207 = vst [vmem:[#allocation3 + $0xd0] sm:$0xff] %v2175
        %2208 = vst [vmem:[#allocation3 + $0x118] sm:$0xff] %v2176
        %2209 = vst [vmem:[#allocation3 + $0x160] sm:$0xff] %v2177
        %2210 = vst [vmem:[#allocation3 + $0x1a8] sm:$0xff] %v2178
        %2211 = vst [vmem:[#allocation3 + $0x1f0] sm:$0xff] %v2179
        %2212 = vst [vmem:[#allocation3 + $0x238] sm:$0xff] %v2180
        %2213 = vst [vmem:[#allocation3 + $0x280] sm:$0xff] %v2181
        %2214 = vst [vmem:[#allocation3 + $0x2c8] sm:$0xff] %v2182
        %2215 = vst [vmem:[#allocation3 + $0x310] sm:$0xff] %v2183
        %2216 = vst [vmem:[#allocation3 + $0x358] sm:$0xff] %v2184
        %2217 = vst [vmem:[#allocation3 + $0x3a0] sm:$0xff] %v2185
        %2218 = vst [vmem:[#allocation3 + $0x3e8] sm:$0xff] %v2186
        %2219 = vst [vmem:[#allocation3 + $0x430] sm:$0xff] %v2187
        %2220 = vst [vmem:[#allocation3 + $0x478] sm:$0xff] %v2188
        %2221 = vst [vmem:[#allocation3 + $0x4c0] sm:$0xff] %v2189
        %2222 = vst [vmem:[#allocation3 + $0x508] sm:$0xff] %v2190
        %2223 = vst [vmem:[#allocation3 + $0x550] sm:$0xff] %v2191
        %2224 = vst [vmem:[#allocation3 + $0x598] sm:$0xff] %v2192
        %2225 = vst [vmem:[#allocation3 + $0x5e0] sm:$0xff] %v2193
        %2226 = vst [vmem:[#allocation3 + $0x628] sm:$0xff] %v2194
        %2227 = vst [vmem:[#allocation3 + $0x670] sm:$0xff] %v2195
        %2228 = vst [vmem:[#allocation3 + $0x6b8] sm:$0xff] %v2196
        %2229 = vst [vmem:[#allocation3 + $0x700] sm:$0xff] %v2197
        %2230 = vst [vmem:[#allocation3 + $0x748] sm:$0xff] %v2198
        %2231 = vst [vmem:[#allocation3 + $0x790] sm:$0xff] %v2199
        %2232 = vst [vmem:[#allocation3 + $0x7d8] sm:$0xff] %v2200
        %2233 = vst [vmem:[#allocation3 + $0x820] sm:$0xff] %v2201
        %2234 = vst [vmem:[#allocation3 + $0x868] sm:$0xff] %v2202
        %2235 = vst [vmem:[#allocation3 + $0x8b0] sm:$0xff] %v2203
        %2236 = vst [vmem:[#allocation3 + $0x8f8] sm:$0xff] %v2204
        %v2237 = vld [vmem:[#allocation3] sm:$0xff]
        %v2238 = vld [vmem:[#allocation3 + $0x8] sm:$0xff]
        %v2239 = vld [vmem:[#allocation3 + $0x10] sm:$0xff]
        %v2240 = vld [vmem:[#allocation3 + $0x18] sm:$0xff]
        %v2241 = vld [vmem:[#allocation3 + $0x20] sm:$0xff]
        %v2242 = vld [vmem:[#allocation3 + $0x28] sm:$0xff]
        %v2243 = vld [vmem:[#allocation3 + $0x30] sm:$0xff]
        %v2244 = vld [vmem:[#allocation3 + $0x38] sm:$0xff]
        %v2245 = vld [vmem:[#allocation3 + $0x40] sm:$0xff]
        %v2246 = vld [vmem:[#allocation3 + $0x48] sm:$0xff]
        %v2247 = vld [vmem:[#allocation3 + $0x50] sm:$0xff]
        %v2248 = vld [vmem:[#allocation3 + $0x58] sm:$0xff]
        %v2249 = vld [vmem:[#allocation3 + $0x60] sm:$0xff]
        %v2250 = vld [vmem:[#allocation3 + $0x68] sm:$0xff]
        %v2251 = vld [vmem:[#allocation3 + $0x70] sm:$0xff]
        %v2252 = vld [vmem:[#allocation3 + $0x78] sm:$0xff]
        %v2253 = vld [vmem:[#allocation3 + $0x80] sm:$0xff]
        %v2254 = vld [vmem:[#allocation3 + $0x88] sm:$0xff]
        %v2255 = vld [vmem:[#allocation3 + $0x90] sm:$0xff]
        %v2256 = vld [vmem:[#allocation3 + $0x98] sm:$0xff]
        %v2257 = vld [vmem:[#allocation3 + $0xa0] sm:$0xff]
        %v2258 = vld [vmem:[#allocation3 + $0xa8] sm:$0xff]
        %v2259 = vld [vmem:[#allocation3 + $0xb0] sm:$0xff]
        %v2260 = vld [vmem:[#allocation3 + $0xb8] sm:$0xff]
        %v2261 = vld [vmem:[#allocation3 + $0xc0] sm:$0xff]
        %v2262 = vld [vmem:[#allocation3 + $0xc8] sm:$0xff]
        %v2263 = vld [vmem:[#allocation3 + $0xd0] sm:$0xff]
        %v2264 = vld [vmem:[#allocation3 + $0xd8] sm:$0xff]
        %v2265 = vld [vmem:[#allocation3 + $0xe0] sm:$0xff]
        %v2266 = vld [vmem:[#allocation3 + $0xe8] sm:$0xff]
        %v2267 = vld [vmem:[#allocation3 + $0xf0] sm:$0xff]
        %v2268 = vld [vmem:[#allocation3 + $0xf8] sm:$0xff]
        %v2269 = vld [vmem:[#allocation3 + $0x100] sm:$0xff]
        %v2270 = vld [vmem:[#allocation3 + $0x108] sm:$0xff]
        %v2271 = vld [vmem:[#allocation3 + $0x110] sm:$0xff]
        %v2272 = vld [vmem:[#allocation3 + $0x118] sm:$0xff]
        %v2273 = vld [vmem:[#allocation3 + $0x120] sm:$0xff]
        %v2274 = vld [vmem:[#allocation3 + $0x128] sm:$0xff]
        %v2275 = vld [vmem:[#allocation3 + $0x130] sm:$0xff]
        %v2276 = vld [vmem:[#allocation3 + $0x138] sm:$0xff]
        %v2277 = vld [vmem:[#allocation3 + $0x140] sm:$0xff]
        %v2278 = vld [vmem:[#allocation3 + $0x148] sm:$0xff]
        %v2279 = vld [vmem:[#allocation3 + $0x150] sm:$0xff]
        %v2280 = vld [vmem:[#allocation3 + $0x158] sm:$0xff]
        %v2281 = vld [vmem:[#allocation3 + $0x160] sm:$0xff]
        %v2282 = vld [vmem:[#allocation3 + $0x168] sm:$0xff]
        %v2283 = vld [vmem:[#allocation3 + $0x170] sm:$0xff]
        %v2284 = vld [vmem:[#allocation3 + $0x178] sm:$0xff]
        %v2285 = vld [vmem:[#allocation3 + $0x180] sm:$0xff]
        %v2286 = vld [vmem:[#allocation3 + $0x188] sm:$0xff]
        %v2287 = vld [vmem:[#allocation3 + $0x190] sm:$0xff]
        %v2288 = vld [vmem:[#allocation3 + $0x198] sm:$0xff]
        %v2289 = vld [vmem:[#allocation3 + $0x1a0] sm:$0xff]
        %v2290 = vld [vmem:[#allocation3 + $0x1a8] sm:$0xff]
        %v2291 = vld [vmem:[#allocation3 + $0x1b0] sm:$0xff]
        %v2292 = vld [vmem:[#allocation3 + $0x1b8] sm:$0xff]
        %v2293 = vld [vmem:[#allocation3 + $0x1c0] sm:$0xff]
        %v2294 = vld [vmem:[#allocation3 + $0x1c8] sm:$0xff]
        %v2295 = vld [vmem:[#allocation3 + $0x1d0] sm:$0xff]
        %v2296 = vld [vmem:[#allocation3 + $0x1d8] sm:$0xff]
        %v2297 = vld [vmem:[#allocation3 + $0x1e0] sm:$0xff]
        %v2298 = vld [vmem:[#allocation3 + $0x1e8] sm:$0xff]
        %v2299 = vld [vmem:[#allocation3 + $0x1f0] sm:$0xff]
        %v2300 = vld [vmem:[#allocation3 + $0x1f8] sm:$0xff]
        %v2301 = vld [vmem:[#allocation3 + $0x200] sm:$0xff]
        %v2302 = vld [vmem:[#allocation3 + $0x208] sm:$0xff]
        %v2303 = vld [vmem:[#allocation3 + $0x210] sm:$0xff]
        %v2304 = vld [vmem:[#allocation3 + $0x218] sm:$0xff]
        %v2305 = vld [vmem:[#allocation3 + $0x220] sm:$0xff]
        %v2306 = vld [vmem:[#allocation3 + $0x228] sm:$0xff]
        %v2307 = vld [vmem:[#allocation3 + $0x230] sm:$0xff]
        %v2308 = vld [vmem:[#allocation3 + $0x238] sm:$0xff]
        %v2309 = vld [vmem:[#allocation3 + $0x240] sm:$0xff]
        %v2310 = vld [vmem:[#allocation3 + $0x248] sm:$0xff]
        %v2311 = vld [vmem:[#allocation3 + $0x250] sm:$0xff]
        %v2312 = vld [vmem:[#allocation3 + $0x258] sm:$0xff]
        %v2313 = vld [vmem:[#allocation3 + $0x260] sm:$0xff]
        %v2314 = vld [vmem:[#allocation3 + $0x268] sm:$0xff]
        %v2315 = vld [vmem:[#allocation3 + $0x270] sm:$0xff]
        %v2316 = vld [vmem:[#allocation3 + $0x278] sm:$0xff]
        %v2317 = vld [vmem:[#allocation3 + $0x280] sm:$0xff]
        %v2318 = vld [vmem:[#allocation3 + $0x288] sm:$0xff]
        %v2319 = vld [vmem:[#allocation3 + $0x290] sm:$0xff]
        %v2320 = vld [vmem:[#allocation3 + $0x298] sm:$0xff]
        %v2321 = vld [vmem:[#allocation3 + $0x2a0] sm:$0xff]
        %v2322 = vld [vmem:[#allocation3 + $0x2a8] sm:$0xff]
        %v2323 = vld [vmem:[#allocation3 + $0x2b0] sm:$0xff]
        %v2324 = vld [vmem:[#allocation3 + $0x2b8] sm:$0xff]
        %v2325 = vld [vmem:[#allocation3 + $0x2c0] sm:$0xff]
        %v2326 = vld [vmem:[#allocation3 + $0x2c8] sm:$0xff]
        %v2327 = vld [vmem:[#allocation3 + $0x2d0] sm:$0xff]
        %v2328 = vld [vmem:[#allocation3 + $0x2d8] sm:$0xff]
        %v2329 = vld [vmem:[#allocation3 + $0x2e0] sm:$0xff]
        %v2330 = vld [vmem:[#allocation3 + $0x2e8] sm:$0xff]
        %v2331 = vld [vmem:[#allocation3 + $0x2f0] sm:$0xff]
        %v2332 = vld [vmem:[#allocation3 + $0x2f8] sm:$0xff]
        %v2333 = vld [vmem:[#allocation3 + $0x300] sm:$0xff]
        %v2334 = vld [vmem:[#allocation3 + $0x308] sm:$0xff]
        %v2335 = vld [vmem:[#allocation3 + $0x310] sm:$0xff]
        %v2336 = vld [vmem:[#allocation3 + $0x318] sm:$0xff]
        %v2337 = vld [vmem:[#allocation3 + $0x320] sm:$0xff]
        %v2338 = vld [vmem:[#allocation3 + $0x328] sm:$0xff]
        %v2339 = vld [vmem:[#allocation3 + $0x330] sm:$0xff]
        %v2340 = vld [vmem:[#allocation3 + $0x338] sm:$0xff]
        %v2341 = vld [vmem:[#allocation3 + $0x340] sm:$0xff]
        %v2342 = vld [vmem:[#allocation3 + $0x348] sm:$0xff]
        %v2343 = vld [vmem:[#allocation3 + $0x350] sm:$0xff]
        %v2344 = vld [vmem:[#allocation3 + $0x358] sm:$0xff]
        %v2345 = vld [vmem:[#allocation3 + $0x360] sm:$0xff]
        %v2346 = vld [vmem:[#allocation3 + $0x368] sm:$0xff]
        %v2347 = vld [vmem:[#allocation3 + $0x370] sm:$0xff]
        %v2348 = vld [vmem:[#allocation3 + $0x378] sm:$0xff]
        %v2349 = vld [vmem:[#allocation3 + $0x380] sm:$0xff]
        %v2350 = vld [vmem:[#allocation3 + $0x388] sm:$0xff]
        %v2351 = vld [vmem:[#allocation3 + $0x390] sm:$0xff]
        %v2352 = vld [vmem:[#allocation3 + $0x398] sm:$0xff]
        %v2353 = vld [vmem:[#allocation3 + $0x3a0] sm:$0xff]
        %v2354 = vld [vmem:[#allocation3 + $0x3a8] sm:$0xff]
        %v2355 = vld [vmem:[#allocation3 + $0x3b0] sm:$0xff]
        %v2356 = vld [vmem:[#allocation3 + $0x3b8] sm:$0xff]
        %v2357 = vld [vmem:[#allocation3 + $0x3c0] sm:$0xff]
        %v2358 = vld [vmem:[#allocation3 + $0x3c8] sm:$0xff]
        %v2359 = vld [vmem:[#allocation3 + $0x3d0] sm:$0xff]
        %v2360 = vld [vmem:[#allocation3 + $0x3d8] sm:$0xff]
        %v2361 = vld [vmem:[#allocation3 + $0x3e0] sm:$0xff]
        %v2362 = vld [vmem:[#allocation3 + $0x3e8] sm:$0xff]
        %v2363 = vld [vmem:[#allocation3 + $0x3f0] sm:$0xff]
        %v2364 = vld [vmem:[#allocation3 + $0x3f8] sm:$0xff]
        %v2365 = vld [vmem:[#allocation3 + $0x400] sm:$0xff]
        %v2366 = vld [vmem:[#allocation3 + $0x408] sm:$0xff]
        %v2367 = vld [vmem:[#allocation3 + $0x410] sm:$0xff]
        %v2368 = vld [vmem:[#allocation3 + $0x418] sm:$0xff]
        %v2369 = vld [vmem:[#allocation3 + $0x420] sm:$0xff]
        %v2370 = vld [vmem:[#allocation3 + $0x428] sm:$0xff]
        %v2371 = vld [vmem:[#allocation3 + $0x430] sm:$0xff]
        %v2372 = vld [vmem:[#allocation3 + $0x438] sm:$0xff]
        %v2373 = vld [vmem:[#allocation3 + $0x440] sm:$0xff]
        %v2374 = vld [vmem:[#allocation3 + $0x448] sm:$0xff]
        %v2375 = vld [vmem:[#allocation3 + $0x450] sm:$0xff]
        %v2376 = vld [vmem:[#allocation3 + $0x458] sm:$0xff]
        %v2377 = vld [vmem:[#allocation3 + $0x460] sm:$0xff]
        %v2378 = vld [vmem:[#allocation3 + $0x468] sm:$0xff]
        %v2379 = vld [vmem:[#allocation3 + $0x470] sm:$0xff]
        %v2380 = vld [vmem:[#allocation3 + $0x478] sm:$0xff]
        %v2381 = vld [vmem:[#allocation3 + $0x480] sm:$0xff]
        %v2382 = vld [vmem:[#allocation3 + $0x488] sm:$0xff]
        %v2383 = vld [vmem:[#allocation3 + $0x490] sm:$0xff]
        %v2384 = vld [vmem:[#allocation3 + $0x498] sm:$0xff]
        %v2385 = vld [vmem:[#allocation3 + $0x4a0] sm:$0xff]
        %v2386 = vld [vmem:[#allocation3 + $0x4a8] sm:$0xff]
        %v2387 = vld [vmem:[#allocation3 + $0x4b0] sm:$0xff]
        %v2388 = vld [vmem:[#allocation3 + $0x4b8] sm:$0xff]
        %v2389 = vld [vmem:[#allocation3 + $0x4c0] sm:$0xff]
        %v2390 = vld [vmem:[#allocation3 + $0x4c8] sm:$0xff]
        %v2391 = vld [vmem:[#allocation3 + $0x4d0] sm:$0xff]
        %v2392 = vld [vmem:[#allocation3 + $0x4d8] sm:$0xff]
        %v2393 = vld [vmem:[#allocation3 + $0x4e0] sm:$0xff]
        %v2394 = vld [vmem:[#allocation3 + $0x4e8] sm:$0xff]
        %v2395 = vld [vmem:[#allocation3 + $0x4f0] sm:$0xff]
        %v2396 = vld [vmem:[#allocation3 + $0x4f8] sm:$0xff]
        %v2397 = vld [vmem:[#allocation3 + $0x500] sm:$0xff]
        %v2398 = vld [vmem:[#allocation3 + $0x508] sm:$0xff]
        %v2399 = vld [vmem:[#allocation3 + $0x510] sm:$0xff]
        %v2400 = vld [vmem:[#allocation3 + $0x518] sm:$0xff]
        %v2401 = vld [vmem:[#allocation3 + $0x520] sm:$0xff]
        %v2402 = vld [vmem:[#allocation3 + $0x528] sm:$0xff]
        %v2403 = vld [vmem:[#allocation3 + $0x530] sm:$0xff]
        %v2404 = vld [vmem:[#allocation3 + $0x538] sm:$0xff]
        %v2405 = vld [vmem:[#allocation3 + $0x540] sm:$0xff]
        %v2406 = vld [vmem:[#allocation3 + $0x548] sm:$0xff]
        %v2407 = vld [vmem:[#allocation3 + $0x550] sm:$0xff]
        %v2408 = vld [vmem:[#allocation3 + $0x558] sm:$0xff]
        %v2409 = vld [vmem:[#allocation3 + $0x560] sm:$0xff]
        %v2410 = vld [vmem:[#allocation3 + $0x568] sm:$0xff]
        %v2411 = vld [vmem:[#allocation3 + $0x570] sm:$0xff]
        %v2412 = vld [vmem:[#allocation3 + $0x578] sm:$0xff]
        %v2413 = vld [vmem:[#allocation3 + $0x580] sm:$0xff]
        %v2414 = vld [vmem:[#allocation3 + $0x588] sm:$0xff]
        %v2415 = vld [vmem:[#allocation3 + $0x590] sm:$0xff]
        %v2416 = vld [vmem:[#allocation3 + $0x598] sm:$0xff]
        %v2417 = vld [vmem:[#allocation3 + $0x5a0] sm:$0xff]
        %v2418 = vld [vmem:[#allocation3 + $0x5a8] sm:$0xff]
        %v2419 = vld [vmem:[#allocation3 + $0x5b0] sm:$0xff]
        %v2420 = vld [vmem:[#allocation3 + $0x5b8] sm:$0xff]
        %v2421 = vld [vmem:[#allocation3 + $0x5c0] sm:$0xff]
        %v2422 = vld [vmem:[#allocation3 + $0x5c8] sm:$0xff]
        %v2423 = vld [vmem:[#allocation3 + $0x5d0] sm:$0xff]
        %v2424 = vld [vmem:[#allocation3 + $0x5d8] sm:$0xff]
        %v2425 = vld [vmem:[#allocation3 + $0x5e0] sm:$0xff]
        %v2426 = vld [vmem:[#allocation3 + $0x5e8] sm:$0xff]
        %v2427 = vld [vmem:[#allocation3 + $0x5f0] sm:$0xff]
        %v2428 = vld [vmem:[#allocation3 + $0x5f8] sm:$0xff]
        %v2429 = vld [vmem:[#allocation3 + $0x600] sm:$0xff]
        %v2430 = vld [vmem:[#allocation3 + $0x608] sm:$0xff]
        %v2431 = vld [vmem:[#allocation3 + $0x610] sm:$0xff]
        %v2432 = vld [vmem:[#allocation3 + $0x618] sm:$0xff]
        %v2433 = vld [vmem:[#allocation3 + $0x620] sm:$0xff]
        %v2434 = vld [vmem:[#allocation3 + $0x628] sm:$0xff]
        %v2435 = vld [vmem:[#allocation3 + $0x630] sm:$0xff]
        %v2436 = vld [vmem:[#allocation3 + $0x638] sm:$0xff]
        %v2437 = vld [vmem:[#allocation3 + $0x640] sm:$0xff]
        %v2438 = vld [vmem:[#allocation3 + $0x648] sm:$0xff]
        %v2439 = vld [vmem:[#allocation3 + $0x650] sm:$0xff]
        %v2440 = vld [vmem:[#allocation3 + $0x658] sm:$0xff]
        %v2441 = vld [vmem:[#allocation3 + $0x660] sm:$0xff]
        %v2442 = vld [vmem:[#allocation3 + $0x668] sm:$0xff]
        %v2443 = vld [vmem:[#allocation3 + $0x670] sm:$0xff]
        %v2444 = vld [vmem:[#allocation3 + $0x678] sm:$0xff]
        %v2445 = vld [vmem:[#allocation3 + $0x680] sm:$0xff]
        %v2446 = vld [vmem:[#allocation3 + $0x688] sm:$0xff]
        %v2447 = vld [vmem:[#allocation3 + $0x690] sm:$0xff]
        %v2448 = vld [vmem:[#allocation3 + $0x698] sm:$0xff]
        %v2449 = vld [vmem:[#allocation3 + $0x6a0] sm:$0xff]
        %v2450 = vld [vmem:[#allocation3 + $0x6a8] sm:$0xff]
        %v2451 = vld [vmem:[#allocation3 + $0x6b0] sm:$0xff]
        %v2452 = vld [vmem:[#allocation3 + $0x6b8] sm:$0xff]
        %v2453 = vld [vmem:[#allocation3 + $0x6c0] sm:$0xff]
        %v2454 = vld [vmem:[#allocation3 + $0x6c8] sm:$0xff]
        %v2455 = vld [vmem:[#allocation3 + $0x6d0] sm:$0xff]
        %v2456 = vld [vmem:[#allocation3 + $0x6d8] sm:$0xff]
        %v2457 = vld [vmem:[#allocation3 + $0x6e0] sm:$0xff]
        %v2458 = vld [vmem:[#allocation3 + $0x6e8] sm:$0xff]
        %v2459 = vld [vmem:[#allocation3 + $0x6f0] sm:$0xff]
        %v2460 = vld [vmem:[#allocation3 + $0x6f8] sm:$0xff]
        %v2461 = vld [vmem:[#allocation3 + $0x700] sm:$0xff]
        %v2462 = vld [vmem:[#allocation3 + $0x708] sm:$0xff]
        %v2463 = vld [vmem:[#allocation3 + $0x710] sm:$0xff]
        %v2464 = vld [vmem:[#allocation3 + $0x718] sm:$0xff]
        %v2465 = vld [vmem:[#allocation3 + $0x720] sm:$0xff]
        %v2466 = vld [vmem:[#allocation3 + $0x728] sm:$0xff]
        %v2467 = vld [vmem:[#allocation3 + $0x730] sm:$0xff]
        %v2468 = vld [vmem:[#allocation3 + $0x738] sm:$0xff]
        %v2469 = vld [vmem:[#allocation3 + $0x740] sm:$0xff]
        %v2470 = vld [vmem:[#allocation3 + $0x748] sm:$0xff]
        %v2471 = vld [vmem:[#allocation3 + $0x750] sm:$0xff]
        %v2472 = vld [vmem:[#allocation3 + $0x758] sm:$0xff]
        %v2473 = vld [vmem:[#allocation3 + $0x760] sm:$0xff]
        %v2474 = vld [vmem:[#allocation3 + $0x768] sm:$0xff]
        %v2475 = vld [vmem:[#allocation3 + $0x770] sm:$0xff]
        %v2476 = vld [vmem:[#allocation3 + $0x778] sm:$0xff]
        %v2477 = vld [vmem:[#allocation3 + $0x780] sm:$0xff]
        %v2478 = vld [vmem:[#allocation3 + $0x788] sm:$0xff]
        %v2479 = vld [vmem:[#allocation3 + $0x790] sm:$0xff]
        %v2480 = vld [vmem:[#allocation3 + $0x798] sm:$0xff]
        %v2481 = vld [vmem:[#allocation3 + $0x7a0] sm:$0xff]
        %v2482 = vld [vmem:[#allocation3 + $0x7a8] sm:$0xff]
        %v2483 = vld [vmem:[#allocation3 + $0x7b0] sm:$0xff]
        %v2484 = vld [vmem:[#allocation3 + $0x7b8] sm:$0xff]
        %v2485 = vld [vmem:[#allocation3 + $0x7c0] sm:$0xff]
        %v2486 = vld [vmem:[#allocation3 + $0x7c8] sm:$0xff]
        %v2487 = vld [vmem:[#allocation3 + $0x7d0] sm:$0xff]
        %v2488 = vld [vmem:[#allocation3 + $0x7d8] sm:$0xff]
        %v2489 = vld [vmem:[#allocation3 + $0x7e0] sm:$0xff]
        %v2490 = vld [vmem:[#allocation3 + $0x7e8] sm:$0xff]
        %v2491 = vld [vmem:[#allocation3 + $0x7f0] sm:$0xff]
        %v2492 = vld [vmem:[#allocation3 + $0x7f8] sm:$0xff]
        %v2493 = vld [vmem:[#allocation3 + $0x800] sm:$0xff]
        %v2494 = vld [vmem:[#allocation3 + $0x808] sm:$0xff]
        %v2495 = vld [vmem:[#allocation3 + $0x810] sm:$0xff]
        %v2496 = vld [vmem:[#allocation3 + $0x818] sm:$0xff]
        %v2497 = vld [vmem:[#allocation3 + $0x820] sm:$0xff]
        %v2498 = vld [vmem:[#allocation3 + $0x828] sm:$0xff]
        %v2499 = vld [vmem:[#allocation3 + $0x830] sm:$0xff]
        %v2500 = vld [vmem:[#allocation3 + $0x838] sm:$0xff]
        %v2501 = vld [vmem:[#allocation3 + $0x840] sm:$0xff]
        %v2502 = vld [vmem:[#allocation3 + $0x848] sm:$0xff]
        %v2503 = vld [vmem:[#allocation3 + $0x850] sm:$0xff]
        %v2504 = vld [vmem:[#allocation3 + $0x858] sm:$0xff]
        %v2505 = vld [vmem:[#allocation3 + $0x860] sm:$0xff]
        %v2506 = vld [vmem:[#allocation3 + $0x868] sm:$0xff]
        %v2507 = vld [vmem:[#allocation3 + $0x870] sm:$0xff]
        %v2508 = vld [vmem:[#allocation3 + $0x878] sm:$0xff]
        %v2509 = vld [vmem:[#allocation3 + $0x880] sm:$0xff]
        %v2510 = vld [vmem:[#allocation3 + $0x888] sm:$0xff]
        %v2511 = vld [vmem:[#allocation3 + $0x890] sm:$0xff]
        %v2512 = vld [vmem:[#allocation3 + $0x898] sm:$0xff]
        %v2513 = vld [vmem:[#allocation3 + $0x8a0] sm:$0xff]
        %v2514 = vld [vmem:[#allocation3 + $0x8a8] sm:$0xff]
        %v2515 = vld [vmem:[#allocation3 + $0x8b0] sm:$0xff]
        %v2516 = vld [vmem:[#allocation3 + $0x8b8] sm:$0xff]
        %v2517 = vld [vmem:[#allocation3 + $0x8c0] sm:$0xff]
        %v2518 = vld [vmem:[#allocation3 + $0x8c8] sm:$0xff]
        %v2519 = vld [vmem:[#allocation3 + $0x8d0] sm:$0xff]
        %v2520 = vld [vmem:[#allocation3 + $0x8d8] sm:$0xff]
        %v2521 = vld [vmem:[#allocation3 + $0x8e0] sm:$0xff]
        %v2522 = vld [vmem:[#allocation3 + $0x8e8] sm:$0xff]
        %v2523 = vld [vmem:[#allocation3 + $0x8f0] sm:$0xff]
        %v2524 = vld [vmem:[#allocation3 + $0x8f8] sm:$0xff]
        %v2525 = vld [vmem:[#allocation9] sm:$0xff]
        %v2526 = vld [vmem:[#allocation9 + $0x8] sm:$0xff]
        %v2527 = vld [vmem:[#allocation9 + $0x10] sm:$0xff]
        %v2528 = vld [vmem:[#allocation9 + $0x18] sm:$0xff]
        %v2529 = vld [vmem:[#allocation9 + $0x20] sm:$0xff]
        %v2530 = vld [vmem:[#allocation9 + $0x28] sm:$0xff]
        %v2531 = vld [vmem:[#allocation9 + $0x30] sm:$0xff]
        %v2532 = vld [vmem:[#allocation9 + $0x38] sm:$0xff]
        %v2533 = vld [vmem:[#allocation9 + $0x40] sm:$0xff]
        %v2534 = vld [vmem:[#allocation9 + $0x48] sm:$0xff]
        %v2535 = vld [vmem:[#allocation9 + $0x50] sm:$0xff]
        %v2536 = vld [vmem:[#allocation9 + $0x58] sm:$0xff]
        %v2537 = vld [vmem:[#allocation9 + $0x60] sm:$0xff]
        %v2538 = vld [vmem:[#allocation9 + $0x68] sm:$0xff]
        %v2539 = vld [vmem:[#allocation9 + $0x70] sm:$0xff]
        %v2540 = vld [vmem:[#allocation9 + $0x78] sm:$0xff]
        %v2541 = vld [vmem:[#allocation9 + $0x80] sm:$0xff]
        %v2542 = vld [vmem:[#allocation9 + $0x88] sm:$0xff]
        %v2543 = vld [vmem:[#allocation9 + $0x90] sm:$0xff]
        %v2544 = vld [vmem:[#allocation9 + $0x98] sm:$0xff]
        %v2545 = vld [vmem:[#allocation9 + $0xa0] sm:$0xff]
        %v2546 = vld [vmem:[#allocation9 + $0xa8] sm:$0xff]
        %v2547 = vld [vmem:[#allocation9 + $0xb0] sm:$0xff]
        %v2548 = vld [vmem:[#allocation9 + $0xb8] sm:$0xff]
        %v2549 = vld [vmem:[#allocation9 + $0xc0] sm:$0xff]
        %v2550 = vld [vmem:[#allocation9 + $0xc8] sm:$0xff]
        %v2551 = vld [vmem:[#allocation9 + $0xd0] sm:$0xff]
        %v2552 = vld [vmem:[#allocation9 + $0xd8] sm:$0xff]
        %v2553 = vld [vmem:[#allocation9 + $0xe0] sm:$0xff]
        %v2554 = vld [vmem:[#allocation9 + $0xe8] sm:$0xff]
        %v2555 = vld [vmem:[#allocation9 + $0xf0] sm:$0xff]
        %v2556 = vld [vmem:[#allocation9 + $0xf8] sm:$0xff]
        %v2557 = vld [vmem:[#allocation9 + $0x100] sm:$0xff]
        %v2558 = vld [vmem:[#allocation9 + $0x108] sm:$0xff]
        %v2559 = vld [vmem:[#allocation9 + $0x110] sm:$0xff]
        %v2560 = vld [vmem:[#allocation9 + $0x118] sm:$0xff]
        %v2561 = vld [vmem:[#allocation9 + $0x120] sm:$0xff]
        %v2562 = vld [vmem:[#allocation9 + $0x128] sm:$0xff]
        %v2563 = vld [vmem:[#allocation9 + $0x130] sm:$0xff]
        %v2564 = vld [vmem:[#allocation9 + $0x138] sm:$0xff]
        %v2565 = vld [vmem:[#allocation9 + $0x140] sm:$0xff]
        %v2566 = vld [vmem:[#allocation9 + $0x148] sm:$0xff]
        %v2567 = vld [vmem:[#allocation9 + $0x150] sm:$0xff]
        %v2568 = vld [vmem:[#allocation9 + $0x158] sm:$0xff]
        %v2569 = vld [vmem:[#allocation9 + $0x160] sm:$0xff]
        %v2570 = vld [vmem:[#allocation9 + $0x168] sm:$0xff]
        %v2571 = vld [vmem:[#allocation9 + $0x170] sm:$0xff]
        %v2572 = vld [vmem:[#allocation9 + $0x178] sm:$0xff]
        %v2573 = vld [vmem:[#allocation9 + $0x180] sm:$0xff]
        %v2574 = vld [vmem:[#allocation9 + $0x188] sm:$0xff]
        %v2575 = vld [vmem:[#allocation9 + $0x190] sm:$0xff]
        %v2576 = vld [vmem:[#allocation9 + $0x198] sm:$0xff]
        %v2577 = vld [vmem:[#allocation9 + $0x1a0] sm:$0xff]
        %v2578 = vld [vmem:[#allocation9 + $0x1a8] sm:$0xff]
        %v2579 = vld [vmem:[#allocation9 + $0x1b0] sm:$0xff]
        %v2580 = vld [vmem:[#allocation9 + $0x1b8] sm:$0xff]
        %v2581 = vld [vmem:[#allocation9 + $0x1c0] sm:$0xff]
        %v2582 = vld [vmem:[#allocation9 + $0x1c8] sm:$0xff]
        %v2583 = vld [vmem:[#allocation9 + $0x1d0] sm:$0xff]
        %v2584 = vld [vmem:[#allocation9 + $0x1d8] sm:$0xff]
        %v2585 = vld [vmem:[#allocation9 + $0x1e0] sm:$0xff]
        %v2586 = vld [vmem:[#allocation9 + $0x1e8] sm:$0xff]
        %v2587 = vld [vmem:[#allocation9 + $0x1f0] sm:$0xff]
        %v2588 = vld [vmem:[#allocation9 + $0x1f8] sm:$0xff]
        %v2589 = vld [vmem:[#allocation9 + $0x200] sm:$0xff]
        %v2590 = vld [vmem:[#allocation9 + $0x208] sm:$0xff]
        %v2591 = vld [vmem:[#allocation9 + $0x210] sm:$0xff]
        %v2592 = vld [vmem:[#allocation9 + $0x218] sm:$0xff]
        %v2593 = vld [vmem:[#allocation9 + $0x220] sm:$0xff]
        %v2594 = vld [vmem:[#allocation9 + $0x228] sm:$0xff]
        %v2595 = vld [vmem:[#allocation9 + $0x230] sm:$0xff]
        %v2596 = vld [vmem:[#allocation9 + $0x238] sm:$0xff]
        %v2597 = vld [vmem:[#allocation9 + $0x240] sm:$0xff]
        %v2598 = vld [vmem:[#allocation9 + $0x248] sm:$0xff]
        %v2599 = vld [vmem:[#allocation9 + $0x250] sm:$0xff]
        %v2600 = vld [vmem:[#allocation9 + $0x258] sm:$0xff]
        %v2601 = vld [vmem:[#allocation9 + $0x260] sm:$0xff]
        %v2602 = vld [vmem:[#allocation9 + $0x268] sm:$0xff]
        %v2603 = vld [vmem:[#allocation9 + $0x270] sm:$0xff]
        %v2604 = vld [vmem:[#allocation9 + $0x278] sm:$0xff]
        %v2605 = vld [vmem:[#allocation9 + $0x280] sm:$0xff]
        %v2606 = vld [vmem:[#allocation9 + $0x288] sm:$0xff]
        %v2607 = vld [vmem:[#allocation9 + $0x290] sm:$0xff]
        %v2608 = vld [vmem:[#allocation9 + $0x298] sm:$0xff]
        %v2609 = vld [vmem:[#allocation9 + $0x2a0] sm:$0xff]
        %v2610 = vld [vmem:[#allocation9 + $0x2a8] sm:$0xff]
        %v2611 = vld [vmem:[#allocation9 + $0x2b0] sm:$0xff]
        %v2612 = vld [vmem:[#allocation9 + $0x2b8] sm:$0xff]
        %v2613 = vld [vmem:[#allocation9 + $0x2c0] sm:$0xff]
        %v2614 = vld [vmem:[#allocation9 + $0x2c8] sm:$0xff]
        %v2615 = vld [vmem:[#allocation9 + $0x2d0] sm:$0xff]
        %v2616 = vld [vmem:[#allocation9 + $0x2d8] sm:$0xff]
        %v2617 = vld [vmem:[#allocation9 + $0x2e0] sm:$0xff]
        %v2618 = vld [vmem:[#allocation9 + $0x2e8] sm:$0xff]
        %v2619 = vld [vmem:[#allocation9 + $0x2f0] sm:$0xff]
        %v2620 = vld [vmem:[#allocation9 + $0x2f8] sm:$0xff]
        %v2621 = vld [vmem:[#allocation9 + $0x300] sm:$0xff]
        %v2622 = vld [vmem:[#allocation9 + $0x308] sm:$0xff]
        %v2623 = vld [vmem:[#allocation9 + $0x310] sm:$0xff]
        %v2624 = vld [vmem:[#allocation9 + $0x318] sm:$0xff]
        %v2625 = vld [vmem:[#allocation9 + $0x320] sm:$0xff]
        %v2626 = vld [vmem:[#allocation9 + $0x328] sm:$0xff]
        %v2627 = vld [vmem:[#allocation9 + $0x330] sm:$0xff]
        %v2628 = vld [vmem:[#allocation9 + $0x338] sm:$0xff]
        %v2629 = vld [vmem:[#allocation9 + $0x340] sm:$0xff]
        %v2630 = vld [vmem:[#allocation9 + $0x348] sm:$0xff]
        %v2631 = vld [vmem:[#allocation9 + $0x350] sm:$0xff]
        %v2632 = vld [vmem:[#allocation9 + $0x358] sm:$0xff]
        %v2633 = vld [vmem:[#allocation9 + $0x360] sm:$0xff]
        %v2634 = vld [vmem:[#allocation9 + $0x368] sm:$0xff]
        %v2635 = vld [vmem:[#allocation9 + $0x370] sm:$0xff]
        %v2636 = vld [vmem:[#allocation9 + $0x378] sm:$0xff]
        %v2637 = vld [vmem:[#allocation9 + $0x380] sm:$0xff]
        %v2638 = vld [vmem:[#allocation9 + $0x388] sm:$0xff]
        %v2639 = vld [vmem:[#allocation9 + $0x390] sm:$0xff]
        %v2640 = vld [vmem:[#allocation9 + $0x398] sm:$0xff]
        %v2641 = vld [vmem:[#allocation9 + $0x3a0] sm:$0xff]
        %v2642 = vld [vmem:[#allocation9 + $0x3a8] sm:$0xff]
        %v2643 = vld [vmem:[#allocation9 + $0x3b0] sm:$0xff]
        %v2644 = vld [vmem:[#allocation9 + $0x3b8] sm:$0xff]
        %v2645 = vld [vmem:[#allocation9 + $0x3c0] sm:$0xff]
        %v2646 = vld [vmem:[#allocation9 + $0x3c8] sm:$0xff]
        %v2647 = vld [vmem:[#allocation9 + $0x3d0] sm:$0xff]
        %v2648 = vld [vmem:[#allocation9 + $0x3d8] sm:$0xff]
        %v2649 = vld [vmem:[#allocation9 + $0x3e0] sm:$0xff]
        %v2650 = vld [vmem:[#allocation9 + $0x3e8] sm:$0xff]
        %v2651 = vld [vmem:[#allocation9 + $0x3f0] sm:$0xff]
        %v2652 = vld [vmem:[#allocation9 + $0x3f8] sm:$0xff]
        %v2653 = vld [vmem:[#allocation9 + $0x400] sm:$0xff]
        %v2654 = vld [vmem:[#allocation9 + $0x408] sm:$0xff]
        %v2655 = vld [vmem:[#allocation9 + $0x410] sm:$0xff]
        %v2656 = vld [vmem:[#allocation9 + $0x418] sm:$0xff]
        %v2657 = vld [vmem:[#allocation9 + $0x420] sm:$0xff]
        %v2658 = vld [vmem:[#allocation9 + $0x428] sm:$0xff]
        %v2659 = vld [vmem:[#allocation9 + $0x430] sm:$0xff]
        %v2660 = vld [vmem:[#allocation9 + $0x438] sm:$0xff]
        %v2661 = vld [vmem:[#allocation9 + $0x440] sm:$0xff]
        %v2662 = vld [vmem:[#allocation9 + $0x448] sm:$0xff]
        %v2663 = vld [vmem:[#allocation9 + $0x450] sm:$0xff]
        %v2664 = vld [vmem:[#allocation9 + $0x458] sm:$0xff]
        %v2665 = vld [vmem:[#allocation9 + $0x460] sm:$0xff]
        %v2666 = vld [vmem:[#allocation9 + $0x468] sm:$0xff]
        %v2667 = vld [vmem:[#allocation9 + $0x470] sm:$0xff]
        %v2668 = vld [vmem:[#allocation9 + $0x478] sm:$0xff]
        %2669 = vmatprep.subr.mxu0 0.0
        %2670 = vmatpush1.msra.mxu0 %v2525
        %2671 = vmatprep.subr.mxu0 0.0
        %2672 = vmatpush1.msra.mxu0 %v2526
        %2673 = vmatprep.subr.mxu0 0.0
        %2674 = vmatpush1.msra.mxu0 %v2527
        %2675 = vmatprep.subr.mxu0 0.0
        %2676 = vmatpush1.msra.mxu0 %v2528
        %2677 = vmatprep.subr.mxu0 0.0
        %2678 = vmatpush1.msra.mxu0 %v2529
        %2679 = vmatprep.subr.mxu0 0.0
        %2680 = vmatpush1.msra.mxu0 %v2530
        %2681 = vmatprep.subr.mxu0 0.0
        %2682 = vmatpush1.msra.mxu0 %v2531
        %2683 = vmatprep.subr.mxu0 0.0
        %2684 = vmatpush1.msra.mxu0 %v2532
        %2685 = vmatprep.subr.mxu0 0.0
        %2686 = vmatpush1.msra.mxu0 %v2533
        %2687 = vmatprep.subr.mxu0 0.0
        %2688 = vmatpush1.msra.mxu0 %v2534
        %2689 = vmatprep.subr.mxu0 0.0
        %2690 = vmatpush1.msra.mxu0 %v2535
        %2691 = vmatprep.subr.mxu0 0.0
        %2692 = vmatpush1.msra.mxu0 %v2536
        %2693 = vmatprep.subr.mxu0 0.0
        %2694 = vmatpush1.msra.mxu0 %v2537
        %2695 = vmatprep.subr.mxu0 0.0
        %2696 = vmatpush1.msra.mxu0 %v2538
        %2697 = vmatprep.subr.mxu0 0.0
        %2698 = vmatpush1.msra.mxu0 %v2539
        %2699 = vmatprep.subr.mxu0 0.0
        %2700 = vmatpush1.msra.mxu0 %v2540
        %2701 = vmatprep.subr.mxu0 0.0
        %2702 = vmatpush1.msra.mxu0 %v2541
        %2703 = vmatprep.subr.mxu0 0.0
        %2704 = vmatpush1.msra.mxu0 %v2542
        %2705 = vmatprep.subr.mxu0 0.0
        %2706 = vmatpush1.msra.mxu0 %v2543
        %2707 = vmatprep.subr.mxu0 0.0
        %2708 = vmatpush1.msra.mxu0 %v2544
        %2709 = vmatprep.subr.mxu0 0.0
        %2710 = vmatpush1.msra.mxu0 %v2545
        %2711 = vmatprep.subr.mxu0 0.0
        %2712 = vmatpush1.msra.mxu0 %v2546
        %2713 = vmatprep.subr.mxu0 0.0
        %2714 = vmatpush1.msra.mxu0 %v2547
        %2715 = vmatprep.subr.mxu0 0.0
        %2716 = vmatpush1.msra.mxu0 %v2548
        %2717 = vmatprep.subr.mxu0 0.0
        %2718 = vmatpush1.msra.mxu0 %v2549
        %2719 = vmatprep.subr.mxu0 0.0
        %2720 = vmatpush1.msra.mxu0 %v2550
        %2721 = vmatprep.subr.mxu0 0.0
        %2722 = vmatpush1.msra.mxu0 %v2551
        %2723 = vmatprep.subr.mxu0 0.0
        %2724 = vmatpush1.msra.mxu0 %v2552
        %2725 = vmatprep.subr.mxu0 0.0
        %2726 = vmatpush1.msra.mxu0 %v2553
        %2727 = vmatprep.subr.mxu0 0.0
        %2728 = vmatpush1.msra.mxu0 %v2554
        %2729 = vmatprep.subr.mxu0 0.0
        %2730 = vmatpush1.msra.mxu0 %v2555
        %2731 = vmatprep.subr.mxu0 0.0
        %2732 = vmatpush1.msra.mxu0 %v2556
        %2733 = vmatprep.mubr.f32.mxu0 %v2238
        %2734 = vmatmul.mubr.f32.gmra.mrb[0].mxu0 %v2237
        %v2735 = vpop.f32.mrb[0].mxu0
        %v2736 = vadd.f32 0.0, %v2735
        %v2737 = vpop.f32.mrb[0].mxu0
        %2738 = vmatprep.mubr.f32.mxu0 %v2247
        %2739 = vmatmul.mubr.f32.gmra.mrb[0].mxu0 %v2246
        %v2740 = vpop.f32.mrb[0].mxu0
        %v2741 = vadd.f32 0.0, %v2740
        %v2742 = vpop.f32.mrb[0].mxu0
        %2743 = vmatprep.mubr.f32.mxu0 %v2256
        %2744 = vmatmul.mubr.f32.gmra.mrb[0].mxu0 %v2255
        %v2745 = vpop.f32.mrb[0].mxu0
        %v2746 = vadd.f32 0.0, %v2745
        %v2747 = vpop.f32.mrb[0].mxu0
        %2748 = vmatprep.mubr.f32.mxu0 %v2265
        %2749 = vmatmul.mubr.f32.gmra.mrb[0].mxu0 %v2264
        %v2750 = vpop.f32.mrb[0].mxu0
        %v2751 = vadd.f32 0.0, %v2750
        %v2752 = vpop.f32.mrb[0].mxu0
        %2753 = vmatprep.mubr.f32.mxu0 %v2274
        %2754 = vmatmul.mubr.f32.gmra.mrb[0].mxu0 %v2273
        %v2755 = vpop.f32.mrb[0].mxu0
        %v2756 = vadd.f32 0.0, %v2755
        %v2757 = vpop.f32.mrb[0].mxu0
        %2758 = vmatprep.mubr.f32.mxu0 %v2283
        %2759 = vmatmul.mubr.f32.gmra.mrb[0].mxu0 %v2282
        %v2760 = vpop.f32.mrb[0].mxu0
        %v2761 = vadd.f32 0.0, %v2760
        %v2762 = vpop.f32.mrb[0].mxu0
        %2763 = vmatprep.mubr.f32.mxu0 %v2292
        %2764 = vmatmul.mubr.f32.gmra.mrb[0].mxu0 %v2291
        %v2765 = vpop.f32.mrb[0].mxu0
        %v2766 = vadd.f32 0.0, %v2765
        %v2767 = vpop.f32.mrb[0].mxu0
        %2768 = vmatprep.mubr.f32.mxu0 %v2301
        %2769 = vmatmul.mubr.f32.gmra.mrb[0].mxu0 %v2300
        %v2770 = vpop.f32.mrb[0].mxu0
        %v2771 = vadd.f32 0.0, %v2770
        %v2772 = vpop.f32.mrb[0].mxu0
        %2773 = vmatprep.mubr.f32.mxu0 %v2310
        %2774 = vmatmul.mubr.f32.gmra.mrb[0].mxu0 %v2309
        %v2775 = vpop.f32.mrb[0].mxu0
        %v2776 = vadd.f32 0.0, %v2775
        %v2777 = vpop.f32.mrb[0].mxu0
        %2778 = vmatprep.mubr.f32.mxu0 %v2319
        %2779 = vmatmul.mubr.f32.gmra.mrb[0].mxu0 %v2318
        %v2780 = vpop.f32.mrb[0].mxu0
        %v2781 = vadd.f32 0.0, %v2780
        %v2782 = vpop.f32.mrb[0].mxu0
        %2783 = vmatprep.mubr.f32.mxu0 %v2328
        %2784 = vmatmul.mubr.f32.gmra.mrb[0].mxu0 %v2327
        %v2785 = vpop.f32.mrb[0].mxu0
        %v2786 = vadd.f32 0.0, %v2785
        %v2787 = vpop.f32.mrb[0].mxu0
        %2788 = vmatprep.mubr.f32.mxu0 %v2337
        %2789 = vmatmul.mubr.f32.gmra.mrb[0].mxu0 %v2336
        %v2790 = vpop.f32.mrb[0].mxu0
        %v2791 = vadd.f32 0.0, %v2790
        %v2792 = vpop.f32.mrb[0].mxu0
        %2793 = vmatprep.mubr.f32.mxu0 %v2346
        %2794 = vmatmul.mubr.f32.gmra.mrb[0].mxu0 %v2345
        %v2795 = vpop.f32.mrb[0].mxu0
        %v2796 = vadd.f32 0.0, %v2795
        %v2797 = vpop.f32.mrb[0].mxu0
        %2798 = vmatprep.mubr.f32.mxu0 %v2355
        %2799 = vmatmul.mubr.f32.gmra.mrb[0].mxu0 %v2354
        %v2800 = vpop.f32.mrb[0].mxu0
        %v2801 = vadd.f32 0.0, %v2800
        %v2802 = vpop.f32.mrb[0].mxu0
        %2803 = vmatprep.mubr.f32.mxu0 %v2364
        %2804 = vmatmul.mubr.f32.gmra.mrb[0].mxu0 %v2363
        %v2805 = vpop.f32.mrb[0].mxu0
        %v2806 = vadd.f32 0.0, %v2805
        %v2807 = vpop.f32.mrb[0].mxu0
        %2808 = vmatprep.mubr.f32.mxu0 %v2373
        %2809 = vmatmul.mubr.f32.gmra.mrb[0].mxu0 %v2372
        %v2810 = vpop.f32.mrb[0].mxu0
        %v2811 = vadd.f32 0.0, %v2810
        %v2812 = vpop.f32.mrb[0].mxu0
        %2813 = vmatprep.mubr.f32.mxu0 %v2382
        %2814 = vmatmul.mubr.f32.gmra.mrb[0].mxu0 %v2381
        %v2815 = vpop.f32.mrb[0].mxu0
        %v2816 = vadd.f32 0.0, %v2815
        %v2817 = vpop.f32.mrb[0].mxu0
        %2818 = vmatprep.mubr.f32.mxu0 %v2391
        %2819 = vmatmul.mubr.f32.gmra.mrb[0].mxu0 %v2390
        %v2820 = vpop.f32.mrb[0].mxu0
        %v2821 = vadd.f32 0.0, %v2820
        %v2822 = vpop.f32.mrb[0].mxu0
        %2823 = vmatprep.mubr.f32.mxu0 %v2400
        %2824 = vmatmul.mubr.f32.gmra.mrb[0].mxu0 %v2399
        %v2825 = vpop.f32.mrb[0].mxu0
        %v2826 = vadd.f32 0.0, %v2825
        %v2827 = vpop.f32.mrb[0].mxu0
        %2828 = vmatprep.mubr.f32.mxu0 %v2409
        %2829 = vmatmul.mubr.f32.gmra.mrb[0].mxu0 %v2408
        %v2830 = vpop.f32.mrb[0].mxu0
        %v2831 = vadd.f32 0.0, %v2830
        %v2832 = vpop.f32.mrb[0].mxu0
        %2833 = vmatprep.mubr.f32.mxu0 %v2418
        %2834 = vmatmul.mubr.f32.gmra.mrb[0].mxu0 %v2417
        %v2835 = vpop.f32.mrb[0].mxu0
        %v2836 = vadd.f32 0.0, %v2835
        %v2837 = vpop.f32.mrb[0].mxu0
        %2838 = vmatprep.mubr.f32.mxu0 %v2427
        %2839 = vmatmul.mubr.f32.gmra.mrb[0].mxu0 %v2426
        %v2840 = vpop.f32.mrb[0].mxu0
        %v2841 = vadd.f32 0.0, %v2840
        %v2842 = vpop.f32.mrb[0].mxu0
        %2843 = vmatprep.mubr.f32.mxu0 %v2436
        %2844 = vmatmul.mubr.f32.gmra.mrb[0].mxu0 %v2435
        %v2845 = vpop.f32.mrb[0].mxu0
        %v2846 = vadd.f32 0.0, %v2845
        %v2847 = vpop.f32.mrb[0].mxu0
        %2848 = vmatprep.mubr.f32.mxu0 %v2445
        %2849 = vmatmul.mubr.f32.gmra.mrb[0].mxu0 %v2444
        %v2850 = vpop.f32.mrb[0].mxu0
        %v2851 = vadd.f32 0.0, %v2850
        %v2852 = vpop.f32.mrb[0].mxu0
        %2853 = vmatprep.mubr.f32.mxu0 %v2454
        %2854 = vmatmul.mubr.f32.gmra.mrb[0].mxu0 %v2453
        %v2855 = vpop.f32.mrb[0].mxu0
        %v2856 = vadd.f32 0.0, %v2855
        %v2857 = vpop.f32.mrb[0].mxu0
        %2858 = vmatprep.mubr.f32.mxu0 %v2463
        %2859 = vmatmul.mubr.f32.gmra.mrb[0].mxu0 %v2462
        %v2860 = vpop.f32.mrb[0].mxu0
        %v2861 = vadd.f32 0.0, %v2860
        %v2862 = vpop.f32.mrb[0].mxu0
        %2863 = vmatprep.mubr.f32.mxu0 %v2472
        %2864 = vmatmul.mubr.f32.gmra.mrb[0].mxu0 %v2471
        %v2865 = vpop.f32.mrb[0].mxu0
        %v2866 = vadd.f32 0.0, %v2865
        %v2867 = vpop.f32.mrb[0].mxu0
        %2868 = vmatprep.mubr.f32.mxu0 %v2481
        %2869 = vmatmul.mubr.f32.gmra.mrb[0].mxu0 %v2480
        %v2870 = vpop.f32.mrb[0].mxu0
        %v2871 = vadd.f32 0.0, %v2870
        %v2872 = vpop.f32.mrb[0].mxu0
        %2873 = vmatprep.mubr.f32.mxu0 %v2490
        %2874 = vmatmul.mubr.f32.gmra.mrb[0].mxu0 %v2489
        %v2875 = vpop.f32.mrb[0].mxu0
        %v2876 = vadd.f32 0.0, %v2875
        %v2877 = vpop.f32.mrb[0].mxu0
        %2878 = vmatprep.mubr.f32.mxu0 %v2499
        %2879 = vmatmul.mubr.f32.gmra.mrb[0].mxu0 %v2498
        %v2880 = vpop.f32.mrb[0].mxu0
        %v2881 = vadd.f32 0.0, %v2880
        %v2882 = vpop.f32.mrb[0].mxu0
        %2883 = vmatprep.mubr.f32.mxu0 %v2508
        %2884 = vmatmul.mubr.f32.gmra.mrb[0].mxu0 %v2507
        %v2885 = vpop.f32.mrb[0].mxu0
        %v2886 = vadd.f32 0.0, %v2885
        %v2887 = vpop.f32.mrb[0].mxu0
        %2888 = vmatprep.mubr.f32.mxu0 %v2517
        %2889 = vmatmul.mubr.f32.gmra.mrb[0].mxu0 %v2516
        %v2890 = vpop.f32.mrb[0].mxu0
        %v2891 = vadd.f32 0.0, %v2890
        %v2892 = vpop.f32.mrb[0].mxu0
        %2893 = vdwg.mxu0
        %2894 = vmatprep.subr.mxu0 0.0
        %2895 = vmatpush1.msra.mxu0 %v2557
        %2896 = vmatprep.subr.mxu0 0.0
        %2897 = vmatpush1.msra.mxu0 %v2558
        %2898 = vmatprep.subr.mxu0 0.0
        %2899 = vmatpush1.msra.mxu0 %v2559
        %2900 = vmatprep.subr.mxu0 0.0
        %2901 = vmatpush1.msra.mxu0 %v2560
        %2902 = vmatprep.subr.mxu0 0.0
        %2903 = vmatpush1.msra.mxu0 %v2561
        %2904 = vmatprep.subr.mxu0 0.0
        %2905 = vmatpush1.msra.mxu0 %v2562
        %2906 = vmatprep.subr.mxu0 0.0
        %2907 = vmatpush1.msra.mxu0 %v2563
        %2908 = vmatprep.subr.mxu0 0.0
        %2909 = vmatpush1.msra.mxu0 %v2564
        %2910 = vmatprep.subr.mxu0 0.0
        %2911 = vmatpush1.msra.mxu0 %v2565
        %2912 = vmatprep.subr.mxu0 0.0
        %2913 = vmatpush1.msra.mxu0 %v2566
        %2914 = vmatprep.subr.mxu0 0.0
        %2915 = vmatpush1.msra.mxu0 %v2567
        %2916 = vmatprep.subr.mxu0 0.0
        %2917 = vmatpush1.msra.mxu0 %v2568
        %2918 = vmatprep.subr.mxu0 0.0
        %2919 = vmatpush1.msra.mxu0 %v2569
        %2920 = vmatprep.subr.mxu0 0.0
        %2921 = vmatpush1.msra.mxu0 %v2570
        %2922 = vmatprep.subr.mxu0 0.0
        %2923 = vmatpush1.msra.mxu0 %v2571
        %2924 = vmatprep.subr.mxu0 0.0
        %2925 = vmatpush1.msra.mxu0 %v2572
        %2926 = vmatprep.subr.mxu0 0.0
        %2927 = vmatpush1.msra.mxu0 %v2573
        %2928 = vmatprep.subr.mxu0 0.0
        %2929 = vmatpush1.msra.mxu0 %v2574
        %2930 = vmatprep.subr.mxu0 0.0
        %2931 = vmatpush1.msra.mxu0 %v2575
        %2932 = vmatprep.subr.mxu0 0.0
        %2933 = vmatpush1.msra.mxu0 %v2576
        %2934 = vmatprep.subr.mxu0 0.0
        %2935 = vmatpush1.msra.mxu0 %v2577
        %2936 = vmatprep.subr.mxu0 0.0
        %2937 = vmatpush1.msra.mxu0 %v2578
        %2938 = vmatprep.subr.mxu0 0.0
        %2939 = vmatpush1.msra.mxu0 %v2579
        %2940 = vmatprep.subr.mxu0 0.0
        %2941 = vmatpush1.msra.mxu0 %v2580
        %2942 = vmatprep.subr.mxu0 0.0
        %2943 = vmatpush1.msra.mxu0 %v2581
        %2944 = vmatprep.subr.mxu0 0.0
        %2945 = vmatpush1.msra.mxu0 %v2582
        %2946 = vmatprep.subr.mxu0 0.0
        %2947 = vmatpush1.msra.mxu0 %v2583
        %2948 = vmatprep.subr.mxu0 0.0
        %2949 = vmatpush1.msra.mxu0 %v2584
        %2950 = vmatprep.subr.mxu0 0.0
        %2951 = vmatpush1.msra.mxu0 %v2585
        %2952 = vmatprep.subr.mxu0 0.0
        %2953 = vmatpush1.msra.mxu0 %v2586
        %2954 = vmatprep.subr.mxu0 0.0
        %2955 = vmatpush1.msra.mxu0 %v2587
        %2956 = vmatprep.subr.mxu0 0.0
        %2957 = vmatpush1.msra.mxu0 %v2588
        %2958 = vmatprep.mubr.f32.mxu0 %v2240
        %2959 = vmatmul.mubr.f32.gmra.mrb[0].mxu0 %v2239
        %v2960 = vpop.f32.mrb[0].mxu0
        %v2961 = vadd.f32 %v2736, %v2960
        %v2962 = vpop.f32.mrb[0].mxu0
        %2963 = vmatprep.mubr.f32.mxu0 %v2249
        %2964 = vmatmul.mubr.f32.gmra.mrb[0].mxu0 %v2248
        %v2965 = vpop.f32.mrb[0].mxu0
        %v2966 = vadd.f32 %v2741, %v2965
        %v2967 = vpop.f32.mrb[0].mxu0
        %2968 = vmatprep.mubr.f32.mxu0 %v2258
        %2969 = vmatmul.mubr.f32.gmra.mrb[0].mxu0 %v2257
        %v2970 = vpop.f32.mrb[0].mxu0
        %v2971 = vadd.f32 %v2746, %v2970
        %v2972 = vpop.f32.mrb[0].mxu0
        %2973 = vmatprep.mubr.f32.mxu0 %v2267
        %2974 = vmatmul.mubr.f32.gmra.mrb[0].mxu0 %v2266
        %v2975 = vpop.f32.mrb[0].mxu0
        %v2976 = vadd.f32 %v2751, %v2975
        %v2977 = vpop.f32.mrb[0].mxu0
        %2978 = vmatprep.mubr.f32.mxu0 %v2276
        %2979 = vmatmul.mubr.f32.gmra.mrb[0].mxu0 %v2275
        %v2980 = vpop.f32.mrb[0].mxu0
        %v2981 = vadd.f32 %v2756, %v2980
        %v2982 = vpop.f32.mrb[0].mxu0
        %2983 = vmatprep.mubr.f32.mxu0 %v2285
        %2984 = vmatmul.mubr.f32.gmra.mrb[0].mxu0 %v2284
        %v2985 = vpop.f32.mrb[0].mxu0
        %v2986 = vadd.f32 %v2761, %v2985
        %v2987 = vpop.f32.mrb[0].mxu0
        %2988 = vmatprep.mubr.f32.mxu0 %v2294
        %2989 = vmatmul.mubr.f32.gmra.mrb[0].mxu0 %v2293
        %v2990 = vpop.f32.mrb[0].mxu0
        %v2991 = vadd.f32 %v2766, %v2990
        %v2992 = vpop.f32.mrb[0].mxu0
        %2993 = vmatprep.mubr.f32.mxu0 %v2303
        %2994 = vmatmul.mubr.f32.gmra.mrb[0].mxu0 %v2302
        %v2995 = vpop.f32.mrb[0].mxu0
        %v2996 = vadd.f32 %v2771, %v2995
        %v2997 = vpop.f32.mrb[0].mxu0
        %2998 = vmatprep.mubr.f32.mxu0 %v2312
        %2999 = vmatmul.mubr.f32.gmra.mrb[0].mxu0 %v2311
        %v3000 = vpop.f32.mrb[0].mxu0
        %v3001 = vadd.f32 %v2776, %v3000
        %v3002 = vpop.f32.mrb[0].mxu0
        %3003 = vmatprep.mubr.f32.mxu0 %v2321
        %3004 = vmatmul.mubr.f32.gmra.mrb[0].mxu0 %v2320
        %v3005 = vpop.f32.mrb[0].mxu0
        %v3006 = vadd.f32 %v2781, %v3005
        %v3007 = vpop.f32.mrb[0].mxu0
        %3008 = vmatprep.mubr.f32.mxu0 %v2330
        %3009 = vmatmul.mubr.f32.gmra.mrb[0].mxu0 %v2329
        %v3010 = vpop.f32.mrb[0].mxu0
        %v3011 = vadd.f32 %v2786, %v3010
        %v3012 = vpop.f32.mrb[0].mxu0
        %3013 = vmatprep.mubr.f32.mxu0 %v2339
        %3014 = vmatmul.mubr.f32.gmra.mrb[0].mxu0 %v2338
        %v3015 = vpop.f32.mrb[0].mxu0
        %v3016 = vadd.f32 %v2791, %v3015
        %v3017 = vpop.f32.mrb[0].mxu0
        %3018 = vmatprep.mubr.f32.mxu0 %v2348
        %3019 = vmatmul.mubr.f32.gmra.mrb[0].mxu0 %v2347
        %v3020 = vpop.f32.mrb[0].mxu0
        %v3021 = vadd.f32 %v2796, %v3020
        %v3022 = vpop.f32.mrb[0].mxu0
        %3023 = vmatprep.mubr.f32.mxu0 %v2357
        %3024 = vmatmul.mubr.f32.gmra.mrb[0].mxu0 %v2356
        %v3025 = vpop.f32.mrb[0].mxu0
        %v3026 = vadd.f32 %v2801, %v3025
        %v3027 = vpop.f32.mrb[0].mxu0
        %3028 = vmatprep.mubr.f32.mxu0 %v2366
        %3029 = vmatmul.mubr.f32.gmra.mrb[0].mxu0 %v2365
        %v3030 = vpop.f32.mrb[0].mxu0
        %v3031 = vadd.f32 %v2806, %v3030
        %v3032 = vpop.f32.mrb[0].mxu0
        %3033 = vmatprep.mubr.f32.mxu0 %v2375
        %3034 = vmatmul.mubr.f32.gmra.mrb[0].mxu0 %v2374
        %v3035 = vpop.f32.mrb[0].mxu0
        %v3036 = vadd.f32 %v2811, %v3035
        %v3037 = vpop.f32.mrb[0].mxu0
        %3038 = vmatprep.mubr.f32.mxu0 %v2384
        %3039 = vmatmul.mubr.f32.gmra.mrb[0].mxu0 %v2383
        %v3040 = vpop.f32.mrb[0].mxu0
        %v3041 = vadd.f32 %v2816, %v3040
        %v3042 = vpop.f32.mrb[0].mxu0
        %3043 = vmatprep.mubr.f32.mxu0 %v2393
        %3044 = vmatmul.mubr.f32.gmra.mrb[0].mxu0 %v2392
        %v3045 = vpop.f32.mrb[0].mxu0
        %v3046 = vadd.f32 %v2821, %v3045
        %v3047 = vpop.f32.mrb[0].mxu0
        %3048 = vmatprep.mubr.f32.mxu0 %v2402
        %3049 = vmatmul.mubr.f32.gmra.mrb[0].mxu0 %v2401
        %v3050 = vpop.f32.mrb[0].mxu0
        %v3051 = vadd.f32 %v2826, %v3050
        %v3052 = vpop.f32.mrb[0].mxu0
        %3053 = vmatprep.mubr.f32.mxu0 %v2411
        %3054 = vmatmul.mubr.f32.gmra.mrb[0].mxu0 %v2410
        %v3055 = vpop.f32.mrb[0].mxu0
        %v3056 = vadd.f32 %v2831, %v3055
        %v3057 = vpop.f32.mrb[0].mxu0
        %3058 = vmatprep.mubr.f32.mxu0 %v2420
        %3059 = vmatmul.mubr.f32.gmra.mrb[0].mxu0 %v2419
        %v3060 = vpop.f32.mrb[0].mxu0
        %v3061 = vadd.f32 %v2836, %v3060
        %v3062 = vpop.f32.mrb[0].mxu0
        %3063 = vmatprep.mubr.f32.mxu0 %v2429
        %3064 = vmatmul.mubr.f32.gmra.mrb[0].mxu0 %v2428
        %v3065 = vpop.f32.mrb[0].mxu0
        %v3066 = vadd.f32 %v2841, %v3065
        %v3067 = vpop.f32.mrb[0].mxu0
        %3068 = vmatprep.mubr.f32.mxu0 %v2438
        %3069 = vmatmul.mubr.f32.gmra.mrb[0].mxu0 %v2437
        %v3070 = vpop.f32.mrb[0].mxu0
        %v3071 = vadd.f32 %v2846, %v3070
        %v3072 = vpop.f32.mrb[0].mxu0
        %3073 = vmatprep.mubr.f32.mxu0 %v2447
        %3074 = vmatmul.mubr.f32.gmra.mrb[0].mxu0 %v2446
        %v3075 = vpop.f32.mrb[0].mxu0
        %v3076 = vadd.f32 %v2851, %v3075
        %v3077 = vpop.f32.mrb[0].mxu0
        %3078 = vmatprep.mubr.f32.mxu0 %v2456
        %3079 = vmatmul.mubr.f32.gmra.mrb[0].mxu0 %v2455
        %v3080 = vpop.f32.mrb[0].mxu0
        %v3081 = vadd.f32 %v2856, %v3080
        %v3082 = vpop.f32.mrb[0].mxu0
        %3083 = vmatprep.mubr.f32.mxu0 %v2465
        %3084 = vmatmul.mubr.f32.gmra.mrb[0].mxu0 %v2464
        %v3085 = vpop.f32.mrb[0].mxu0
        %v3086 = vadd.f32 %v2861, %v3085
        %v3087 = vpop.f32.mrb[0].mxu0
        %3088 = vmatprep.mubr.f32.mxu0 %v2474
        %3089 = vmatmul.mubr.f32.gmra.mrb[0].mxu0 %v2473
        %v3090 = vpop.f32.mrb[0].mxu0
        %v3091 = vadd.f32 %v2866, %v3090
        %v3092 = vpop.f32.mrb[0].mxu0
        %3093 = vmatprep.mubr.f32.mxu0 %v2483
        %3094 = vmatmul.mubr.f32.gmra.mrb[0].mxu0 %v2482
        %v3095 = vpop.f32.mrb[0].mxu0
        %v3096 = vadd.f32 %v2871, %v3095
        %v3097 = vpop.f32.mrb[0].mxu0
        %3098 = vmatprep.mubr.f32.mxu0 %v2492
        %3099 = vmatmul.mubr.f32.gmra.mrb[0].mxu0 %v2491
        %v3100 = vpop.f32.mrb[0].mxu0
        %v3101 = vadd.f32 %v2876, %v3100
        %v3102 = vpop.f32.mrb[0].mxu0
        %3103 = vmatprep.mubr.f32.mxu0 %v2501
        %3104 = vmatmul.mubr.f32.gmra.mrb[0].mxu0 %v2500
        %v3105 = vpop.f32.mrb[0].mxu0
        %v3106 = vadd.f32 %v2881, %v3105
        %v3107 = vpop.f32.mrb[0].mxu0
        %3108 = vmatprep.mubr.f32.mxu0 %v2510
        %3109 = vmatmul.mubr.f32.gmra.mrb[0].mxu0 %v2509
        %v3110 = vpop.f32.mrb[0].mxu0
        %v3111 = vadd.f32 %v2886, %v3110
        %v3112 = vpop.f32.mrb[0].mxu0
        %3113 = vmatprep.mubr.f32.mxu0 %v2519
        %3114 = vmatmul.mubr.f32.gmra.mrb[0].mxu0 %v2518
        %v3115 = vpop.f32.mrb[0].mxu0
        %v3116 = vadd.f32 %v2891, %v3115
        %v3117 = vpop.f32.mrb[0].mxu0
        %3118 = vdwg.mxu0
        %3119 = vmatprep.subr.mxu0 0.0
        %3120 = vmatpush1.msra.mxu0 %v2589
        %3121 = vmatprep.subr.mxu0 0.0
        %3122 = vmatpush1.msra.mxu0 %v2590
        %3123 = vmatprep.subr.mxu0 0.0
        %3124 = vmatpush1.msra.mxu0 %v2591
        %3125 = vmatprep.subr.mxu0 0.0
        %3126 = vmatpush1.msra.mxu0 %v2592
        %3127 = vmatprep.subr.mxu0 0.0
        %3128 = vmatpush1.msra.mxu0 %v2593
        %3129 = vmatprep.subr.mxu0 0.0
        %3130 = vmatpush1.msra.mxu0 %v2594
        %3131 = vmatprep.subr.mxu0 0.0
        %3132 = vmatpush1.msra.mxu0 %v2595
        %3133 = vmatprep.subr.mxu0 0.0
        %3134 = vmatpush1.msra.mxu0 %v2596
        %3135 = vmatprep.subr.mxu0 0.0
        %3136 = vmatpush1.msra.mxu0 %v2597
        %3137 = vmatprep.subr.mxu0 0.0
        %3138 = vmatpush1.msra.mxu0 %v2598
        %3139 = vmatprep.subr.mxu0 0.0
        %3140 = vmatpush1.msra.mxu0 %v2599
        %3141 = vmatprep.subr.mxu0 0.0
        %3142 = vmatpush1.msra.mxu0 %v2600
        %3143 = vmatprep.subr.mxu0 0.0
        %3144 = vmatpush1.msra.mxu0 %v2601
        %3145 = vmatprep.subr.mxu0 0.0
        %3146 = vmatpush1.msra.mxu0 %v2602
        %3147 = vmatprep.subr.mxu0 0.0
        %3148 = vmatpush1.msra.mxu0 %v2603
        %3149 = vmatprep.subr.mxu0 0.0
        %3150 = vmatpush1.msra.mxu0 %v2604
        %3151 = vmatprep.subr.mxu0 0.0
        %3152 = vmatpush1.msra.mxu0 %v2605
        %3153 = vmatprep.subr.mxu0 0.0
        %3154 = vmatpush1.msra.mxu0 %v2606
        %3155 = vmatprep.subr.mxu0 0.0
        %3156 = vmatpush1.msra.mxu0 %v2607
        %3157 = vmatprep.subr.mxu0 0.0
        %3158 = vmatpush1.msra.mxu0 %v2608
        %3159 = vmatprep.subr.mxu0 0.0
        %3160 = vmatpush1.msra.mxu0 %v2609
        %3161 = vmatprep.subr.mxu0 0.0
        %3162 = vmatpush1.msra.mxu0 %v2610
        %3163 = vmatprep.subr.mxu0 0.0
        %3164 = vmatpush1.msra.mxu0 %v2611
        %3165 = vmatprep.subr.mxu0 0.0
        %3166 = vmatpush1.msra.mxu0 %v2612
        %3167 = vmatprep.subr.mxu0 0.0
        %3168 = vmatpush1.msra.mxu0 %v2613
        %3169 = vmatprep.subr.mxu0 0.0
        %3170 = vmatpush1.msra.mxu0 %v2614
        %3171 = vmatprep.subr.mxu0 0.0
        %3172 = vmatpush1.msra.mxu0 %v2615
        %3173 = vmatprep.subr.mxu0 0.0
        %3174 = vmatpush1.msra.mxu0 %v2616
        %3175 = vmatprep.subr.mxu0 0.0
        %3176 = vmatpush1.msra.mxu0 %v2617
        %3177 = vmatprep.subr.mxu0 0.0
        %3178 = vmatpush1.msra.mxu0 %v2618
        %3179 = vmatprep.subr.mxu0 0.0
        %3180 = vmatpush1.msra.mxu0 %v2619
        %3181 = vmatprep.subr.mxu0 0.0
        %3182 = vmatpush1.msra.mxu0 %v2620
        %3183 = vmatprep.mubr.f32.mxu0 %v2242
        %3184 = vmatmul.mubr.f32.gmra.mrb[0].mxu0 %v2241
        %v3185 = vpop.f32.mrb[0].mxu0
        %v3186 = vadd.f32 %v2961, %v3185
        %v3187 = vpop.f32.mrb[0].mxu0
        %3188 = vmatprep.mubr.f32.mxu0 %v2251
        %3189 = vmatmul.mubr.f32.gmra.mrb[0].mxu0 %v2250
        %v3190 = vpop.f32.mrb[0].mxu0
        %v3191 = vadd.f32 %v2966, %v3190
        %v3192 = vpop.f32.mrb[0].mxu0
        %3193 = vmatprep.mubr.f32.mxu0 %v2260
        %3194 = vmatmul.mubr.f32.gmra.mrb[0].mxu0 %v2259
        %v3195 = vpop.f32.mrb[0].mxu0
        %v3196 = vadd.f32 %v2971, %v3195
        %v3197 = vpop.f32.mrb[0].mxu0
        %3198 = vmatprep.mubr.f32.mxu0 %v2269
        %3199 = vmatmul.mubr.f32.gmra.mrb[0].mxu0 %v2268
        %v3200 = vpop.f32.mrb[0].mxu0
        %v3201 = vadd.f32 %v2976, %v3200
        %v3202 = vpop.f32.mrb[0].mxu0
        %3203 = vmatprep.mubr.f32.mxu0 %v2278
        %3204 = vmatmul.mubr.f32.gmra.mrb[0].mxu0 %v2277
        %v3205 = vpop.f32.mrb[0].mxu0
        %v3206 = vadd.f32 %v2981, %v3205
        %v3207 = vpop.f32.mrb[0].mxu0
        %3208 = vmatprep.mubr.f32.mxu0 %v2287
        %3209 = vmatmul.mubr.f32.gmra.mrb[0].mxu0 %v2286
        %v3210 = vpop.f32.mrb[0].mxu0
        %v3211 = vadd.f32 %v2986, %v3210
        %v3212 = vpop.f32.mrb[0].mxu0
        %3213 = vmatprep.mubr.f32.mxu0 %v2296
        %3214 = vmatmul.mubr.f32.gmra.mrb[0].mxu0 %v2295
        %v3215 = vpop.f32.mrb[0].mxu0
        %v3216 = vadd.f32 %v2991, %v3215
        %v3217 = vpop.f32.mrb[0].mxu0
        %3218 = vmatprep.mubr.f32.mxu0 %v2305
        %3219 = vmatmul.mubr.f32.gmra.mrb[0].mxu0 %v2304
        %v3220 = vpop.f32.mrb[0].mxu0
        %v3221 = vadd.f32 %v2996, %v3220
        %v3222 = vpop.f32.mrb[0].mxu0
        %3223 = vmatprep.mubr.f32.mxu0 %v2314
        %3224 = vmatmul.mubr.f32.gmra.mrb[0].mxu0 %v2313
        %v3225 = vpop.f32.mrb[0].mxu0
        %v3226 = vadd.f32 %v3001, %v3225
        %v3227 = vpop.f32.mrb[0].mxu0
        %3228 = vmatprep.mubr.f32.mxu0 %v2323
        %3229 = vmatmul.mubr.f32.gmra.mrb[0].mxu0 %v2322
        %v3230 = vpop.f32.mrb[0].mxu0
        %v3231 = vadd.f32 %v3006, %v3230
        %v3232 = vpop.f32.mrb[0].mxu0
        %3233 = vmatprep.mubr.f32.mxu0 %v2332
        %3234 = vmatmul.mubr.f32.gmra.mrb[0].mxu0 %v2331
        %v3235 = vpop.f32.mrb[0].mxu0
        %v3236 = vadd.f32 %v3011, %v3235
        %v3237 = vpop.f32.mrb[0].mxu0
        %3238 = vmatprep.mubr.f32.mxu0 %v2341
        %3239 = vmatmul.mubr.f32.gmra.mrb[0].mxu0 %v2340
        %v3240 = vpop.f32.mrb[0].mxu0
        %v3241 = vadd.f32 %v3016, %v3240
        %v3242 = vpop.f32.mrb[0].mxu0
        %3243 = vmatprep.mubr.f32.mxu0 %v2350
        %3244 = vmatmul.mubr.f32.gmra.mrb[0].mxu0 %v2349
        %v3245 = vpop.f32.mrb[0].mxu0
        %v3246 = vadd.f32 %v3021, %v3245
        %v3247 = vpop.f32.mrb[0].mxu0
        %3248 = vmatprep.mubr.f32.mxu0 %v2359
        %3249 = vmatmul.mubr.f32.gmra.mrb[0].mxu0 %v2358
        %v3250 = vpop.f32.mrb[0].mxu0
        %v3251 = vadd.f32 %v3026, %v3250
        %v3252 = vpop.f32.mrb[0].mxu0
        %3253 = vmatprep.mubr.f32.mxu0 %v2368
        %3254 = vmatmul.mubr.f32.gmra.mrb[0].mxu0 %v2367
        %v3255 = vpop.f32.mrb[0].mxu0
        %v3256 = vadd.f32 %v3031, %v3255
        %v3257 = vpop.f32.mrb[0].mxu0
        %3258 = vmatprep.mubr.f32.mxu0 %v2377
        %3259 = vmatmul.mubr.f32.gmra.mrb[0].mxu0 %v2376
        %v3260 = vpop.f32.mrb[0].mxu0
        %v3261 = vadd.f32 %v3036, %v3260
        %v3262 = vpop.f32.mrb[0].mxu0
        %3263 = vmatprep.mubr.f32.mxu0 %v2386
        %3264 = vmatmul.mubr.f32.gmra.mrb[0].mxu0 %v2385
        %v3265 = vpop.f32.mrb[0].mxu0
        %v3266 = vadd.f32 %v3041, %v3265
        %v3267 = vpop.f32.mrb[0].mxu0
        %3268 = vmatprep.mubr.f32.mxu0 %v2395
        %3269 = vmatmul.mubr.f32.gmra.mrb[0].mxu0 %v2394
        %v3270 = vpop.f32.mrb[0].mxu0
        %v3271 = vadd.f32 %v3046, %v3270
        %v3272 = vpop.f32.mrb[0].mxu0
        %3273 = vmatprep.mubr.f32.mxu0 %v2404
        %3274 = vmatmul.mubr.f32.gmra.mrb[0].mxu0 %v2403
        %v3275 = vpop.f32.mrb[0].mxu0
        %v3276 = vadd.f32 %v3051, %v3275
        %v3277 = vpop.f32.mrb[0].mxu0
        %3278 = vmatprep.mubr.f32.mxu0 %v2413
        %3279 = vmatmul.mubr.f32.gmra.mrb[0].mxu0 %v2412
        %v3280 = vpop.f32.mrb[0].mxu0
        %v3281 = vadd.f32 %v3056, %v3280
        %v3282 = vpop.f32.mrb[0].mxu0
        %3283 = vmatprep.mubr.f32.mxu0 %v2422
        %3284 = vmatmul.mubr.f32.gmra.mrb[0].mxu0 %v2421
        %v3285 = vpop.f32.mrb[0].mxu0
        %v3286 = vadd.f32 %v3061, %v3285
        %v3287 = vpop.f32.mrb[0].mxu0
        %3288 = vmatprep.mubr.f32.mxu0 %v2431
        %3289 = vmatmul.mubr.f32.gmra.mrb[0].mxu0 %v2430
        %v3290 = vpop.f32.mrb[0].mxu0
        %v3291 = vadd.f32 %v3066, %v3290
        %v3292 = vpop.f32.mrb[0].mxu0
        %3293 = vmatprep.mubr.f32.mxu0 %v2440
        %3294 = vmatmul.mubr.f32.gmra.mrb[0].mxu0 %v2439
        %v3295 = vpop.f32.mrb[0].mxu0
        %v3296 = vadd.f32 %v3071, %v3295
        %v3297 = vpop.f32.mrb[0].mxu0
        %3298 = vmatprep.mubr.f32.mxu0 %v2449
        %3299 = vmatmul.mubr.f32.gmra.mrb[0].mxu0 %v2448
        %v3300 = vpop.f32.mrb[0].mxu0
        %v3301 = vadd.f32 %v3076, %v3300
        %v3302 = vpop.f32.mrb[0].mxu0
        %3303 = vmatprep.mubr.f32.mxu0 %v2458
        %3304 = vmatmul.mubr.f32.gmra.mrb[0].mxu0 %v2457
        %v3305 = vpop.f32.mrb[0].mxu0
        %v3306 = vadd.f32 %v3081, %v3305
        %v3307 = vpop.f32.mrb[0].mxu0
        %3308 = vmatprep.mubr.f32.mxu0 %v2467
        %3309 = vmatmul.mubr.f32.gmra.mrb[0].mxu0 %v2466
        %v3310 = vpop.f32.mrb[0].mxu0
        %v3311 = vadd.f32 %v3086, %v3310
        %v3312 = vpop.f32.mrb[0].mxu0
        %3313 = vmatprep.mubr.f32.mxu0 %v2476
        %3314 = vmatmul.mubr.f32.gmra.mrb[0].mxu0 %v2475
        %v3315 = vpop.f32.mrb[0].mxu0
        %v3316 = vadd.f32 %v3091, %v3315
        %v3317 = vpop.f32.mrb[0].mxu0
        %3318 = vmatprep.mubr.f32.mxu0 %v2485
        %3319 = vmatmul.mubr.f32.gmra.mrb[0].mxu0 %v2484
        %v3320 = vpop.f32.mrb[0].mxu0
        %v3321 = vadd.f32 %v3096, %v3320
        %v3322 = vpop.f32.mrb[0].mxu0
        %3323 = vmatprep.mubr.f32.mxu0 %v2494
        %3324 = vmatmul.mubr.f32.gmra.mrb[0].mxu0 %v2493
        %v3325 = vpop.f32.mrb[0].mxu0
        %v3326 = vadd.f32 %v3101, %v3325
        %v3327 = vpop.f32.mrb[0].mxu0
        %3328 = vmatprep.mubr.f32.mxu0 %v2503
        %3329 = vmatmul.mubr.f32.gmra.mrb[0].mxu0 %v2502
        %v3330 = vpop.f32.mrb[0].mxu0
        %v3331 = vadd.f32 %v3106, %v3330
        %v3332 = vpop.f32.mrb[0].mxu0
        %3333 = vmatprep.mubr.f32.mxu0 %v2512
        %3334 = vmatmul.mubr.f32.gmra.mrb[0].mxu0 %v2511
        %v3335 = vpop.f32.mrb[0].mxu0
        %v3336 = vadd.f32 %v3111, %v3335
        %v3337 = vpop.f32.mrb[0].mxu0
        %3338 = vmatprep.mubr.f32.mxu0 %v2521
        %3339 = vmatmul.mubr.f32.gmra.mrb[0].mxu0 %v2520
        %v3340 = vpop.f32.mrb[0].mxu0
        %v3341 = vadd.f32 %v3116, %v3340
        %v3342 = vpop.f32.mrb[0].mxu0
        %3343 = vdwg.mxu0
        %3344 = vmatprep.subr.mxu0 0.0
        %3345 = vmatpush1.msra.mxu0 %v2621
        %3346 = vmatprep.subr.mxu0 0.0
        %3347 = vmatpush1.msra.mxu0 %v2622
        %3348 = vmatprep.subr.mxu0 0.0
        %3349 = vmatpush1.msra.mxu0 %v2623
        %3350 = vmatprep.subr.mxu0 0.0
        %3351 = vmatpush1.msra.mxu0 %v2624
        %3352 = vmatprep.subr.mxu0 0.0
        %3353 = vmatpush1.msra.mxu0 %v2625
        %3354 = vmatprep.subr.mxu0 0.0
        %3355 = vmatpush1.msra.mxu0 %v2626
        %3356 = vmatprep.subr.mxu0 0.0
        %3357 = vmatpush1.msra.mxu0 %v2627
        %3358 = vmatprep.subr.mxu0 0.0
        %3359 = vmatpush1.msra.mxu0 %v2628
        %3360 = vmatprep.subr.mxu0 0.0
        %3361 = vmatpush1.msra.mxu0 %v2629
        %3362 = vmatprep.subr.mxu0 0.0
        %3363 = vmatpush1.msra.mxu0 %v2630
        %3364 = vmatprep.subr.mxu0 0.0
        %3365 = vmatpush1.msra.mxu0 %v2631
        %3366 = vmatprep.subr.mxu0 0.0
        %3367 = vmatpush1.msra.mxu0 %v2632
        %3368 = vmatprep.subr.mxu0 0.0
        %3369 = vmatpush1.msra.mxu0 %v2633
        %3370 = vmatprep.subr.mxu0 0.0
        %3371 = vmatpush1.msra.mxu0 %v2634
        %3372 = vmatprep.subr.mxu0 0.0
        %3373 = vmatpush1.msra.mxu0 %v2635
        %3374 = vmatprep.subr.mxu0 0.0
        %3375 = vmatpush1.msra.mxu0 %v2636
        %3376 = vmatprep.subr.mxu0 0.0
        %3377 = vmatpush1.msra.mxu0 %v2637
        %3378 = vmatprep.subr.mxu0 0.0
        %3379 = vmatpush1.msra.mxu0 %v2638
        %3380 = vmatprep.subr.mxu0 0.0
        %3381 = vmatpush1.msra.mxu0 %v2639
        %3382 = vmatprep.subr.mxu0 0.0
        %3383 = vmatpush1.msra.mxu0 %v2640
        %3384 = vmatprep.subr.mxu0 0.0
        %3385 = vmatpush1.msra.mxu0 %v2641
        %3386 = vmatprep.subr.mxu0 0.0
        %3387 = vmatpush1.msra.mxu0 %v2642
        %3388 = vmatprep.subr.mxu0 0.0
        %3389 = vmatpush1.msra.mxu0 %v2643
        %3390 = vmatprep.subr.mxu0 0.0
        %3391 = vmatpush1.msra.mxu0 %v2644
        %3392 = vmatprep.subr.mxu0 0.0
        %3393 = vmatpush1.msra.mxu0 %v2645
        %3394 = vmatprep.subr.mxu0 0.0
        %3395 = vmatpush1.msra.mxu0 %v2646
        %3396 = vmatprep.subr.mxu0 0.0
        %3397 = vmatpush1.msra.mxu0 %v2647
        %3398 = vmatprep.subr.mxu0 0.0
        %3399 = vmatpush1.msra.mxu0 %v2648
        %3400 = vmatprep.subr.mxu0 0.0
        %3401 = vmatpush1.msra.mxu0 %v2649
        %3402 = vmatprep.subr.mxu0 0.0
        %3403 = vmatpush1.msra.mxu0 %v2650
        %3404 = vmatprep.subr.mxu0 0.0
        %3405 = vmatpush1.msra.mxu0 %v2651
        %3406 = vmatprep.subr.mxu0 0.0
        %3407 = vmatpush1.msra.mxu0 %v2652
        %3408 = vmatprep.mubr.f32.mxu0 %v2244
        %3409 = vmatmul.mubr.f32.gmra.mrb[0].mxu0 %v2243
        %v3410 = vpop.f32.mrb[0].mxu0
        %v3411 = vadd.f32 %v3186, %v3410
        %v3412 = vpop.f32.mrb[0].mxu0
        %3413 = vmatprep.mubr.f32.mxu0 %v2253
        %3414 = vmatmul.mubr.f32.gmra.mrb[0].mxu0 %v2252
        %v3415 = vpop.f32.mrb[0].mxu0
        %v3416 = vadd.f32 %v3191, %v3415
        %v3417 = vpop.f32.mrb[0].mxu0
        %3418 = vmatprep.mubr.f32.mxu0 %v2262
        %3419 = vmatmul.mubr.f32.gmra.mrb[0].mxu0 %v2261
        %v3420 = vpop.f32.mrb[0].mxu0
        %v3421 = vadd.f32 %v3196, %v3420
        %v3422 = vpop.f32.mrb[0].mxu0
        %3423 = vmatprep.mubr.f32.mxu0 %v2271
        %3424 = vmatmul.mubr.f32.gmra.mrb[0].mxu0 %v2270
        %v3425 = vpop.f32.mrb[0].mxu0
        %v3426 = vadd.f32 %v3201, %v3425
        %v3427 = vpop.f32.mrb[0].mxu0
        %3428 = vmatprep.mubr.f32.mxu0 %v2280
        %3429 = vmatmul.mubr.f32.gmra.mrb[0].mxu0 %v2279
        %v3430 = vpop.f32.mrb[0].mxu0
        %v3431 = vadd.f32 %v3206, %v3430
        %v3432 = vpop.f32.mrb[0].mxu0
        %3433 = vmatprep.mubr.f32.mxu0 %v2289
        %3434 = vmatmul.mubr.f32.gmra.mrb[0].mxu0 %v2288
        %v3435 = vpop.f32.mrb[0].mxu0
        %v3436 = vadd.f32 %v3211, %v3435
        %v3437 = vpop.f32.mrb[0].mxu0
        %3438 = vmatprep.mubr.f32.mxu0 %v2298
        %3439 = vmatmul.mubr.f32.gmra.mrb[0].mxu0 %v2297
        %v3440 = vpop.f32.mrb[0].mxu0
        %v3441 = vadd.f32 %v3216, %v3440
        %v3442 = vpop.f32.mrb[0].mxu0
        %3443 = vmatprep.mubr.f32.mxu0 %v2307
        %3444 = vmatmul.mubr.f32.gmra.mrb[0].mxu0 %v2306
        %v3445 = vpop.f32.mrb[0].mxu0
        %v3446 = vadd.f32 %v3221, %v3445
        %v3447 = vpop.f32.mrb[0].mxu0
        %3448 = vmatprep.mubr.f32.mxu0 %v2316
        %3449 = vmatmul.mubr.f32.gmra.mrb[0].mxu0 %v2315
        %v3450 = vpop.f32.mrb[0].mxu0
        %v3451 = vadd.f32 %v3226, %v3450
        %v3452 = vpop.f32.mrb[0].mxu0
        %3453 = vmatprep.mubr.f32.mxu0 %v2325
        %3454 = vmatmul.mubr.f32.gmra.mrb[0].mxu0 %v2324
        %v3455 = vpop.f32.mrb[0].mxu0
        %v3456 = vadd.f32 %v3231, %v3455
        %v3457 = vpop.f32.mrb[0].mxu0
        %3458 = vmatprep.mubr.f32.mxu0 %v2334
        %3459 = vmatmul.mubr.f32.gmra.mrb[0].mxu0 %v2333
        %v3460 = vpop.f32.mrb[0].mxu0
        %v3461 = vadd.f32 %v3236, %v3460
        %v3462 = vpop.f32.mrb[0].mxu0
        %3463 = vmatprep.mubr.f32.mxu0 %v2343
        %3464 = vmatmul.mubr.f32.gmra.mrb[0].mxu0 %v2342
        %v3465 = vpop.f32.mrb[0].mxu0
        %v3466 = vadd.f32 %v3241, %v3465
        %v3467 = vpop.f32.mrb[0].mxu0
        %3468 = vmatprep.mubr.f32.mxu0 %v2352
        %3469 = vmatmul.mubr.f32.gmra.mrb[0].mxu0 %v2351
        %v3470 = vpop.f32.mrb[0].mxu0
        %v3471 = vadd.f32 %v3246, %v3470
        %v3472 = vpop.f32.mrb[0].mxu0
        %3473 = vmatprep.mubr.f32.mxu0 %v2361
        %3474 = vmatmul.mubr.f32.gmra.mrb[0].mxu0 %v2360
        %v3475 = vpop.f32.mrb[0].mxu0
        %v3476 = vadd.f32 %v3251, %v3475
        %v3477 = vpop.f32.mrb[0].mxu0
        %3478 = vmatprep.mubr.f32.mxu0 %v2370
        %3479 = vmatmul.mubr.f32.gmra.mrb[0].mxu0 %v2369
        %v3480 = vpop.f32.mrb[0].mxu0
        %v3481 = vadd.f32 %v3256, %v3480
        %v3482 = vpop.f32.mrb[0].mxu0
        %3483 = vmatprep.mubr.f32.mxu0 %v2379
        %3484 = vmatmul.mubr.f32.gmra.mrb[0].mxu0 %v2378
        %v3485 = vpop.f32.mrb[0].mxu0
        %v3486 = vadd.f32 %v3261, %v3485
        %v3487 = vpop.f32.mrb[0].mxu0
        %3488 = vmatprep.mubr.f32.mxu0 %v2388
        %3489 = vmatmul.mubr.f32.gmra.mrb[0].mxu0 %v2387
        %v3490 = vpop.f32.mrb[0].mxu0
        %v3491 = vadd.f32 %v3266, %v3490
        %v3492 = vpop.f32.mrb[0].mxu0
        %3493 = vmatprep.mubr.f32.mxu0 %v2397
        %3494 = vmatmul.mubr.f32.gmra.mrb[0].mxu0 %v2396
        %v3495 = vpop.f32.mrb[0].mxu0
        %v3496 = vadd.f32 %v3271, %v3495
        %v3497 = vpop.f32.mrb[0].mxu0
        %3498 = vmatprep.mubr.f32.mxu0 %v2406
        %3499 = vmatmul.mubr.f32.gmra.mrb[0].mxu0 %v2405
        %v3500 = vpop.f32.mrb[0].mxu0
        %v3501 = vadd.f32 %v3276, %v3500
        %v3502 = vpop.f32.mrb[0].mxu0
        %3503 = vmatprep.mubr.f32.mxu0 %v2415
        %3504 = vmatmul.mubr.f32.gmra.mrb[0].mxu0 %v2414
        %v3505 = vpop.f32.mrb[0].mxu0
        %v3506 = vadd.f32 %v3281, %v3505
        %v3507 = vpop.f32.mrb[0].mxu0
        %3508 = vmatprep.mubr.f32.mxu0 %v2424
        %3509 = vmatmul.mubr.f32.gmra.mrb[0].mxu0 %v2423
        %v3510 = vpop.f32.mrb[0].mxu0
        %v3511 = vadd.f32 %v3286, %v3510
        %v3512 = vpop.f32.mrb[0].mxu0
        %3513 = vmatprep.mubr.f32.mxu0 %v2433
        %3514 = vmatmul.mubr.f32.gmra.mrb[0].mxu0 %v2432
        %v3515 = vpop.f32.mrb[0].mxu0
        %v3516 = vadd.f32 %v3291, %v3515
        %v3517 = vpop.f32.mrb[0].mxu0
        %3518 = vmatprep.mubr.f32.mxu0 %v2442
        %3519 = vmatmul.mubr.f32.gmra.mrb[0].mxu0 %v2441
        %v3520 = vpop.f32.mrb[0].mxu0
        %v3521 = vadd.f32 %v3296, %v3520
        %v3522 = vpop.f32.mrb[0].mxu0
        %3523 = vmatprep.mubr.f32.mxu0 %v2451
        %3524 = vmatmul.mubr.f32.gmra.mrb[0].mxu0 %v2450
        %v3525 = vpop.f32.mrb[0].mxu0
        %v3526 = vadd.f32 %v3301, %v3525
        %v3527 = vpop.f32.mrb[0].mxu0
        %3528 = vmatprep.mubr.f32.mxu0 %v2460
        %3529 = vmatmul.mubr.f32.gmra.mrb[0].mxu0 %v2459
        %v3530 = vpop.f32.mrb[0].mxu0
        %v3531 = vadd.f32 %v3306, %v3530
        %v3532 = vpop.f32.mrb[0].mxu0
        %3533 = vmatprep.mubr.f32.mxu0 %v2469
        %3534 = vmatmul.mubr.f32.gmra.mrb[0].mxu0 %v2468
        %v3535 = vpop.f32.mrb[0].mxu0
        %v3536 = vadd.f32 %v3311, %v3535
        %v3537 = vpop.f32.mrb[0].mxu0
        %3538 = vmatprep.mubr.f32.mxu0 %v2478
        %3539 = vmatmul.mubr.f32.gmra.mrb[0].mxu0 %v2477
        %v3540 = vpop.f32.mrb[0].mxu0
        %v3541 = vadd.f32 %v3316, %v3540
        %v3542 = vpop.f32.mrb[0].mxu0
        %3543 = vmatprep.mubr.f32.mxu0 %v2487
        %3544 = vmatmul.mubr.f32.gmra.mrb[0].mxu0 %v2486
        %v3545 = vpop.f32.mrb[0].mxu0
        %v3546 = vadd.f32 %v3321, %v3545
        %v3547 = vpop.f32.mrb[0].mxu0
        %3548 = vmatprep.mubr.f32.mxu0 %v2496
        %3549 = vmatmul.mubr.f32.gmra.mrb[0].mxu0 %v2495
        %v3550 = vpop.f32.mrb[0].mxu0
        %v3551 = vadd.f32 %v3326, %v3550
        %v3552 = vpop.f32.mrb[0].mxu0
        %3553 = vmatprep.mubr.f32.mxu0 %v2505
        %3554 = vmatmul.mubr.f32.gmra.mrb[0].mxu0 %v2504
        %v3555 = vpop.f32.mrb[0].mxu0
        %v3556 = vadd.f32 %v3331, %v3555
        %v3557 = vpop.f32.mrb[0].mxu0
        %3558 = vmatprep.mubr.f32.mxu0 %v2514
        %3559 = vmatmul.mubr.f32.gmra.mrb[0].mxu0 %v2513
        %v3560 = vpop.f32.mrb[0].mxu0
        %v3561 = vadd.f32 %v3336, %v3560
        %v3562 = vpop.f32.mrb[0].mxu0
        %3563 = vmatprep.mubr.f32.mxu0 %v2523
        %3564 = vmatmul.mubr.f32.gmra.mrb[0].mxu0 %v2522
        %v3565 = vpop.f32.mrb[0].mxu0
        %v3566 = vadd.f32 %v3341, %v3565
        %v3567 = vpop.f32.mrb[0].mxu0
        %3568 = vdwg.mxu0
        %3569 = vmatprep.subr.mxu0 0.0
        %3570 = vmatpush1.msra.mxu0 %v2653
        %3571 = vmatprep.subr.mxu0 0.0
        %3572 = vmatpush1.msra.mxu0 %v2654
        %3573 = vmatprep.subr.mxu0 0.0
        %3574 = vmatpush1.msra.mxu0 %v2655
        %3575 = vmatprep.subr.mxu0 0.0
        %3576 = vmatpush1.msra.mxu0 %v2656
        %3577 = vmatprep.subr.mxu0 0.0
        %3578 = vmatpush1.msra.mxu0 %v2657
        %3579 = vmatprep.subr.mxu0 0.0
        %3580 = vmatpush1.msra.mxu0 %v2658
        %3581 = vmatprep.subr.mxu0 0.0
        %3582 = vmatpush1.msra.mxu0 %v2659
        %3583 = vmatprep.subr.mxu0 0.0
        %3584 = vmatpush1.msra.mxu0 %v2660
        %3585 = vmatprep.subr.mxu0 0.0
        %3586 = vmatpush1.msra.mxu0 %v2661
        %3587 = vmatprep.subr.mxu0 0.0
        %3588 = vmatpush1.msra.mxu0 %v2662
        %3589 = vmatprep.subr.mxu0 0.0
        %3590 = vmatpush1.msra.mxu0 %v2663
        %3591 = vmatprep.subr.mxu0 0.0
        %3592 = vmatpush1.msra.mxu0 %v2664
        %3593 = vmatprep.subr.mxu0 0.0
        %3594 = vmatpush1.msra.mxu0 %v2665
        %3595 = vmatprep.subr.mxu0 0.0
        %3596 = vmatpush1.msra.mxu0 %v2666
        %3597 = vmatprep.subr.mxu0 0.0
        %3598 = vmatpush1.msra.mxu0 %v2667
        %3599 = vmatprep.subr.mxu0 0.0
        %3600 = vmatpush1.msra.mxu0 %v2668
        %3601 = vmatprep.subr.mxu0 0.0
        %3602 = vmatpush1.msra.mxu0 0.0
        %3603 = vmatprep.subr.mxu0 0.0
        %3604 = vmatpush1.msra.mxu0 0.0
        %3605 = vmatprep.subr.mxu0 0.0
        %3606 = vmatpush1.msra.mxu0 0.0
        %3607 = vmatprep.subr.mxu0 0.0
        %3608 = vmatpush1.msra.mxu0 0.0
        %3609 = vmatprep.subr.mxu0 0.0
        %3610 = vmatpush1.msra.mxu0 0.0
        %3611 = vmatprep.subr.mxu0 0.0
        %3612 = vmatpush1.msra.mxu0 0.0
        %3613 = vmatprep.subr.mxu0 0.0
        %3614 = vmatpush1.msra.mxu0 0.0
        %3615 = vmatprep.subr.mxu0 0.0
        %3616 = vmatpush1.msra.mxu0 0.0
        %3617 = vmatprep.subr.mxu0 0.0
        %3618 = vmatpush1.msra.mxu0 0.0
        %3619 = vmatprep.subr.mxu0 0.0
        %3620 = vmatpush1.msra.mxu0 0.0
        %3621 = vmatprep.subr.mxu0 0.0
        %3622 = vmatpush1.msra.mxu0 0.0
        %3623 = vmatprep.subr.mxu0 0.0
        %3624 = vmatpush1.msra.mxu0 0.0
        %3625 = vmatprep.subr.mxu0 0.0
        %3626 = vmatpush1.msra.mxu0 0.0
        %3627 = vmatprep.subr.mxu0 0.0
        %3628 = vmatpush1.msra.mxu0 0.0
        %3629 = vmatprep.subr.mxu0 0.0
        %3630 = vmatpush1.msra.mxu0 0.0
        %3631 = vmatprep.subr.mxu0 0.0
        %3632 = vmatpush1.msra.mxu0 0.0
        %3633 = vmatprep.mubr.f32.mxu0 0.0
        %3634 = vmatmul.mubr.f32.gmra.mrb[0].mxu0 %v2245
        %v3635 = vpop.f32.mrb[0].mxu0
        %v3636 = vadd.f32 %v3411, %v3635
        %v3637 = vpop.f32.mrb[0].mxu0
        %3638 = vmatprep.mubr.f32.mxu0 0.0
        %3639 = vmatmul.mubr.f32.gmra.mrb[0].mxu0 %v2254
        %v3640 = vpop.f32.mrb[0].mxu0
        %v3641 = vadd.f32 %v3416, %v3640
        %v3642 = vpop.f32.mrb[0].mxu0
        %3643 = vmatprep.mubr.f32.mxu0 0.0
        %3644 = vmatmul.mubr.f32.gmra.mrb[0].mxu0 %v2263
        %v3645 = vpop.f32.mrb[0].mxu0
        %v3646 = vadd.f32 %v3421, %v3645
        %v3647 = vpop.f32.mrb[0].mxu0
        %3648 = vmatprep.mubr.f32.mxu0 0.0
        %3649 = vmatmul.mubr.f32.gmra.mrb[0].mxu0 %v2272
        %v3650 = vpop.f32.mrb[0].mxu0
        %v3651 = vadd.f32 %v3426, %v3650
        %v3652 = vpop.f32.mrb[0].mxu0
        %3653 = vmatprep.mubr.f32.mxu0 0.0
        %3654 = vmatmul.mubr.f32.gmra.mrb[0].mxu0 %v2281
        %v3655 = vpop.f32.mrb[0].mxu0
        %v3656 = vadd.f32 %v3431, %v3655
        %v3657 = vpop.f32.mrb[0].mxu0
        %3658 = vmatprep.mubr.f32.mxu0 0.0
        %3659 = vmatmul.mubr.f32.gmra.mrb[0].mxu0 %v2290
        %v3660 = vpop.f32.mrb[0].mxu0
        %v3661 = vadd.f32 %v3436, %v3660
        %v3662 = vpop.f32.mrb[0].mxu0
        %3663 = vmatprep.mubr.f32.mxu0 0.0
        %3664 = vmatmul.mubr.f32.gmra.mrb[0].mxu0 %v2299
        %v3665 = vpop.f32.mrb[0].mxu0
        %v3666 = vadd.f32 %v3441, %v3665
        %v3667 = vpop.f32.mrb[0].mxu0
        %3668 = vmatprep.mubr.f32.mxu0 0.0
        %3669 = vmatmul.mubr.f32.gmra.mrb[0].mxu0 %v2308
        %v3670 = vpop.f32.mrb[0].mxu0
        %v3671 = vadd.f32 %v3446, %v3670
        %v3672 = vpop.f32.mrb[0].mxu0
        %3673 = vmatprep.mubr.f32.mxu0 0.0
        %3674 = vmatmul.mubr.f32.gmra.mrb[0].mxu0 %v2317
        %v3675 = vpop.f32.mrb[0].mxu0
        %v3676 = vadd.f32 %v3451, %v3675
        %v3677 = vpop.f32.mrb[0].mxu0
        %3678 = vmatprep.mubr.f32.mxu0 0.0
        %3679 = vmatmul.mubr.f32.gmra.mrb[0].mxu0 %v2326
        %v3680 = vpop.f32.mrb[0].mxu0
        %v3681 = vadd.f32 %v3456, %v3680
        %v3682 = vpop.f32.mrb[0].mxu0
        %3683 = vmatprep.mubr.f32.mxu0 0.0
        %3684 = vmatmul.mubr.f32.gmra.mrb[0].mxu0 %v2335
        %v3685 = vpop.f32.mrb[0].mxu0
        %v3686 = vadd.f32 %v3461, %v3685
        %v3687 = vpop.f32.mrb[0].mxu0
        %3688 = vmatprep.mubr.f32.mxu0 0.0
        %3689 = vmatmul.mubr.f32.gmra.mrb[0].mxu0 %v2344
        %v3690 = vpop.f32.mrb[0].mxu0
        %v3691 = vadd.f32 %v3466, %v3690
        %v3692 = vpop.f32.mrb[0].mxu0
        %3693 = vmatprep.mubr.f32.mxu0 0.0
        %3694 = vmatmul.mubr.f32.gmra.mrb[0].mxu0 %v2353
        %v3695 = vpop.f32.mrb[0].mxu0
        %v3696 = vadd.f32 %v3471, %v3695
        %v3697 = vpop.f32.mrb[0].mxu0
        %3698 = vmatprep.mubr.f32.mxu0 0.0
        %3699 = vmatmul.mubr.f32.gmra.mrb[0].mxu0 %v2362
        %v3700 = vpop.f32.mrb[0].mxu0
        %v3701 = vadd.f32 %v3476, %v3700
        %v3702 = vpop.f32.mrb[0].mxu0
        %3703 = vmatprep.mubr.f32.mxu0 0.0
        %3704 = vmatmul.mubr.f32.gmra.mrb[0].mxu0 %v2371
        %v3705 = vpop.f32.mrb[0].mxu0
        %v3706 = vadd.f32 %v3481, %v3705
        %v3707 = vpop.f32.mrb[0].mxu0
        %3708 = vmatprep.mubr.f32.mxu0 0.0
        %3709 = vmatmul.mubr.f32.gmra.mrb[0].mxu0 %v2380
        %v3710 = vpop.f32.mrb[0].mxu0
        %v3711 = vadd.f32 %v3486, %v3710
        %v3712 = vpop.f32.mrb[0].mxu0
        %3713 = vmatprep.mubr.f32.mxu0 0.0
        %3714 = vmatmul.mubr.f32.gmra.mrb[0].mxu0 %v2389
        %v3715 = vpop.f32.mrb[0].mxu0
        %v3716 = vadd.f32 %v3491, %v3715
        %v3717 = vpop.f32.mrb[0].mxu0
        %3718 = vmatprep.mubr.f32.mxu0 0.0
        %3719 = vmatmul.mubr.f32.gmra.mrb[0].mxu0 %v2398
        %v3720 = vpop.f32.mrb[0].mxu0
        %v3721 = vadd.f32 %v3496, %v3720
        %v3722 = vpop.f32.mrb[0].mxu0
        %3723 = vmatprep.mubr.f32.mxu0 0.0
        %3724 = vmatmul.mubr.f32.gmra.mrb[0].mxu0 %v2407
        %v3725 = vpop.f32.mrb[0].mxu0
        %v3726 = vadd.f32 %v3501, %v3725
        %v3727 = vpop.f32.mrb[0].mxu0
        %3728 = vmatprep.mubr.f32.mxu0 0.0
        %3729 = vmatmul.mubr.f32.gmra.mrb[0].mxu0 %v2416
        %v3730 = vpop.f32.mrb[0].mxu0
        %v3731 = vadd.f32 %v3506, %v3730
        %v3732 = vpop.f32.mrb[0].mxu0
        %3733 = vmatprep.mubr.f32.mxu0 0.0
        %3734 = vmatmul.mubr.f32.gmra.mrb[0].mxu0 %v2425
        %v3735 = vpop.f32.mrb[0].mxu0
        %v3736 = vadd.f32 %v3511, %v3735
        %v3737 = vpop.f32.mrb[0].mxu0
        %3738 = vmatprep.mubr.f32.mxu0 0.0
        %3739 = vmatmul.mubr.f32.gmra.mrb[0].mxu0 %v2434
        %v3740 = vpop.f32.mrb[0].mxu0
        %v3741 = vadd.f32 %v3516, %v3740
        %v3742 = vpop.f32.mrb[0].mxu0
        %3743 = vmatprep.mubr.f32.mxu0 0.0
        %3744 = vmatmul.mubr.f32.gmra.mrb[0].mxu0 %v2443
        %v3745 = vpop.f32.mrb[0].mxu0
        %v3746 = vadd.f32 %v3521, %v3745
        %v3747 = vpop.f32.mrb[0].mxu0
        %3748 = vmatprep.mubr.f32.mxu0 0.0
        %3749 = vmatmul.mubr.f32.gmra.mrb[0].mxu0 %v2452
        %v3750 = vpop.f32.mrb[0].mxu0
        %v3751 = vadd.f32 %v3526, %v3750
        %v3752 = vpop.f32.mrb[0].mxu0
        %3753 = vmatprep.mubr.f32.mxu0 0.0
        %3754 = vmatmul.mubr.f32.gmra.mrb[0].mxu0 %v2461
        %v3755 = vpop.f32.mrb[0].mxu0
        %v3756 = vadd.f32 %v3531, %v3755
        %v3757 = vpop.f32.mrb[0].mxu0
        %3758 = vmatprep.mubr.f32.mxu0 0.0
        %3759 = vmatmul.mubr.f32.gmra.mrb[0].mxu0 %v2470
        %v3760 = vpop.f32.mrb[0].mxu0
        %v3761 = vadd.f32 %v3536, %v3760
        %v3762 = vpop.f32.mrb[0].mxu0
        %3763 = vmatprep.mubr.f32.mxu0 0.0
        %3764 = vmatmul.mubr.f32.gmra.mrb[0].mxu0 %v2479
        %v3765 = vpop.f32.mrb[0].mxu0
        %v3766 = vadd.f32 %v3541, %v3765
        %v3767 = vpop.f32.mrb[0].mxu0
        %3768 = vmatprep.mubr.f32.mxu0 0.0
        %3769 = vmatmul.mubr.f32.gmra.mrb[0].mxu0 %v2488
        %v3770 = vpop.f32.mrb[0].mxu0
        %v3771 = vadd.f32 %v3546, %v3770
        %v3772 = vpop.f32.mrb[0].mxu0
        %3773 = vmatprep.mubr.f32.mxu0 0.0
        %3774 = vmatmul.mubr.f32.gmra.mrb[0].mxu0 %v2497
        %v3775 = vpop.f32.mrb[0].mxu0
        %v3776 = vadd.f32 %v3551, %v3775
        %v3777 = vpop.f32.mrb[0].mxu0
        %3778 = vmatprep.mubr.f32.mxu0 0.0
        %3779 = vmatmul.mubr.f32.gmra.mrb[0].mxu0 %v2506
        %v3780 = vpop.f32.mrb[0].mxu0
        %v3781 = vadd.f32 %v3556, %v3780
        %v3782 = vpop.f32.mrb[0].mxu0
        %3783 = vmatprep.mubr.f32.mxu0 0.0
        %3784 = vmatmul.mubr.f32.gmra.mrb[0].mxu0 %v2515
        %v3785 = vpop.f32.mrb[0].mxu0
        %v3786 = vadd.f32 %v3561, %v3785
        %v3787 = vpop.f32.mrb[0].mxu0
        %3788 = vmatprep.mubr.f32.mxu0 0.0
        %3789 = vmatmul.mubr.f32.gmra.mrb[0].mxu0 %v2524
        %v3790 = vpop.f32.mrb[0].mxu0
        %v3791 = vadd.f32 %v3566, %v3790
        %v3792 = vpop.f32.mrb[0].mxu0
        %3793 = vdwg.mxu0
        %v3794 = vld [vmem:[%s5] sm:$0x1]
        %v3796 = vlaneseq
        %v3797 = vshrl.u32 %v3796, 7
        %v3798 = vsub.s32 0, %v3797
        %v3799 = vrot.slane %v3794, %v3798
        %v3801 = vmul.f32 %v3636, %v3799
        %v3802 = vmul.f32 %v3641, %v3799
        %v3803 = vmul.f32 %v3646, %v3799
        %v3804 = vmul.f32 %v3651, %v3799
        %v3805 = vmul.f32 %v3656, %v3799
        %v3806 = vmul.f32 %v3661, %v3799
        %v3807 = vmul.f32 %v3666, %v3799
        %v3808 = vmul.f32 %v3671, %v3799
        %v3809 = vmul.f32 %v3676, %v3799
        %v3810 = vmul.f32 %v3681, %v3799
        %v3811 = vmul.f32 %v3686, %v3799
        %v3812 = vmul.f32 %v3691, %v3799
        %v3813 = vmul.f32 %v3696, %v3799
        %v3814 = vmul.f32 %v3701, %v3799
        %v3815 = vmul.f32 %v3706, %v3799
        %v3816 = vmul.f32 %v3711, %v3799
        %v3817 = vmul.f32 %v3716, %v3799
        %v3818 = vmul.f32 %v3721, %v3799
        %v3819 = vmul.f32 %v3726, %v3799
        %v3820 = vmul.f32 %v3731, %v3799
        %v3821 = vmul.f32 %v3736, %v3799
        %v3822 = vmul.f32 %v3741, %v3799
        %v3823 = vmul.f32 %v3746, %v3799
        %v3824 = vmul.f32 %v3751, %v3799
        %v3825 = vmul.f32 %v3756, %v3799
        %v3826 = vmul.f32 %v3761, %v3799
        %v3827 = vmul.f32 %v3766, %v3799
        %v3828 = vmul.f32 %v3771, %v3799
        %v3829 = vmul.f32 %v3776, %v3799
        %v3830 = vmul.f32 %v3781, %v3799
        %v3831 = vmul.f32 %v3786, %v3799
        %v3832 = vmul.f32 %v3791, %v3799
        %v3833 = vld [vmem:[%s6] sm:$0x1]
        %v3835 = vlaneseq
        %v3836 = vshrl.u32 %v3835, 7
        %v3837 = vsub.s32 0, %v3836
        %v3838 = vrot.slane %v3833, %v3837
        %v3840 = vadd.f32 %v3801, %v3838
        %v3841 = vadd.f32 %v3802, %v3838
        %v3842 = vadd.f32 %v3803, %v3838
        %v3843 = vadd.f32 %v3804, %v3838
        %v3844 = vadd.f32 %v3805, %v3838
        %v3845 = vadd.f32 %v3806, %v3838
        %v3846 = vadd.f32 %v3807, %v3838
        %v3847 = vadd.f32 %v3808, %v3838
        %v3848 = vadd.f32 %v3809, %v3838
        %v3849 = vadd.f32 %v3810, %v3838
        %v3850 = vadd.f32 %v3811, %v3838
        %v3851 = vadd.f32 %v3812, %v3838
        %v3852 = vadd.f32 %v3813, %v3838
        %v3853 = vadd.f32 %v3814, %v3838
        %v3854 = vadd.f32 %v3815, %v3838
        %v3855 = vadd.f32 %v3816, %v3838
        %v3856 = vadd.f32 %v3817, %v3838
        %v3857 = vadd.f32 %v3818, %v3838
        %v3858 = vadd.f32 %v3819, %v3838
        %v3859 = vadd.f32 %v3820, %v3838
        %v3860 = vadd.f32 %v3821, %v3838
        %v3861 = vadd.f32 %v3822, %v3838
        %v3862 = vadd.f32 %v3823, %v3838
        %v3863 = vadd.f32 %v3824, %v3838
        %v3864 = vadd.f32 %v3825, %v3838
        %v3865 = vadd.f32 %v3826, %v3838
        %v3866 = vadd.f32 %v3827, %v3838
        %v3867 = vadd.f32 %v3828, %v3838
        %v3868 = vadd.f32 %v3829, %v3838
        %v3869 = vadd.f32 %v3830, %v3838
        %v3870 = vadd.f32 %v3831, %v3838
        %v3871 = vadd.f32 %v3832, %v3838
        %v3872 = vmax.f32 %v3840, 0.0
        %v3873 = vmax.f32 %v3841, 0.0
        %v3874 = vmax.f32 %v3842, 0.0
        %v3875 = vmax.f32 %v3843, 0.0
        %v3876 = vmax.f32 %v3844, 0.0
        %v3877 = vmax.f32 %v3845, 0.0
        %v3878 = vmax.f32 %v3846, 0.0
        %v3879 = vmax.f32 %v3847, 0.0
        %v3880 = vmax.f32 %v3848, 0.0
        %v3881 = vmax.f32 %v3849, 0.0
        %v3882 = vmax.f32 %v3850, 0.0
        %v3883 = vmax.f32 %v3851, 0.0
        %v3884 = vmax.f32 %v3852, 0.0
        %v3885 = vmax.f32 %v3853, 0.0
        %v3886 = vmax.f32 %v3854, 0.0
        %v3887 = vmax.f32 %v3855, 0.0
        %v3888 = vmax.f32 %v3856, 0.0
        %v3889 = vmax.f32 %v3857, 0.0
        %v3890 = vmax.f32 %v3858, 0.0
        %v3891 = vmax.f32 %v3859, 0.0
        %v3892 = vmax.f32 %v3860, 0.0
        %v3893 = vmax.f32 %v3861, 0.0
        %v3894 = vmax.f32 %v3862, 0.0
        %v3895 = vmax.f32 %v3863, 0.0
        %v3896 = vmax.f32 %v3864, 0.0
        %v3897 = vmax.f32 %v3865, 0.0
        %v3898 = vmax.f32 %v3866, 0.0
        %v3899 = vmax.f32 %v3867, 0.0
        %v3900 = vmax.f32 %v3868, 0.0
        %v3901 = vmax.f32 %v3869, 0.0
        %v3902 = vmax.f32 %v3870, 0.0
        %v3903 = vmax.f32 %v3871, 0.0
        %v3904 = vld [vmem:[#allocation10] sm:$0xff]
        %v3905 = vld [vmem:[#allocation10 + $0x8] sm:$0xff]
        %v3906 = vld [vmem:[#allocation10 + $0x10] sm:$0xff]
        %v3907 = vld [vmem:[#allocation10 + $0x18] sm:$0xff]
        %v3908 = vld [vmem:[#allocation10 + $0x20] sm:$0xff]
        %v3909 = vld [vmem:[#allocation10 + $0x28] sm:$0xff]
        %v3910 = vld [vmem:[#allocation10 + $0x30] sm:$0xff]
        %v3911 = vld [vmem:[#allocation10 + $0x38] sm:$0xff]
        %v3912 = vld [vmem:[#allocation10 + $0x40] sm:$0xff]
        %v3913 = vld [vmem:[#allocation10 + $0x48] sm:$0xff]
        %v3914 = vld [vmem:[#allocation10 + $0x50] sm:$0xff]
        %v3915 = vld [vmem:[#allocation10 + $0x58] sm:$0xff]
        %v3916 = vld [vmem:[#allocation10 + $0x60] sm:$0xff]
        %v3917 = vld [vmem:[#allocation10 + $0x68] sm:$0xff]
        %v3918 = vld [vmem:[#allocation10 + $0x70] sm:$0xff]
        %v3919 = vld [vmem:[#allocation10 + $0x78] sm:$0xff]
        %3920 = vmatprep.subr.mxu0 0.0
        %3921 = vmatpush1.msra.mxu0 %v3904
        %3922 = vmatprep.subr.mxu0 0.0
        %3923 = vmatpush1.msra.mxu0 %v3905
        %3924 = vmatprep.subr.mxu0 0.0
        %3925 = vmatpush1.msra.mxu0 %v3906
        %3926 = vmatprep.subr.mxu0 0.0
        %3927 = vmatpush1.msra.mxu0 %v3907
        %3928 = vmatprep.subr.mxu0 0.0
        %3929 = vmatpush1.msra.mxu0 %v3908
        %3930 = vmatprep.subr.mxu0 0.0
        %3931 = vmatpush1.msra.mxu0 %v3909
        %3932 = vmatprep.subr.mxu0 0.0
        %3933 = vmatpush1.msra.mxu0 %v3910
        %3934 = vmatprep.subr.mxu0 0.0
        %3935 = vmatpush1.msra.mxu0 %v3911
        %3936 = vmatprep.subr.mxu0 0.0
        %3937 = vmatpush1.msra.mxu0 %v3912
        %3938 = vmatprep.subr.mxu0 0.0
        %3939 = vmatpush1.msra.mxu0 %v3913
        %3940 = vmatprep.subr.mxu0 0.0
        %3941 = vmatpush1.msra.mxu0 %v3914
        %3942 = vmatprep.subr.mxu0 0.0
        %3943 = vmatpush1.msra.mxu0 %v3915
        %3944 = vmatprep.subr.mxu0 0.0
        %3945 = vmatpush1.msra.mxu0 %v3916
        %3946 = vmatprep.subr.mxu0 0.0
        %3947 = vmatpush1.msra.mxu0 %v3917
        %3948 = vmatprep.subr.mxu0 0.0
        %3949 = vmatpush1.msra.mxu0 %v3918
        %3950 = vmatprep.subr.mxu0 0.0
        %3951 = vmatpush1.msra.mxu0 %v3919
        %3952 = vmatprep.subr.mxu0 0.0
        %3953 = vmatpush1.msra.mxu0 0.0
        %3954 = vmatprep.subr.mxu0 0.0
        %3955 = vmatpush1.msra.mxu0 0.0
        %3956 = vmatprep.subr.mxu0 0.0
        %3957 = vmatpush1.msra.mxu0 0.0
        %3958 = vmatprep.subr.mxu0 0.0
        %3959 = vmatpush1.msra.mxu0 0.0
        %3960 = vmatprep.subr.mxu0 0.0
        %3961 = vmatpush1.msra.mxu0 0.0
        %3962 = vmatprep.subr.mxu0 0.0
        %3963 = vmatpush1.msra.mxu0 0.0
        %3964 = vmatprep.subr.mxu0 0.0
        %3965 = vmatpush1.msra.mxu0 0.0
        %3966 = vmatprep.subr.mxu0 0.0
        %3967 = vmatpush1.msra.mxu0 0.0
        %3968 = vmatprep.subr.mxu0 0.0
        %3969 = vmatpush1.msra.mxu0 0.0
        %3970 = vmatprep.subr.mxu0 0.0
        %3971 = vmatpush1.msra.mxu0 0.0
        %3972 = vmatprep.subr.mxu0 0.0
        %3973 = vmatpush1.msra.mxu0 0.0
        %3974 = vmatprep.subr.mxu0 0.0
        %3975 = vmatpush1.msra.mxu0 0.0
        %3976 = vmatprep.subr.mxu0 0.0
        %3977 = vmatpush1.msra.mxu0 0.0
        %3978 = vmatprep.subr.mxu0 0.0
        %3979 = vmatpush1.msra.mxu0 0.0
        %3980 = vmatprep.subr.mxu0 0.0
        %3981 = vmatpush1.msra.mxu0 0.0
        %3982 = vmatprep.subr.mxu0 0.0
        %3983 = vmatpush1.msra.mxu0 0.0
        %3984 = vmatprep.mubr.f32.mxu0 0.0
        %3985 = vmatmul.mubr.f32.gmra.mrb[0].mxu0 %v3872
        %v3986 = vpop.f32.mrb[0].mxu0
        %v3987 = vadd.f32 0.0, %v3986
        %v3988 = vpop.f32.mrb[0].mxu0
        %3989 = vmatprep.mubr.f32.mxu0 0.0
        %3990 = vmatmul.mubr.f32.gmra.mrb[0].mxu0 %v3873
        %v3991 = vpop.f32.mrb[0].mxu0
        %v3992 = vadd.f32 0.0, %v3991
        %v3993 = vpop.f32.mrb[0].mxu0
        %3994 = vmatprep.mubr.f32.mxu0 0.0
        %3995 = vmatmul.mubr.f32.gmra.mrb[0].mxu0 %v3874
        %v3996 = vpop.f32.mrb[0].mxu0
        %v3997 = vadd.f32 0.0, %v3996
        %v3998 = vpop.f32.mrb[0].mxu0
        %3999 = vmatprep.mubr.f32.mxu0 0.0
        %4000 = vmatmul.mubr.f32.gmra.mrb[0].mxu0 %v3875
        %v4001 = vpop.f32.mrb[0].mxu0
        %v4002 = vadd.f32 0.0, %v4001
        %v4003 = vpop.f32.mrb[0].mxu0
        %4004 = vmatprep.mubr.f32.mxu0 0.0
        %4005 = vmatmul.mubr.f32.gmra.mrb[0].mxu0 %v3876
        %v4006 = vpop.f32.mrb[0].mxu0
        %v4007 = vadd.f32 0.0, %v4006
        %v4008 = vpop.f32.mrb[0].mxu0
        %4009 = vmatprep.mubr.f32.mxu0 0.0
        %4010 = vmatmul.mubr.f32.gmra.mrb[0].mxu0 %v3877
        %v4011 = vpop.f32.mrb[0].mxu0
        %v4012 = vadd.f32 0.0, %v4011
        %v4013 = vpop.f32.mrb[0].mxu0
        %4014 = vmatprep.mubr.f32.mxu0 0.0
        %4015 = vmatmul.mubr.f32.gmra.mrb[0].mxu0 %v3878
        %v4016 = vpop.f32.mrb[0].mxu0
        %v4017 = vadd.f32 0.0, %v4016
        %v4018 = vpop.f32.mrb[0].mxu0
        %4019 = vmatprep.mubr.f32.mxu0 0.0
        %4020 = vmatmul.mubr.f32.gmra.mrb[0].mxu0 %v3879
        %v4021 = vpop.f32.mrb[0].mxu0
        %v4022 = vadd.f32 0.0, %v4021
        %v4023 = vpop.f32.mrb[0].mxu0
        %4024 = vmatprep.mubr.f32.mxu0 0.0
        %4025 = vmatmul.mubr.f32.gmra.mrb[0].mxu0 %v3880
        %v4026 = vpop.f32.mrb[0].mxu0
        %v4027 = vadd.f32 0.0, %v4026
        %v4028 = vpop.f32.mrb[0].mxu0
        %4029 = vmatprep.mubr.f32.mxu0 0.0
        %4030 = vmatmul.mubr.f32.gmra.mrb[0].mxu0 %v3881
        %v4031 = vpop.f32.mrb[0].mxu0
        %v4032 = vadd.f32 0.0, %v4031
        %v4033 = vpop.f32.mrb[0].mxu0
        %4034 = vmatprep.mubr.f32.mxu0 0.0
        %4035 = vmatmul.mubr.f32.gmra.mrb[0].mxu0 %v3882
        %v4036 = vpop.f32.mrb[0].mxu0
        %v4037 = vadd.f32 0.0, %v4036
        %v4038 = vpop.f32.mrb[0].mxu0
        %4039 = vmatprep.mubr.f32.mxu0 0.0
        %4040 = vmatmul.mubr.f32.gmra.mrb[0].mxu0 %v3883
        %v4041 = vpop.f32.mrb[0].mxu0
        %v4042 = vadd.f32 0.0, %v4041
        %v4043 = vpop.f32.mrb[0].mxu0
        %4044 = vmatprep.mubr.f32.mxu0 0.0
        %4045 = vmatmul.mubr.f32.gmra.mrb[0].mxu0 %v3884
        %v4046 = vpop.f32.mrb[0].mxu0
        %v4047 = vadd.f32 0.0, %v4046
        %v4048 = vpop.f32.mrb[0].mxu0
        %4049 = vmatprep.mubr.f32.mxu0 0.0
        %4050 = vmatmul.mubr.f32.gmra.mrb[0].mxu0 %v3885
        %v4051 = vpop.f32.mrb[0].mxu0
        %v4052 = vadd.f32 0.0, %v4051
        %v4053 = vpop.f32.mrb[0].mxu0
        %4054 = vmatprep.mubr.f32.mxu0 0.0
        %4055 = vmatmul.mubr.f32.gmra.mrb[0].mxu0 %v3886
        %v4056 = vpop.f32.mrb[0].mxu0
        %v4057 = vadd.f32 0.0, %v4056
        %v4058 = vpop.f32.mrb[0].mxu0
        %4059 = vmatprep.mubr.f32.mxu0 0.0
        %4060 = vmatmul.mubr.f32.gmra.mrb[0].mxu0 %v3887
        %v4061 = vpop.f32.mrb[0].mxu0
        %v4062 = vadd.f32 0.0, %v4061
        %v4063 = vpop.f32.mrb[0].mxu0
        %4064 = vmatprep.mubr.f32.mxu0 0.0
        %4065 = vmatmul.mubr.f32.gmra.mrb[0].mxu0 %v3888
        %v4066 = vpop.f32.mrb[0].mxu0
        %v4067 = vadd.f32 0.0, %v4066
        %v4068 = vpop.f32.mrb[0].mxu0
        %4069 = vmatprep.mubr.f32.mxu0 0.0
        %4070 = vmatmul.mubr.f32.gmra.mrb[0].mxu0 %v3889
        %v4071 = vpop.f32.mrb[0].mxu0
        %v4072 = vadd.f32 0.0, %v4071
        %v4073 = vpop.f32.mrb[0].mxu0
        %4074 = vmatprep.mubr.f32.mxu0 0.0
        %4075 = vmatmul.mubr.f32.gmra.mrb[0].mxu0 %v3890
        %v4076 = vpop.f32.mrb[0].mxu0
        %v4077 = vadd.f32 0.0, %v4076
        %v4078 = vpop.f32.mrb[0].mxu0
        %4079 = vmatprep.mubr.f32.mxu0 0.0
        %4080 = vmatmul.mubr.f32.gmra.mrb[0].mxu0 %v3891
        %v4081 = vpop.f32.mrb[0].mxu0
        %v4082 = vadd.f32 0.0, %v4081
        %v4083 = vpop.f32.mrb[0].mxu0
        %4084 = vmatprep.mubr.f32.mxu0 0.0
        %4085 = vmatmul.mubr.f32.gmra.mrb[0].mxu0 %v3892
        %v4086 = vpop.f32.mrb[0].mxu0
        %v4087 = vadd.f32 0.0, %v4086
        %v4088 = vpop.f32.mrb[0].mxu0
        %4089 = vmatprep.mubr.f32.mxu0 0.0
        %4090 = vmatmul.mubr.f32.gmra.mrb[0].mxu0 %v3893
        %v4091 = vpop.f32.mrb[0].mxu0
        %v4092 = vadd.f32 0.0, %v4091
        %v4093 = vpop.f32.mrb[0].mxu0
        %4094 = vmatprep.mubr.f32.mxu0 0.0
        %4095 = vmatmul.mubr.f32.gmra.mrb[0].mxu0 %v3894
        %v4096 = vpop.f32.mrb[0].mxu0
        %v4097 = vadd.f32 0.0, %v4096
        %v4098 = vpop.f32.mrb[0].mxu0
        %4099 = vmatprep.mubr.f32.mxu0 0.0
        %4100 = vmatmul.mubr.f32.gmra.mrb[0].mxu0 %v3895
        %v4101 = vpop.f32.mrb[0].mxu0
        %v4102 = vadd.f32 0.0, %v4101
        %v4103 = vpop.f32.mrb[0].mxu0
        %4104 = vmatprep.mubr.f32.mxu0 0.0
        %4105 = vmatmul.mubr.f32.gmra.mrb[0].mxu0 %v3896
        %v4106 = vpop.f32.mrb[0].mxu0
        %v4107 = vadd.f32 0.0, %v4106
        %v4108 = vpop.f32.mrb[0].mxu0
        %4109 = vmatprep.mubr.f32.mxu0 0.0
        %4110 = vmatmul.mubr.f32.gmra.mrb[0].mxu0 %v3897
        %v4111 = vpop.f32.mrb[0].mxu0
        %v4112 = vadd.f32 0.0, %v4111
        %v4113 = vpop.f32.mrb[0].mxu0
        %4114 = vmatprep.mubr.f32.mxu0 0.0
        %4115 = vmatmul.mubr.f32.gmra.mrb[0].mxu0 %v3898
        %v4116 = vpop.f32.mrb[0].mxu0
        %v4117 = vadd.f32 0.0, %v4116
        %v4118 = vpop.f32.mrb[0].mxu0
        %4119 = vmatprep.mubr.f32.mxu0 0.0
        %4120 = vmatmul.mubr.f32.gmra.mrb[0].mxu0 %v3899
        %v4121 = vpop.f32.mrb[0].mxu0
        %v4122 = vadd.f32 0.0, %v4121
        %v4123 = vpop.f32.mrb[0].mxu0
        %4124 = vmatprep.mubr.f32.mxu0 0.0
        %4125 = vmatmul.mubr.f32.gmra.mrb[0].mxu0 %v3900
        %v4126 = vpop.f32.mrb[0].mxu0
        %v4127 = vadd.f32 0.0, %v4126
        %v4128 = vpop.f32.mrb[0].mxu0
        %4129 = vmatprep.mubr.f32.mxu0 0.0
        %4130 = vmatmul.mubr.f32.gmra.mrb[0].mxu0 %v3901
        %v4131 = vpop.f32.mrb[0].mxu0
        %v4132 = vadd.f32 0.0, %v4131
        %v4133 = vpop.f32.mrb[0].mxu0
        %4134 = vmatprep.mubr.f32.mxu0 0.0
        %4135 = vmatmul.mubr.f32.gmra.mrb[0].mxu0 %v3902
        %v4136 = vpop.f32.mrb[0].mxu0
        %v4137 = vadd.f32 0.0, %v4136
        %v4138 = vpop.f32.mrb[0].mxu0
        %4139 = vmatprep.mubr.f32.mxu0 0.0
        %4140 = vmatmul.mubr.f32.gmra.mrb[0].mxu0 %v3903
        %v4141 = vpop.f32.mrb[0].mxu0
        %v4142 = vadd.f32 0.0, %v4141
        %v4143 = vpop.f32.mrb[0].mxu0
        %4144 = vdwg.mxu0
        %v4145 = vld [vmem:[%s8] sm:$0x1]
        %v4147 = vlaneseq
        %v4148 = vshrl.u32 %v4147, 7
        %v4149 = vsub.s32 0, %v4148
        %v4150 = vrot.slane %v4145, %v4149
        %v4152 = vmul.f32 %v3987, %v4150
        %v4153 = vmul.f32 %v3992, %v4150
        %v4154 = vmul.f32 %v3997, %v4150
        %v4155 = vmul.f32 %v4002, %v4150
        %v4156 = vmul.f32 %v4007, %v4150
        %v4157 = vmul.f32 %v4012, %v4150
        %v4158 = vmul.f32 %v4017, %v4150
        %v4159 = vmul.f32 %v4022, %v4150
        %v4160 = vmul.f32 %v4027, %v4150
        %v4161 = vmul.f32 %v4032, %v4150
        %v4162 = vmul.f32 %v4037, %v4150
        %v4163 = vmul.f32 %v4042, %v4150
        %v4164 = vmul.f32 %v4047, %v4150
        %v4165 = vmul.f32 %v4052, %v4150
        %v4166 = vmul.f32 %v4057, %v4150
        %v4167 = vmul.f32 %v4062, %v4150
        %v4168 = vmul.f32 %v4067, %v4150
        %v4169 = vmul.f32 %v4072, %v4150
        %v4170 = vmul.f32 %v4077, %v4150
        %v4171 = vmul.f32 %v4082, %v4150
        %v4172 = vmul.f32 %v4087, %v4150
        %v4173 = vmul.f32 %v4092, %v4150
        %v4174 = vmul.f32 %v4097, %v4150
        %v4175 = vmul.f32 %v4102, %v4150
        %v4176 = vmul.f32 %v4107, %v4150
        %v4177 = vmul.f32 %v4112, %v4150
        %v4178 = vmul.f32 %v4117, %v4150
        %v4179 = vmul.f32 %v4122, %v4150
        %v4180 = vmul.f32 %v4127, %v4150
        %v4181 = vmul.f32 %v4132, %v4150
        %v4182 = vmul.f32 %v4137, %v4150
        %v4183 = vmul.f32 %v4142, %v4150
        %v4184 = vld [vmem:[%s9] sm:$0x1]
        %v4186 = vlaneseq
        %v4187 = vshrl.u32 %v4186, 7
        %v4188 = vsub.s32 0, %v4187
        %v4189 = vrot.slane %v4184, %v4188
        %v4191 = vadd.f32 %v4152, %v4189
        %v4192 = vadd.f32 %v4153, %v4189
        %v4193 = vadd.f32 %v4154, %v4189
        %v4194 = vadd.f32 %v4155, %v4189
        %v4195 = vadd.f32 %v4156, %v4189
        %v4196 = vadd.f32 %v4157, %v4189
        %v4197 = vadd.f32 %v4158, %v4189
        %v4198 = vadd.f32 %v4159, %v4189
        %v4199 = vadd.f32 %v4160, %v4189
        %v4200 = vadd.f32 %v4161, %v4189
        %v4201 = vadd.f32 %v4162, %v4189
        %v4202 = vadd.f32 %v4163, %v4189
        %v4203 = vadd.f32 %v4164, %v4189
        %v4204 = vadd.f32 %v4165, %v4189
        %v4205 = vadd.f32 %v4166, %v4189
        %v4206 = vadd.f32 %v4167, %v4189
        %v4207 = vadd.f32 %v4168, %v4189
        %v4208 = vadd.f32 %v4169, %v4189
        %v4209 = vadd.f32 %v4170, %v4189
        %v4210 = vadd.f32 %v4171, %v4189
        %v4211 = vadd.f32 %v4172, %v4189
        %v4212 = vadd.f32 %v4173, %v4189
        %v4213 = vadd.f32 %v4174, %v4189
        %v4214 = vadd.f32 %v4175, %v4189
        %v4215 = vadd.f32 %v4176, %v4189
        %v4216 = vadd.f32 %v4177, %v4189
        %v4217 = vadd.f32 %v4178, %v4189
        %v4218 = vadd.f32 %v4179, %v4189
        %v4219 = vadd.f32 %v4180, %v4189
        %v4220 = vadd.f32 %v4181, %v4189
        %v4221 = vadd.f32 %v4182, %v4189
        %v4222 = vadd.f32 %v4183, %v4189
        %v4223 = vld [vmem:[%s440] sm:$0xff]
        %v4224 = vld [vmem:[%s440 + $0x8] sm:$0xff]
        %v4225 = vld [vmem:[%s440 + $0x10] sm:$0xff]
        %v4226 = vld [vmem:[%s440 + $0x18] sm:$0xff]
        %v4227 = vld [vmem:[%s440 + $0x20] sm:$0xff]
        %v4228 = vld [vmem:[%s440 + $0x28] sm:$0xff]
        %v4229 = vld [vmem:[%s440 + $0x30] sm:$0xff]
        %v4230 = vld [vmem:[%s440 + $0x38] sm:$0xff]
        %v4231 = vld [vmem:[%s440 + $0x40] sm:$0xff]
        %v4232 = vld [vmem:[%s440 + $0x48] sm:$0xff]
        %v4233 = vld [vmem:[%s440 + $0x50] sm:$0xff]
        %v4234 = vld [vmem:[%s440 + $0x58] sm:$0xff]
        %v4235 = vld [vmem:[%s440 + $0x60] sm:$0xff]
        %v4236 = vld [vmem:[%s440 + $0x68] sm:$0xff]
        %v4237 = vld [vmem:[%s440 + $0x70] sm:$0xff]
        %v4238 = vld [vmem:[%s440 + $0x78] sm:$0xff]
        %v4239 = vld [vmem:[%s440 + $0x80] sm:$0xff]
        %v4240 = vld [vmem:[%s440 + $0x88] sm:$0xff]
        %v4241 = vld [vmem:[%s440 + $0x90] sm:$0xff]
        %v4242 = vld [vmem:[%s440 + $0x98] sm:$0xff]
        %v4243 = vld [vmem:[%s440 + $0xa0] sm:$0xff]
        %v4244 = vld [vmem:[%s440 + $0xa8] sm:$0xff]
        %v4245 = vld [vmem:[%s440 + $0xb0] sm:$0xff]
        %v4246 = vld [vmem:[%s440 + $0xb8] sm:$0xff]
        %v4247 = vld [vmem:[%s440 + $0xc0] sm:$0xff]
        %v4248 = vld [vmem:[%s440 + $0xc8] sm:$0xff]
        %v4249 = vld [vmem:[%s440 + $0xd0] sm:$0xff]
        %v4250 = vld [vmem:[%s440 + $0xd8] sm:$0xff]
        %v4251 = vld [vmem:[%s440 + $0xe0] sm:$0xff]
        %v4252 = vld [vmem:[%s440 + $0xe8] sm:$0xff]
        %v4253 = vld [vmem:[%s440 + $0xf0] sm:$0xff]
        %v4254 = vld [vmem:[%s440 + $0xf8] sm:$0xff]
        %v4255 = vadd.f32 %v4191, %v4223
        %v4256 = vadd.f32 %v4192, %v4224
        %v4257 = vadd.f32 %v4193, %v4225
        %v4258 = vadd.f32 %v4194, %v4226
        %v4259 = vadd.f32 %v4195, %v4227
        %v4260 = vadd.f32 %v4196, %v4228
        %v4261 = vadd.f32 %v4197, %v4229
        %v4262 = vadd.f32 %v4198, %v4230
        %v4263 = vadd.f32 %v4199, %v4231
        %v4264 = vadd.f32 %v4200, %v4232
        %v4265 = vadd.f32 %v4201, %v4233
        %v4266 = vadd.f32 %v4202, %v4234
        %v4267 = vadd.f32 %v4203, %v4235
        %v4268 = vadd.f32 %v4204, %v4236
        %v4269 = vadd.f32 %v4205, %v4237
        %v4270 = vadd.f32 %v4206, %v4238
        %v4271 = vadd.f32 %v4207, %v4239
        %v4272 = vadd.f32 %v4208, %v4240
        %v4273 = vadd.f32 %v4209, %v4241
        %v4274 = vadd.f32 %v4210, %v4242
        %v4275 = vadd.f32 %v4211, %v4243
        %v4276 = vadd.f32 %v4212, %v4244
        %v4277 = vadd.f32 %v4213, %v4245
        %v4278 = vadd.f32 %v4214, %v4246
        %v4279 = vadd.f32 %v4215, %v4247
        %v4280 = vadd.f32 %v4216, %v4248
        %v4281 = vadd.f32 %v4217, %v4249
        %v4282 = vadd.f32 %v4218, %v4250
        %v4283 = vadd.f32 %v4219, %v4251
        %v4284 = vadd.f32 %v4220, %v4252
        %v4285 = vadd.f32 %v4221, %v4253
        %v4286 = vadd.f32 %v4222, %v4254
        %v4287 = vmax.f32 %v4255, 0.0
        %v4288 = vmax.f32 %v4256, 0.0
        %v4289 = vmax.f32 %v4257, 0.0
        %v4290 = vmax.f32 %v4258, 0.0
        %v4291 = vmax.f32 %v4259, 0.0
        %v4292 = vmax.f32 %v4260, 0.0
        %v4293 = vmax.f32 %v4261, 0.0
        %v4294 = vmax.f32 %v4262, 0.0
        %v4295 = vmax.f32 %v4263, 0.0
        %v4296 = vmax.f32 %v4264, 0.0
        %v4297 = vmax.f32 %v4265, 0.0
        %v4298 = vmax.f32 %v4266, 0.0
        %v4299 = vmax.f32 %v4267, 0.0
        %v4300 = vmax.f32 %v4268, 0.0
        %v4301 = vmax.f32 %v4269, 0.0
        %v4302 = vmax.f32 %v4270, 0.0
        %v4303 = vmax.f32 %v4271, 0.0
        %v4304 = vmax.f32 %v4272, 0.0
        %v4305 = vmax.f32 %v4273, 0.0
        %v4306 = vmax.f32 %v4274, 0.0
        %v4307 = vmax.f32 %v4275, 0.0
        %v4308 = vmax.f32 %v4276, 0.0
        %v4309 = vmax.f32 %v4277, 0.0
        %v4310 = vmax.f32 %v4278, 0.0
        %v4311 = vmax.f32 %v4279, 0.0
        %v4312 = vmax.f32 %v4280, 0.0
        %v4313 = vmax.f32 %v4281, 0.0
        %v4314 = vmax.f32 %v4282, 0.0
        %v4315 = vmax.f32 %v4283, 0.0
        %v4316 = vmax.f32 %v4284, 0.0
        %v4317 = vmax.f32 %v4285, 0.0
        %v4318 = vmax.f32 %v4286, 0.0
        %4319 = vst [vmem:[%s435] sm:$0xff] %v4287
        %4320 = vst [vmem:[%s435 + $0x8] sm:$0xff] %v4288
        %4321 = vst [vmem:[%s435 + $0x10] sm:$0xff] %v4289
        %4322 = vst [vmem:[%s435 + $0x18] sm:$0xff] %v4290
        %4323 = vst [vmem:[%s435 + $0x20] sm:$0xff] %v4291
        %4324 = vst [vmem:[%s435 + $0x28] sm:$0xff] %v4292
        %4325 = vst [vmem:[%s435 + $0x30] sm:$0xff] %v4293
        %4326 = vst [vmem:[%s435 + $0x38] sm:$0xff] %v4294
        %4327 = vst [vmem:[%s435 + $0x40] sm:$0xff] %v4295
        %4328 = vst [vmem:[%s435 + $0x48] sm:$0xff] %v4296
        %4329 = vst [vmem:[%s435 + $0x50] sm:$0xff] %v4297
        %4330 = vst [vmem:[%s435 + $0x58] sm:$0xff] %v4298
        %4331 = vst [vmem:[%s435 + $0x60] sm:$0xff] %v4299
        %4332 = vst [vmem:[%s435 + $0x68] sm:$0xff] %v4300
        %4333 = vst [vmem:[%s435 + $0x70] sm:$0xff] %v4301
        %4334 = vst [vmem:[%s435 + $0x78] sm:$0xff] %v4302
        %4335 = vst [vmem:[%s435 + $0x80] sm:$0xff] %v4303
        %4336 = vst [vmem:[%s435 + $0x88] sm:$0xff] %v4304
        %4337 = vst [vmem:[%s435 + $0x90] sm:$0xff] %v4305
        %4338 = vst [vmem:[%s435 + $0x98] sm:$0xff] %v4306
        %4339 = vst [vmem:[%s435 + $0xa0] sm:$0xff] %v4307
        %4340 = vst [vmem:[%s435 + $0xa8] sm:$0xff] %v4308
        %4341 = vst [vmem:[%s435 + $0xb0] sm:$0xff] %v4309
        %4342 = vst [vmem:[%s435 + $0xb8] sm:$0xff] %v4310
        %4343 = vst [vmem:[%s435 + $0xc0] sm:$0xff] %v4311
        %4344 = vst [vmem:[%s435 + $0xc8] sm:$0xff] %v4312
        %4345 = vst [vmem:[%s435 + $0xd0] sm:$0xff] %v4313
        %4346 = vst [vmem:[%s435 + $0xd8] sm:$0xff] %v4314
        %4347 = vst [vmem:[%s435 + $0xe0] sm:$0xff] %v4315
        %4348 = vst [vmem:[%s435 + $0xe8] sm:$0xff] %v4316
        %4349 = vst [vmem:[%s435 + $0xf0] sm:$0xff] %v4317
        %4350 = vst [vmem:[%s435 + $0xf8] sm:$0xff] %v4318
        %s4351 = sand.u32 %s266, 1
        %s4352 = scalar_lea.sflag [#allocation6], %s4351
        %s4353 = sand.u32 %s266, 1
        %s4354 = smul.addr %s4353, 256
        %s4355 = scalar_lea.vmem [#allocation12], %s4354
        // Predicated region
        $region77: #{tpu_custom_call.1} parent=59 // pred_check
          %p4356 = pneg %p276
        $region78: #{tpu_custom_call.1} parent=59 // pred_check_branch
          %4358 = sbr.rel (%p4356) target = $region80
        $region79: #{tpu_custom_call.1} parent=59 // pred_region
          %s4359 = smul.u32 32, %s34
          %s4361 = ssub.s32 4096, 4096
          %4362 = vsyncadd %s4352, %s4361
          %s4363 = smul.addr %s33, 32
          %s4364 = sadd.s32 %s4359, %s4363
          %s4365 = smul.addr %s4364, 128
          %s4366 = scalar_lea.hbm %s10, %s4365
          %s4367 = sshll.u32 %s4355, 4
          %s4368 = int_to_ptr.vmem [resolvable:$true] %s4367
          %4373 = dma.vmem_to_hbm [thread:$0]  %s4368, 4096, %s4366, %s4352, 128, 128, 8
        $region80: #{tpu_custom_call.1} parent=59 // pred_fallthru
          _
      $region60: #{tpu_custom_call.1} parent=5 // pred_fallthru
        _
      %p4374 = scmp.le.s32.totalorder 2, %s24
      // Predicated region
      $region81: #{tpu_custom_call.1} parent=5 // pred_check
        %p4375 = pneg %p4374
      $region82: #{tpu_custom_call.1} parent=5 // pred_check_branch
        %4377 = sbr.rel (%p4375) target = $region84
      $region83: #{tpu_custom_call.1} parent=5 // pred_region
        %s4378 = ssub.s32 %s24, 2
        // Predicated region
        $region85: #{tpu_custom_call.1} parent=83 // pred_check
          %p4379 = pneg %p282
        $region86: #{tpu_custom_call.1} parent=83 // pred_check_branch
          %4381 = sbr.rel (%p4379) target = $region88
        $region87: #{tpu_custom_call.1} parent=83 // pred_region
          %s4382 = sand.u32 %s267, 1
          %s4383 = scalar_lea.sflag [#allocation6], %s4382
          %s4384 = sand.u32 %s267, 1
          %s4385 = smul.addr %s4384, 256
          %s4386 = scalar_lea.vmem [#allocation12], %s4385
          %4387 = dma.done %s4383, 4096
        $region88: #{tpu_custom_call.1} parent=83 // pred_fallthru
          _
      $region84: #{tpu_custom_call.1} parent=5 // pred_fallthru
        _
    $region6: #{tpu_custom_call.1} parent=1 // loop_footer
      %s28 = sadd.s32 1, %s24
    $region7: #{tpu_custom_call.1} parent=1 // loop_footer_branch
      %23 = sbr.rel target = $region3
    $region8: #{tpu_custom_call.1} parent=1 // loop_exit
      _
    %4388 = vsyncpa [#allocation5], 1
    %s4389 = scalar_lea.sflag [#allocation5], 1
    %4390 = vsyncpa %s4389, 1
    %4391 = vsyncpa [#allocation8], 1
    %4392 = vsyncpa [#allocation11], 1
    %4393 = vsyncpa [#allocation6], 1
    %s4394 = scalar_lea.sflag [#allocation6], 1
    %4395 = vsyncpa %s4394, 1

</llo_original>
